<compile_context>
chip_gen: v5e
topology: v5e:2x2
jax: 0.10.0
libtpu: 0.0.40
codegen_flags: <defaults>
</compile_context>

<pallas_src>
import functools
import math

import jax
import jax.numpy as jnp
from jax.experimental import pallas as pl
from jax.experimental.pallas import tpu as pltpu

LANE = 128
_VMEM = pl.BlockSpec(memory_space=pltpu.MemorySpace.VMEM)


def _round_up(n, m):
    return ((n + m - 1) // m) * m


# ----------------------------------------------------------------------------
# Pallas kernels
# ----------------------------------------------------------------------------
def _sigmoid_pool(h, w2r, pool, b2):
    """Conv2d(C1 -> 1, k=4, s=4) + bias + sigmoid, fully in VMEM.

    h    : (M, C1) activation rows, row order (b, y, x)
    w2r  : (M, C1) per-pixel 4x4-conv tap weights (= w2[y%4, x%4, :])
    pool : (P, M)  0/1 patch-membership matrix (stride-4 4x4 patches)
    b2   : (1, 1)  bias
    returns (P, 1) sigmoid logits, row order (b, ho, wo)
    """
    # Channel-reduce first (lane reduce) so the pooling matmul is a
    # (P,M)@(M,1) matvec instead of (P,M)@(M,C1).
    s = jnp.sum(h * w2r, axis=-1, keepdims=True)                      # (M, 1)
    logit = jnp.dot(pool, s, preferred_element_type=jnp.float32) + b2
    return 1.0 / (1.0 + jnp.exp(-logit))                              # sigmoid


def _joint_outlogits_kernel(xp_ref, w1_ref, b1_ref, w2r_ref, b2_ref, pool_ref,
                            out_ref, *, B, H, W):
    """Fused conditional path.

    xp_ref   : (B, H+2, W+2, Cp)  zero-padded NHWC concat(h, c), channels padded to Cp
    w1_ref   : (9, Cp, C1)        3x3 conv weight, tap-major ((ky*3+kx), cin, cout)
    b1_ref   : (1, C1)            3x3 conv bias
    w2r_ref  : (B*H*W, C1)        per-pixel 4x4 conv weight row (= w2[y%4, x%4, :])
    b2_ref   : (1, 1)             4x4 conv bias
    pool_ref : (B*Ho*Wo, B*H*W)   0/1 patch pooling matrix (stride-4 4x4 patches)
    out_ref  : (B*Ho*Wo, 1)       sigmoid logits in (b, ho, wo) row order
    """
    Cp = xp_ref.shape[-1]
    C1 = w1_ref.shape[-1]
    M = B * H * W

    xp = xp_ref[...]                                            # whole padded image in VMEM
    acc = jnp.zeros((M, C1), jnp.float32)
    for t in range(9):                                          # fused im2col: 9 shifted taps
        ky, kx = divmod(t, 3)
        tap = xp[:, ky:ky + H, kx:kx + W, :].reshape(M, Cp)
        acc = acc + jnp.dot(tap, w1_ref[t], preferred_element_type=jnp.float32)

    h = acc + b1_ref[...]
    h = jnp.where(h >= 0.0, h, 0.2 * h)                         # LeakyReLU(0.2)

    out_ref[...] = _sigmoid_pool(h, w2r_ref[...], pool_ref[...], b2_ref[...])


def _outlogits_kernel(h_ref, w2r_ref, b2_ref, pool_ref, out_ref):
    """Unconditional path: Conv2d(ndf, 1, k=4, s=4) + sigmoid on h_code rows."""
    out_ref[...] = _sigmoid_pool(h_ref[...], w2r_ref[...], pool_ref[...],
                                 b2_ref[...])


# ----------------------------------------------------------------------------
# Wrapper
# ----------------------------------------------------------------------------
def _pool_and_rowweights(B, H, W, w2_mat):
    """Build the stride-4 patch pooling matrix and per-pixel tap weights."""
    Ho, Wo = H // 4, W // 4
    M = B * H * W
    P = B * Ho * Wo
    r = jnp.arange(M)
    b = r // (H * W)
    y = (r % (H * W)) // W
    x = r % W
    p_of_r = (b * Ho + y // 4) * Wo + (x // 4)                   # patch owning each pixel
    pool = (jnp.arange(P)[:, None] == p_of_r[None, :]).astype(jnp.float32)
    tap = (y % 4) * 4 + (x % 4)
    w2_rows = w2_mat[tap]                                        # (M, C1)
    return pool, w2_rows


def d_get_logits_mask_cond(params, h_code, c_code=None, *, bcondition=True):
    """Forward of D_GET_LOGITS_MASK_COND. h_code: (B, ndf, H, W), c_code: (B, nef, H, W)."""
    B, ndf, H, W = h_code.shape
    assert H % 4 == 0 and W % 4 == 0
    Ho, Wo = H // 4, W // 4
    M = B * H * W
    P = B * Ho * Wo

    # outlogits weight (1, ndf, 4, 4) -> (16, ndf), tap-major; bias scalar.
    w2_mat = jnp.transpose(params["out_w"][0], (1, 2, 0)).reshape(16, ndf)
    b2 = params["out_b"].reshape(1, 1).astype(jnp.float32)
    pool, w2_rows = _pool_and_rowweights(B, H, W, w2_mat)

    if bcondition and c_code is not None:
        nef = c_code.shape[1]
        Cin = ndf + nef
        Cp = _round_up(Cin, LANE)                                # pad K to 128 lanes
        # NCHW -> NHWC, channel concat, channel pad, spatial zero-pad for k=3/p=1.
        x = jnp.concatenate(
            [jnp.transpose(h_code, (0, 2, 3, 1)),
             jnp.transpose(c_code, (0, 2, 3, 1))], axis=-1).astype(jnp.float32)
        x = jnp.pad(x, ((0, 0), (1, 1), (1, 1), (0, Cp - Cin)))
        # jointConv weight (ndf, Cin, 3, 3) -> (9, Cp, ndf) tap-major, K-padded.
        w1_mat = jnp.transpose(params["joint_w"], (2, 3, 1, 0)).reshape(9, Cin, ndf)
        w1_mat = jnp.pad(w1_mat, ((0, 0), (0, Cp - Cin), (0, 0))).astype(jnp.float32)
        b1 = params["joint_b"].reshape(1, ndf).astype(jnp.float32)

        kern = functools.partial(_joint_outlogits_kernel, B=B, H=H, W=W)
        out = pl.pallas_call(
            kern,
            out_shape=jax.ShapeDtypeStruct((P, 1), jnp.float32),
            in_specs=[_VMEM] * 6,
            out_specs=_VMEM,
        )(x, w1_mat, b1, w2_rows, b2, pool)
    else:
        h_rows = jnp.transpose(h_code, (0, 2, 3, 1)).reshape(M, ndf).astype(jnp.float32)
        out = pl.pallas_call(
            _outlogits_kernel,
            out_shape=jax.ShapeDtypeStruct((P, 1), jnp.float32),
            in_specs=[_VMEM] * 4,
            out_specs=_VMEM,
        )(h_rows, w2_rows, b2, pool)

    return out.reshape(-1)                                       # output.view(-1)


# ----------------------------------------------------------------------------
# Plain-JAX reference (for in-script correctness check)
# ----------------------------------------------------------------------------
def _reference(params, h_code, c_code=None, bcondition=True):
    x = h_code
    if bcondition and c_code is not None:
        x = jnp.concatenate([h_code, c_code], axis=1)
        y = jax.lax.conv_general_dilated(
            x, params["joint_w"], window_strides=(1, 1), padding=((1, 1), (1, 1)),
            dimension_numbers=("NCHW", "OIHW", "NCHW"),
            precision=jax.lax.Precision.HIGHEST)
        y = y + params["joint_b"].reshape(1, -1, 1, 1)
        x = jnp.where(y >= 0, y, 0.2 * y)
    z = jax.lax.conv_general_dilated(
        x, params["out_w"], window_strides=(4, 4), padding="VALID",
        dimension_numbers=("NCHW", "OIHW", "NCHW"),
        precision=jax.lax.Precision.HIGHEST)
    z = z + params["out_b"].reshape(1, 1, 1, 1)
    return jax.nn.sigmoid(z).reshape(-1)


def init_params(key, ndf, nef):
    k = jax.random.split(key, 4)
    cin = ndf + nef
    return {
        "joint_w": jax.random.normal(k[0], (ndf, cin, 3, 3), jnp.float32) / math.sqrt(9 * cin),
        "joint_b": jax.random.normal(k[1], (ndf,), jnp.float32) * 0.1,
        "out_w": jax.random.normal(k[2], (1, ndf, 4, 4), jnp.float32) / math.sqrt(16 * ndf),
        "out_b": jax.random.normal(k[3], (1,), jnp.float32) * 0.1,
    }


# ----------------------------------------------------------------------------
if __name__ == "__main__":
    key = jax.random.PRNGKey(0)
    kp, kh, kc = jax.random.split(key, 3)

    B, ndf, nef, H, W = 2, 64, 32, 16, 16
    params = init_params(kp, ndf, nef)
    h_code = jax.random.normal(kh, (B, ndf, H, W), jnp.float32)
    c_code = jax.random.normal(kc, (B, nef, H, W), jnp.float32)

    out_cond = d_get_logits_mask_cond(params, h_code, c_code, bcondition=True)
    out_uncond = d_get_logits_mask_cond(params, h_code, None, bcondition=False)
    jax.block_until_ready((out_cond, out_uncond))

    n_out = B * (H // 4) * (W // 4)
    assert out_cond.shape == (n_out,)
    assert out_uncond.shape == (n_out,)

    ref_cond = _reference(params, h_code, c_code, True)
    ref_uncond = _reference(params, h_code, None, False)
    assert jnp.allclose(out_cond, ref_cond, atol=5e-3, rtol=5e-3), \
        float(jnp.max(jnp.abs(out_cond - ref_cond)))
    assert jnp.allclose(out_uncond, ref_uncond, atol=5e-3, rtol=5e-3), \
        float(jnp.max(jnp.abs(out_uncond - ref_uncond)))

    print("KERNEL_OK")
</pallas_src>

<mosaic_0001>
module attributes {stable_mosaic.version = 11 : i64} {
  func.func @_joint_outlogits_kernel(%arg0: memref<2x18x18x128xf32, #tpu.memory_space<vmem>>, %arg1: memref<9x128x64xf32, #tpu.memory_space<vmem>>, %arg2: memref<1x64xf32, #tpu.memory_space<vmem>>, %arg3: memref<512x64xf32, #tpu.memory_space<vmem>>, %arg4: memref<1x1xf32, #tpu.memory_space<vmem>>, %arg5: memref<32x512xf32, #tpu.memory_space<vmem>>, %arg6: memref<32x1xf32, #tpu.memory_space<vmem>>) attributes {dimension_semantics = [], scalar_prefetch = 0 : i64, scratch_operands = 0 : i64, tpu.core_type = #tpu.core_type<tc>} {
    %c0 = arith.constant 0 : index
    %c0_0 = arith.constant 0 : index
    %c0_1 = arith.constant 0 : index
    %c0_2 = arith.constant 0 : index
    %0 = vector.load %arg0[%c0, %c0_0, %c0_1, %c0_2] : memref<2x18x18x128xf32, #tpu.memory_space<vmem>>, vector<2x18x18x128xf32>
    %cst = arith.constant 0.000000e+00 : f32
    %1 = vector.broadcast %cst : f32 to vector<512x64xf32>
    %2 = vector.extract_strided_slice %0 {offsets = [0, 0, 0, 0], sizes = [2, 16, 16, 128], strides = [1, 1, 1, 1]} : vector<2x18x18x128xf32> to vector<2x16x16x128xf32>
    %3 = vector.shape_cast %2 : vector<2x16x16x128xf32> to vector<512x128xf32>
    %c0_3 = arith.constant 0 : index
    %c0_4 = arith.constant 0 : index
    %c0_5 = arith.constant 0 : index
    %4 = vector.load %arg1[%c0_3, %c0_4, %c0_5] : memref<9x128x64xf32, #tpu.memory_space<vmem>>, vector<1x128x64xf32>
    %5 = vector.shape_cast %4 : vector<1x128x64xf32> to vector<128x64xf32>
    %cst_6 = arith.constant dense<0.000000e+00> : vector<512x64xf32>
    %6 = tpu.matmul %3, %5, %cst_6 {dimension_numbers = #tpu.dot_dimension_numbers<[1], [0], [0], [1], [0, 0, 1, 1], [], []>} : vector<512x128xf32>, vector<128x64xf32>, vector<512x64xf32> -> vector<512x64xf32>
    %7 = arith.addf %1, %6 : vector<512x64xf32>
    %8 = vector.extract_strided_slice %0 {offsets = [0, 0, 1, 0], sizes = [2, 16, 16, 128], strides = [1, 1, 1, 1]} : vector<2x18x18x128xf32> to vector<2x16x16x128xf32>
    %9 = vector.shape_cast %8 : vector<2x16x16x128xf32> to vector<512x128xf32>
    %c1 = arith.constant 1 : index
    %c0_7 = arith.constant 0 : index
    %c0_8 = arith.constant 0 : index
    %10 = vector.load %arg1[%c1, %c0_7, %c0_8] : memref<9x128x64xf32, #tpu.memory_space<vmem>>, vector<1x128x64xf32>
    %11 = vector.shape_cast %10 : vector<1x128x64xf32> to vector<128x64xf32>
    %cst_9 = arith.constant dense<0.000000e+00> : vector<512x64xf32>
    %12 = tpu.matmul %9, %11, %cst_9 {dimension_numbers = #tpu.dot_dimension_numbers<[1], [0], [0], [1], [0, 0, 1, 1], [], []>} : vector<512x128xf32>, vector<128x64xf32>, vector<512x64xf32> -> vector<512x64xf32>
    %13 = arith.addf %7, %12 : vector<512x64xf32>
    %14 = vector.extract_strided_slice %0 {offsets = [0, 0, 2, 0], sizes = [2, 16, 16, 128], strides = [1, 1, 1, 1]} : vector<2x18x18x128xf32> to vector<2x16x16x128xf32>
    %15 = vector.shape_cast %14 : vector<2x16x16x128xf32> to vector<512x128xf32>
    %c2 = arith.constant 2 : index
    %c0_10 = arith.constant 0 : index
    %c0_11 = arith.constant 0 : index
    %16 = vector.load %arg1[%c2, %c0_10, %c0_11] : memref<9x128x64xf32, #tpu.memory_space<vmem>>, vector<1x128x64xf32>
    %17 = vector.shape_cast %16 : vector<1x128x64xf32> to vector<128x64xf32>
    %cst_12 = arith.constant dense<0.000000e+00> : vector<512x64xf32>
    %18 = tpu.matmul %15, %17, %cst_12 {dimension_numbers = #tpu.dot_dimension_numbers<[1], [0], [0], [1], [0, 0, 1, 1], [], []>} : vector<512x128xf32>, vector<128x64xf32>, vector<512x64xf32> -> vector<512x64xf32>
    %19 = arith.addf %13, %18 : vector<512x64xf32>
    %20 = vector.extract_strided_slice %0 {offsets = [0, 1, 0, 0], sizes = [2, 16, 16, 128], strides = [1, 1, 1, 1]} : vector<2x18x18x128xf32> to vector<2x16x16x128xf32>
    %21 = vector.shape_cast %20 : vector<2x16x16x128xf32> to vector<512x128xf32>
    %c3 = arith.constant 3 : index
    %c0_13 = arith.constant 0 : index
    %c0_14 = arith.constant 0 : index
    %22 = vector.load %arg1[%c3, %c0_13, %c0_14] : memref<9x128x64xf32, #tpu.memory_space<vmem>>, vector<1x128x64xf32>
    %23 = vector.shape_cast %22 : vector<1x128x64xf32> to vector<128x64xf32>
    %cst_15 = arith.constant dense<0.000000e+00> : vector<512x64xf32>
    %24 = tpu.matmul %21, %23, %cst_15 {dimension_numbers = #tpu.dot_dimension_numbers<[1], [0], [0], [1], [0, 0, 1, 1], [], []>} : vector<512x128xf32>, vector<128x64xf32>, vector<512x64xf32> -> vector<512x64xf32>
    %25 = arith.addf %19, %24 : vector<512x64xf32>
    %26 = vector.extract_strided_slice %0 {offsets = [0, 1, 1, 0], sizes = [2, 16, 16, 128], strides = [1, 1, 1, 1]} : vector<2x18x18x128xf32> to vector<2x16x16x128xf32>
    %27 = vector.shape_cast %26 : vector<2x16x16x128xf32> to vector<512x128xf32>
    %c4 = arith.constant 4 : index
    %c0_16 = arith.constant 0 : index
    %c0_17 = arith.constant 0 : index
    %28 = vector.load %arg1[%c4, %c0_16, %c0_17] : memref<9x128x64xf32, #tpu.memory_space<vmem>>, vector<1x128x64xf32>
    %29 = vector.shape_cast %28 : vector<1x128x64xf32> to vector<128x64xf32>
    %cst_18 = arith.constant dense<0.000000e+00> : vector<512x64xf32>
    %30 = tpu.matmul %27, %29, %cst_18 {dimension_numbers = #tpu.dot_dimension_numbers<[1], [0], [0], [1], [0, 0, 1, 1], [], []>} : vector<512x128xf32>, vector<128x64xf32>, vector<512x64xf32> -> vector<512x64xf32>
    %31 = arith.addf %25, %30 : vector<512x64xf32>
    %32 = vector.extract_strided_slice %0 {offsets = [0, 1, 2, 0], sizes = [2, 16, 16, 128], strides = [1, 1, 1, 1]} : vector<2x18x18x128xf32> to vector<2x16x16x128xf32>
    %33 = vector.shape_cast %32 : vector<2x16x16x128xf32> to vector<512x128xf32>
    %c5 = arith.constant 5 : index
    %c0_19 = arith.constant 0 : index
    %c0_20 = arith.constant 0 : index
    %34 = vector.load %arg1[%c5, %c0_19, %c0_20] : memref<9x128x64xf32, #tpu.memory_space<vmem>>, vector<1x128x64xf32>
    %35 = vector.shape_cast %34 : vector<1x128x64xf32> to vector<128x64xf32>
    %cst_21 = arith.constant dense<0.000000e+00> : vector<512x64xf32>
    %36 = tpu.matmul %33, %35, %cst_21 {dimension_numbers = #tpu.dot_dimension_numbers<[1], [0], [0], [1], [0, 0, 1, 1], [], []>} : vector<512x128xf32>, vector<128x64xf32>, vector<512x64xf32> -> vector<512x64xf32>
    %37 = arith.addf %31, %36 : vector<512x64xf32>
    %38 = vector.extract_strided_slice %0 {offsets = [0, 2, 0, 0], sizes = [2, 16, 16, 128], strides = [1, 1, 1, 1]} : vector<2x18x18x128xf32> to vector<2x16x16x128xf32>
    %39 = vector.shape_cast %38 : vector<2x16x16x128xf32> to vector<512x128xf32>
    %c6 = arith.constant 6 : index
    %c0_22 = arith.constant 0 : index
    %c0_23 = arith.constant 0 : index
    %40 = vector.load %arg1[%c6, %c0_22, %c0_23] : memref<9x128x64xf32, #tpu.memory_space<vmem>>, vector<1x128x64xf32>
    %41 = vector.shape_cast %40 : vector<1x128x64xf32> to vector<128x64xf32>
    %cst_24 = arith.constant dense<0.000000e+00> : vector<512x64xf32>
    %42 = tpu.matmul %39, %41, %cst_24 {dimension_numbers = #tpu.dot_dimension_numbers<[1], [0], [0], [1], [0, 0, 1, 1], [], []>} : vector<512x128xf32>, vector<128x64xf32>, vector<512x64xf32> -> vector<512x64xf32>
    %43 = arith.addf %37, %42 : vector<512x64xf32>
    %44 = vector.extract_strided_slice %0 {offsets = [0, 2, 1, 0], sizes = [2, 16, 16, 128], strides = [1, 1, 1, 1]} : vector<2x18x18x128xf32> to vector<2x16x16x128xf32>
    %45 = vector.shape_cast %44 : vector<2x16x16x128xf32> to vector<512x128xf32>
    %c7 = arith.constant 7 : index
    %c0_25 = arith.constant 0 : index
    %c0_26 = arith.constant 0 : index
    %46 = vector.load %arg1[%c7, %c0_25, %c0_26] : memref<9x128x64xf32, #tpu.memory_space<vmem>>, vector<1x128x64xf32>
    %47 = vector.shape_cast %46 : vector<1x128x64xf32> to vector<128x64xf32>
    %cst_27 = arith.constant dense<0.000000e+00> : vector<512x64xf32>
    %48 = tpu.matmul %45, %47, %cst_27 {dimension_numbers = #tpu.dot_dimension_numbers<[1], [0], [0], [1], [0, 0, 1, 1], [], []>} : vector<512x128xf32>, vector<128x64xf32>, vector<512x64xf32> -> vector<512x64xf32>
    %49 = arith.addf %43, %48 : vector<512x64xf32>
    %50 = vector.extract_strided_slice %0 {offsets = [0, 2, 2, 0], sizes = [2, 16, 16, 128], strides = [1, 1, 1, 1]} : vector<2x18x18x128xf32> to vector<2x16x16x128xf32>
    %51 = vector.shape_cast %50 : vector<2x16x16x128xf32> to vector<512x128xf32>
    %c8 = arith.constant 8 : index
    %c0_28 = arith.constant 0 : index
    %c0_29 = arith.constant 0 : index
    %52 = vector.load %arg1[%c8, %c0_28, %c0_29] : memref<9x128x64xf32, #tpu.memory_space<vmem>>, vector<1x128x64xf32>
    %53 = vector.shape_cast %52 : vector<1x128x64xf32> to vector<128x64xf32>
    %cst_30 = arith.constant dense<0.000000e+00> : vector<512x64xf32>
    %54 = tpu.matmul %51, %53, %cst_30 {dimension_numbers = #tpu.dot_dimension_numbers<[1], [0], [0], [1], [0, 0, 1, 1], [], []>} : vector<512x128xf32>, vector<128x64xf32>, vector<512x64xf32> -> vector<512x64xf32>
    %55 = arith.addf %49, %54 : vector<512x64xf32>
    %c0_31 = arith.constant 0 : index
    %c0_32 = arith.constant 0 : index
    %56 = vector.load %arg2[%c0_31, %c0_32] : memref<1x64xf32, #tpu.memory_space<vmem>>, vector<1x64xf32>
    %57 = vector.broadcast %56 : vector<1x64xf32> to vector<512x64xf32>
    %58 = arith.addf %55, %57 : vector<512x64xf32>
    %cst_33 = arith.constant 0.000000e+00 : f32
    %59 = vector.broadcast %cst_33 : f32 to vector<512x64xf32>
    %60 = arith.cmpf oge, %58, %59 : vector<512x64xf32>
    %cst_34 = arith.constant 2.000000e-01 : f32
    %61 = vector.broadcast %cst_34 : f32 to vector<512x64xf32>
    %62 = arith.mulf %61, %58 : vector<512x64xf32>
    %63 = arith.select %60, %58, %62 : vector<512x64xi1>, vector<512x64xf32>
    %c0_35 = arith.constant 0 : index
    %c0_36 = arith.constant 0 : index
    %64 = vector.load %arg3[%c0_35, %c0_36] : memref<512x64xf32, #tpu.memory_space<vmem>>, vector<512x64xf32>
    %c0_37 = arith.constant 0 : index
    %c0_38 = arith.constant 0 : index
    %65 = vector.load %arg5[%c0_37, %c0_38] : memref<32x512xf32, #tpu.memory_space<vmem>>, vector<32x512xf32>
    %c0_39 = arith.constant 0 : index
    %c0_40 = arith.constant 0 : index
    %66 = vector.load %arg4[%c0_39, %c0_40] : memref<1x1xf32, #tpu.memory_space<vmem>>, vector<1x1xf32>
    %67 = arith.mulf %63, %64 : vector<512x64xf32>
    %cst_41 = arith.constant dense<0.000000e+00> : vector<512xf32>
    %68 = vector.multi_reduction <add>, %67, %cst_41 [1] : vector<512x64xf32> to vector<512xf32>
    %69 = vector.shape_cast %68 : vector<512xf32> to vector<512x1xf32>
    %cst_42 = arith.constant dense<0.000000e+00> : vector<32x1xf32>
    %70 = tpu.matmul %65, %69, %cst_42 {dimension_numbers = #tpu.dot_dimension_numbers<[1], [0], [0], [1], [0, 0, 1, 1], [], []>} : vector<32x512xf32>, vector<512x1xf32>, vector<32x1xf32> -> vector<32x1xf32>
    %71 = vector.broadcast %66 : vector<1x1xf32> to vector<32x1xf32>
    %72 = arith.addf %70, %71 : vector<32x1xf32>
    %cst_43 = arith.constant 0.000000e+00 : f32
    %73 = vector.broadcast %cst_43 : f32 to vector<32x1xf32>
    %74 = arith.subf %73, %72 : vector<32x1xf32>
    %75 = math.exp %74 : vector<32x1xf32>
    %cst_44 = arith.constant 1.000000e+00 : f32
    %76 = vector.broadcast %cst_44 : f32 to vector<32x1xf32>
    %77 = arith.addf %76, %75 : vector<32x1xf32>
    %cst_45 = arith.constant 1.000000e+00 : f32
    %78 = vector.broadcast %cst_45 : f32 to vector<32x1xf32>
    %79 = arith.divf %78, %77 : vector<32x1xf32>
    %c0_46 = arith.constant 0 : index
    %c0_47 = arith.constant 0 : index
    %80 = vector.load %arg6[%c0_46, %c0_47] : memref<32x1xf32, #tpu.memory_space<vmem>>, vector<32x1xf32>
    tpu.vector_store %arg6[%c0_46, %c0_47], %79 {strides = array<i32>} : memref<32x1xf32, #tpu.memory_space<vmem>>, vector<32x1xf32>,
    return
  }
}

</mosaic_0001>

<llo_original>
// kernel: tpu_custom_call.1
$region0: #{tpu_custom_call.1}
  #allocation0 [shape = 'u32[]', space=smem, size = 0x4, offset = 0x4, fixed_abs, tag = 'smem constant byte address 0x4 - core index']
  #allocation1 [shape = 'u32[72,128]{1,0:T(1,128)}', space=vmem, size = 0x9000, scoped, tag = 'internal scratch']
  #allocation2 [shape = 'f32[1,1]{1,0:T(1,128)S(1)}', space=vmem, size = 0x200, scoped, tag = 'scoped memory for tpu_custom_call.1']
  %s0 = inlined_call_operand.vmem [shape: f32[2,18,18,128], index: 0, kind: input, shape index: {}]
  %s1 = inlined_call_operand.vmem [shape: f32[9,128,64], index: 1, kind: input, shape index: {}]
  %s2 = inlined_call_operand.vmem [shape: f32[1,64], index: 2, kind: input, shape index: {}]
  %s3 = inlined_call_operand.vmem [shape: f32[512,64], index: 3, kind: input, shape index: {}]
  %s4 = inlined_call_operand.<no memory space> [shape: f32[1,1], index: 4, kind: input, shape index: {}]
  %s5 = inlined_call_operand.vmem [shape: f32[32,512], index: 5, kind: input, shape index: {}]
  %s6 = inlined_call_operand.vmem [shape: f32[32,1], index: 6, kind: output, shape index: {}]
  %s7 = sld [smem:[#allocation0]]
  $region34: #{tpu_custom_call.1} parent=0
    _
  %s9 = ssub.s32 1, %s7
  %s10 = scalar_select 0, %s9, %s7
  %v11 = vstv %s4
  %12 = vst [vmem:[#allocation2] sm:$0x1] %v11
  // Predicated region
  $region2: #{tpu_custom_call.1} parent=0 // pred_check
    _
  $region3: #{tpu_custom_call.1} parent=0 // pred_check_branch
    %14 = sbr.rel (0) target = $region5
  $region4: #{tpu_custom_call.1} parent=0 // pred_region
    _
  $region5: #{tpu_custom_call.1} parent=0 // pred_fallthru
    _
  // Predicated region
  $region6: #{tpu_custom_call.1} parent=0 // pred_check
    _
  $region7: #{tpu_custom_call.1} parent=0 // pred_check_branch
    %16 = sbr.rel (0) target = $region9
  $region8: #{tpu_custom_call.1} parent=0 // pred_region
    _
  $region9: #{tpu_custom_call.1} parent=0 // pred_fallthru
    _
  // Predicated region
  $region10: #{tpu_custom_call.1} parent=0 // pred_check
    _
  $region11: #{tpu_custom_call.1} parent=0 // pred_check_branch
    %18 = sbr.rel (0) target = $region13
  $region12: #{tpu_custom_call.1} parent=0 // pred_region
    _
  $region13: #{tpu_custom_call.1} parent=0 // pred_fallthru
    _
  // Predicated region
  $region14: #{tpu_custom_call.1} parent=0 // pred_check
    _
  $region15: #{tpu_custom_call.1} parent=0 // pred_check_branch
    %20 = sbr.rel (0) target = $region17
  $region16: #{tpu_custom_call.1} parent=0 // pred_region
    _
  $region17: #{tpu_custom_call.1} parent=0 // pred_fallthru
    _
  // Predicated region
  $region18: #{tpu_custom_call.1} parent=0 // pred_check
    _
  $region19: #{tpu_custom_call.1} parent=0 // pred_check_branch
    %22 = sbr.rel (0) target = $region21
  $region20: #{tpu_custom_call.1} parent=0 // pred_region
    _
  $region21: #{tpu_custom_call.1} parent=0 // pred_fallthru
    _
  // Predicated region
  $region22: #{tpu_custom_call.1} parent=0 // pred_check
    _
  $region23: #{tpu_custom_call.1} parent=0 // pred_check_branch
    %24 = sbr.rel (0) target = $region25
  $region24: #{tpu_custom_call.1} parent=0 // pred_region
    _
  $region25: #{tpu_custom_call.1} parent=0 // pred_fallthru
    _
  %v25 = vld [vmem:[%s0] sm:$0xff]
  %v26 = vld [vmem:[%s0 + $0x8] sm:$0xff]
  %v27 = vld [vmem:[%s0 + $0x10] sm:$0x3]
  %v28 = vld [vmem:[%s0 + $0x18] sm:$0xff]
  %v29 = vld [vmem:[%s0 + $0x20] sm:$0xff]
  %v30 = vld [vmem:[%s0 + $0x28] sm:$0x3]
  %v31 = vld [vmem:[%s0 + $0x30] sm:$0xff]
  %v32 = vld [vmem:[%s0 + $0x38] sm:$0xff]
  %v33 = vld [vmem:[%s0 + $0x40] sm:$0x3]
  %v34 = vld [vmem:[%s0 + $0x48] sm:$0xff]
  %v35 = vld [vmem:[%s0 + $0x50] sm:$0xff]
  %v36 = vld [vmem:[%s0 + $0x58] sm:$0x3]
  %v37 = vld [vmem:[%s0 + $0x60] sm:$0xff]
  %v38 = vld [vmem:[%s0 + $0x68] sm:$0xff]
  %v39 = vld [vmem:[%s0 + $0x70] sm:$0x3]
  %v40 = vld [vmem:[%s0 + $0x78] sm:$0xff]
  %v41 = vld [vmem:[%s0 + $0x80] sm:$0xff]
  %v42 = vld [vmem:[%s0 + $0x88] sm:$0x3]
  %v43 = vld [vmem:[%s0 + $0x90] sm:$0xff]
  %v44 = vld [vmem:[%s0 + $0x98] sm:$0xff]
  %v45 = vld [vmem:[%s0 + $0xa0] sm:$0x3]
  %v46 = vld [vmem:[%s0 + $0xa8] sm:$0xff]
  %v47 = vld [vmem:[%s0 + $0xb0] sm:$0xff]
  %v48 = vld [vmem:[%s0 + $0xb8] sm:$0x3]
  %v49 = vld [vmem:[%s0 + $0xc0] sm:$0xff]
  %v50 = vld [vmem:[%s0 + $0xc8] sm:$0xff]
  %v51 = vld [vmem:[%s0 + $0xd0] sm:$0x3]
  %v52 = vld [vmem:[%s0 + $0xd8] sm:$0xff]
  %v53 = vld [vmem:[%s0 + $0xe0] sm:$0xff]
  %v54 = vld [vmem:[%s0 + $0xe8] sm:$0x3]
  %v55 = vld [vmem:[%s0 + $0xf0] sm:$0xff]
  %v56 = vld [vmem:[%s0 + $0xf8] sm:$0xff]
  %v57 = vld [vmem:[%s0 + $0x100] sm:$0x3]
  %v58 = vld [vmem:[%s0 + $0x108] sm:$0xff]
  %v59 = vld [vmem:[%s0 + $0x110] sm:$0xff]
  %v60 = vld [vmem:[%s0 + $0x118] sm:$0x3]
  %v61 = vld [vmem:[%s0 + $0x120] sm:$0xff]
  %v62 = vld [vmem:[%s0 + $0x128] sm:$0xff]
  %v63 = vld [vmem:[%s0 + $0x130] sm:$0x3]
  %v64 = vld [vmem:[%s0 + $0x138] sm:$0xff]
  %v65 = vld [vmem:[%s0 + $0x140] sm:$0xff]
  %v66 = vld [vmem:[%s0 + $0x148] sm:$0x3]
  %v67 = vld [vmem:[%s0 + $0x150] sm:$0xff]
  %v68 = vld [vmem:[%s0 + $0x158] sm:$0xff]
  %v69 = vld [vmem:[%s0 + $0x160] sm:$0x3]
  %v70 = vld [vmem:[%s0 + $0x168] sm:$0xff]
  %v71 = vld [vmem:[%s0 + $0x170] sm:$0xff]
  %v72 = vld [vmem:[%s0 + $0x178] sm:$0x3]
  %v73 = vld [vmem:[%s0 + $0x180] sm:$0xff]
  %v74 = vld [vmem:[%s0 + $0x188] sm:$0xff]
  %v75 = vld [vmem:[%s0 + $0x190] sm:$0x3]
  %v76 = vld [vmem:[%s0 + $0x198] sm:$0xff]
  %v77 = vld [vmem:[%s0 + $0x1a0] sm:$0xff]
  %v78 = vld [vmem:[%s0 + $0x1a8] sm:$0x3]
  %v79 = vld [vmem:[%s0 + $0x1b0] sm:$0xff]
  %v80 = vld [vmem:[%s0 + $0x1b8] sm:$0xff]
  %v81 = vld [vmem:[%s0 + $0x1c0] sm:$0x3]
  %v82 = vld [vmem:[%s0 + $0x1c8] sm:$0xff]
  %v83 = vld [vmem:[%s0 + $0x1d0] sm:$0xff]
  %v84 = vld [vmem:[%s0 + $0x1d8] sm:$0x3]
  %v85 = vld [vmem:[%s0 + $0x1e0] sm:$0xff]
  %v86 = vld [vmem:[%s0 + $0x1e8] sm:$0xff]
  %v87 = vld [vmem:[%s0 + $0x1f0] sm:$0x3]
  %v88 = vld [vmem:[%s0 + $0x1f8] sm:$0xff]
  %v89 = vld [vmem:[%s0 + $0x200] sm:$0xff]
  %v90 = vld [vmem:[%s0 + $0x208] sm:$0x3]
  %v91 = vld [vmem:[%s0 + $0x210] sm:$0xff]
  %v92 = vld [vmem:[%s0 + $0x218] sm:$0xff]
  %v93 = vld [vmem:[%s0 + $0x220] sm:$0x3]
  %v94 = vld [vmem:[%s0 + $0x228] sm:$0xff]
  %v95 = vld [vmem:[%s0 + $0x230] sm:$0xff]
  %v96 = vld [vmem:[%s0 + $0x238] sm:$0x3]
  %v97 = vld [vmem:[%s0 + $0x240] sm:$0xff]
  %v98 = vld [vmem:[%s0 + $0x248] sm:$0xff]
  %v99 = vld [vmem:[%s0 + $0x250] sm:$0x3]
  %v100 = vld [vmem:[%s0 + $0x258] sm:$0xff]
  %v101 = vld [vmem:[%s0 + $0x260] sm:$0xff]
  %v102 = vld [vmem:[%s0 + $0x268] sm:$0x3]
  %v103 = vld [vmem:[%s0 + $0x270] sm:$0xff]
  %v104 = vld [vmem:[%s0 + $0x278] sm:$0xff]
  %v105 = vld [vmem:[%s0 + $0x280] sm:$0x3]
  %v106 = vld [vmem:[%s0 + $0x288] sm:$0xff]
  %v107 = vld [vmem:[%s0 + $0x290] sm:$0xff]
  %v108 = vld [vmem:[%s0 + $0x298] sm:$0x3]
  %v109 = vld [vmem:[%s0 + $0x2a0] sm:$0xff]
  %v110 = vld [vmem:[%s0 + $0x2a8] sm:$0xff]
  %v111 = vld [vmem:[%s0 + $0x2b0] sm:$0x3]
  %v112 = vld [vmem:[%s0 + $0x2b8] sm:$0xff]
  %v113 = vld [vmem:[%s0 + $0x2c0] sm:$0xff]
  %v114 = vld [vmem:[%s0 + $0x2c8] sm:$0x3]
  %v115 = vld [vmem:[%s0 + $0x2d0] sm:$0xff]
  %v116 = vld [vmem:[%s0 + $0x2d8] sm:$0xff]
  %v117 = vld [vmem:[%s0 + $0x2e0] sm:$0x3]
  %v118 = vld [vmem:[%s0 + $0x2e8] sm:$0xff]
  %v119 = vld [vmem:[%s0 + $0x2f0] sm:$0xff]
  %v120 = vld [vmem:[%s0 + $0x2f8] sm:$0x3]
  %v121 = vld [vmem:[%s0 + $0x300] sm:$0xff]
  %v122 = vld [vmem:[%s0 + $0x308] sm:$0xff]
  %v123 = vld [vmem:[%s0 + $0x310] sm:$0x3]
  %v124 = vld [vmem:[%s0 + $0x318] sm:$0xff]
  %v125 = vld [vmem:[%s0 + $0x320] sm:$0xff]
  %v126 = vld [vmem:[%s0 + $0x328] sm:$0x3]
  %v127 = vld [vmem:[%s0 + $0x330] sm:$0xff]
  %v128 = vld [vmem:[%s0 + $0x338] sm:$0xff]
  %v129 = vld [vmem:[%s0 + $0x340] sm:$0x3]
  %v130 = vld [vmem:[%s0 + $0x348] sm:$0xff]
  %v131 = vld [vmem:[%s0 + $0x350] sm:$0xff]
  %v132 = vld [vmem:[%s0 + $0x358] sm:$0x3]
  %v133 = vld [vmem:[%s1] sm:$0xff]
  %v134 = vld [vmem:[%s1 + $0x8] sm:$0xff]
  %v135 = vld [vmem:[%s1 + $0x10] sm:$0xff]
  %v136 = vld [vmem:[%s1 + $0x18] sm:$0xff]
  %v137 = vld [vmem:[%s1 + $0x20] sm:$0xff]
  %v138 = vld [vmem:[%s1 + $0x28] sm:$0xff]
  %v139 = vld [vmem:[%s1 + $0x30] sm:$0xff]
  %v140 = vld [vmem:[%s1 + $0x38] sm:$0xff]
  %v141 = vld [vmem:[%s1 + $0x40] sm:$0xff]
  %v142 = vld [vmem:[%s1 + $0x48] sm:$0xff]
  %v143 = vld [vmem:[%s1 + $0x50] sm:$0xff]
  %v144 = vld [vmem:[%s1 + $0x58] sm:$0xff]
  %v145 = vld [vmem:[%s1 + $0x60] sm:$0xff]
  %v146 = vld [vmem:[%s1 + $0x68] sm:$0xff]
  %v147 = vld [vmem:[%s1 + $0x70] sm:$0xff]
  %v148 = vld [vmem:[%s1 + $0x78] sm:$0xff]
  %vm245 = vcmask 1046528
  %v246 = vrot.slane %v25, 1
  %v247 = vrot.slane %v26, 1
  %v248 = vsel %vm245, %v246, %v247
  %v249 = vrot.slane %v27, 1
  %v250 = vsel %vm245, %v247, %v249
  %v251 = vrot.slane %v28, 1
  %v252 = vrot.slane %v29, 1
  %v253 = vsel %vm245, %v251, %v252
  %v254 = vrot.slane %v30, 1
  %v255 = vsel %vm245, %v252, %v254
  %v256 = vrot.slane %v31, 1
  %v257 = vrot.slane %v32, 1
  %v258 = vsel %vm245, %v256, %v257
  %v259 = vrot.slane %v33, 1
  %v260 = vsel %vm245, %v257, %v259
  %v261 = vrot.slane %v34, 1
  %v262 = vrot.slane %v35, 1
  %v263 = vsel %vm245, %v261, %v262
  %v264 = vrot.slane %v36, 1
  %v265 = vsel %vm245, %v262, %v264
  %v266 = vrot.slane %v37, 1
  %v267 = vrot.slane %v38, 1
  %v268 = vsel %vm245, %v266, %v267
  %v269 = vrot.slane %v39, 1
  %v270 = vsel %vm245, %v267, %v269
  %v271 = vrot.slane %v40, 1
  %v272 = vrot.slane %v41, 1
  %v273 = vsel %vm245, %v271, %v272
  %v274 = vrot.slane %v42, 1
  %v275 = vsel %vm245, %v272, %v274
  %v276 = vrot.slane %v43, 1
  %v277 = vrot.slane %v44, 1
  %v278 = vsel %vm245, %v276, %v277
  %v279 = vrot.slane %v45, 1
  %v280 = vsel %vm245, %v277, %v279
  %v281 = vrot.slane %v46, 1
  %v282 = vrot.slane %v47, 1
  %v283 = vsel %vm245, %v281, %v282
  %v284 = vrot.slane %v48, 1
  %v285 = vsel %vm245, %v282, %v284
  %v286 = vrot.slane %v49, 1
  %v287 = vrot.slane %v50, 1
  %v288 = vsel %vm245, %v286, %v287
  %v289 = vrot.slane %v51, 1
  %v290 = vsel %vm245, %v287, %v289
  %v291 = vrot.slane %v52, 1
  %v292 = vrot.slane %v53, 1
  %v293 = vsel %vm245, %v291, %v292
  %v294 = vrot.slane %v54, 1
  %v295 = vsel %vm245, %v292, %v294
  %v296 = vrot.slane %v55, 1
  %v297 = vrot.slane %v56, 1
  %v298 = vsel %vm245, %v296, %v297
  %v299 = vrot.slane %v57, 1
  %v300 = vsel %vm245, %v297, %v299
  %v301 = vrot.slane %v58, 1
  %v302 = vrot.slane %v59, 1
  %v303 = vsel %vm245, %v301, %v302
  %v304 = vrot.slane %v60, 1
  %v305 = vsel %vm245, %v302, %v304
  %v306 = vrot.slane %v61, 1
  %v307 = vrot.slane %v62, 1
  %v308 = vsel %vm245, %v306, %v307
  %v309 = vrot.slane %v63, 1
  %v310 = vsel %vm245, %v307, %v309
  %v311 = vrot.slane %v64, 1
  %v312 = vrot.slane %v65, 1
  %v313 = vsel %vm245, %v311, %v312
  %v314 = vrot.slane %v66, 1
  %v315 = vsel %vm245, %v312, %v314
  %v316 = vrot.slane %v67, 1
  %v317 = vrot.slane %v68, 1
  %v318 = vsel %vm245, %v316, %v317
  %v319 = vrot.slane %v69, 1
  %v320 = vsel %vm245, %v317, %v319
  %v321 = vrot.slane %v70, 1
  %v322 = vrot.slane %v71, 1
  %v323 = vsel %vm245, %v321, %v322
  %v324 = vrot.slane %v72, 1
  %v325 = vsel %vm245, %v322, %v324
  %v326 = vrot.slane %v79, 1
  %v327 = vrot.slane %v80, 1
  %v328 = vsel %vm245, %v326, %v327
  %v329 = vrot.slane %v81, 1
  %v330 = vsel %vm245, %v327, %v329
  %v331 = vrot.slane %v82, 1
  %v332 = vrot.slane %v83, 1
  %v333 = vsel %vm245, %v331, %v332
  %v334 = vrot.slane %v84, 1
  %v335 = vsel %vm245, %v332, %v334
  %v336 = vrot.slane %v85, 1
  %v337 = vrot.slane %v86, 1
  %v338 = vsel %vm245, %v336, %v337
  %v339 = vrot.slane %v87, 1
  %v340 = vsel %vm245, %v337, %v339
  %v341 = vrot.slane %v88, 1
  %v342 = vrot.slane %v89, 1
  %v343 = vsel %vm245, %v341, %v342
  %v344 = vrot.slane %v90, 1
  %v345 = vsel %vm245, %v342, %v344
  %v346 = vrot.slane %v91, 1
  %v347 = vrot.slane %v92, 1
  %v348 = vsel %vm245, %v346, %v347
  %v349 = vrot.slane %v93, 1
  %v350 = vsel %vm245, %v347, %v349
  %v351 = vrot.slane %v94, 1
  %v352 = vrot.slane %v95, 1
  %v353 = vsel %vm245, %v351, %v352
  %v354 = vrot.slane %v96, 1
  %v355 = vsel %vm245, %v352, %v354
  %v356 = vrot.slane %v97, 1
  %v357 = vrot.slane %v98, 1
  %v358 = vsel %vm245, %v356, %v357
  %v359 = vrot.slane %v99, 1
  %v360 = vsel %vm245, %v357, %v359
  %v361 = vrot.slane %v100, 1
  %v362 = vrot.slane %v101, 1
  %v363 = vsel %vm245, %v361, %v362
  %v364 = vrot.slane %v102, 1
  %v365 = vsel %vm245, %v362, %v364
  %v366 = vrot.slane %v103, 1
  %v367 = vrot.slane %v104, 1
  %v368 = vsel %vm245, %v366, %v367
  %v369 = vrot.slane %v105, 1
  %v370 = vsel %vm245, %v367, %v369
  %v371 = vrot.slane %v106, 1
  %v372 = vrot.slane %v107, 1
  %v373 = vsel %vm245, %v371, %v372
  %v374 = vrot.slane %v108, 1
  %v375 = vsel %vm245, %v372, %v374
  %v376 = vrot.slane %v109, 1
  %v377 = vrot.slane %v110, 1
  %v378 = vsel %vm245, %v376, %v377
  %v379 = vrot.slane %v111, 1
  %v380 = vsel %vm245, %v377, %v379
  %v381 = vrot.slane %v112, 1
  %v382 = vrot.slane %v113, 1
  %v383 = vsel %vm245, %v381, %v382
  %v384 = vrot.slane %v114, 1
  %v385 = vsel %vm245, %v382, %v384
  %v386 = vrot.slane %v115, 1
  %v387 = vrot.slane %v116, 1
  %v388 = vsel %vm245, %v386, %v387
  %v389 = vrot.slane %v117, 1
  %v390 = vsel %vm245, %v387, %v389
  %v391 = vrot.slane %v118, 1
  %v392 = vrot.slane %v119, 1
  %v393 = vsel %vm245, %v391, %v392
  %v394 = vrot.slane %v120, 1
  %v395 = vsel %vm245, %v392, %v394
  %v396 = vrot.slane %v121, 1
  %v397 = vrot.slane %v122, 1
  %v398 = vsel %vm245, %v396, %v397
  %v399 = vrot.slane %v123, 1
  %v400 = vsel %vm245, %v397, %v399
  %v401 = vrot.slane %v124, 1
  %v402 = vrot.slane %v125, 1
  %v403 = vsel %vm245, %v401, %v402
  %v404 = vrot.slane %v126, 1
  %v405 = vsel %vm245, %v402, %v404
  %s470 = scalar_lea.vmem %s1, 128
  %v471 = vld [vmem:[%s470] sm:$0xff]
  %v472 = vld [vmem:[%s470 + $0x8] sm:$0xff]
  %v473 = vld [vmem:[%s470 + $0x10] sm:$0xff]
  %v474 = vld [vmem:[%s470 + $0x18] sm:$0xff]
  %v475 = vld [vmem:[%s470 + $0x20] sm:$0xff]
  %v476 = vld [vmem:[%s470 + $0x28] sm:$0xff]
  %v477 = vld [vmem:[%s470 + $0x30] sm:$0xff]
  %v478 = vld [vmem:[%s470 + $0x38] sm:$0xff]
  %v479 = vld [vmem:[%s470 + $0x40] sm:$0xff]
  %v480 = vld [vmem:[%s470 + $0x48] sm:$0xff]
  %v481 = vld [vmem:[%s470 + $0x50] sm:$0xff]
  %v482 = vld [vmem:[%s470 + $0x58] sm:$0xff]
  %v483 = vld [vmem:[%s470 + $0x60] sm:$0xff]
  %v484 = vld [vmem:[%s470 + $0x68] sm:$0xff]
  %v485 = vld [vmem:[%s470 + $0x70] sm:$0xff]
  %v486 = vld [vmem:[%s470 + $0x78] sm:$0xff]
  %487 = vmatpush.msra.mxu0 %v486
  %488 = vmatpush.msra.mxu0 %v485
  %489 = vmatpush.msra.mxu0 %v484
  %490 = vmatpush.msra.mxu0 %v483
  %491 = vmatpush.msra.mxu0 %v482
  %492 = vmatpush.msra.mxu0 %v481
  %493 = vmatpush.msra.mxu0 %v480
  %494 = vmatpush.msra.mxu0 %v479
  %495 = vmatpush.msra.mxu0 %v478
  %496 = vmatpush.msra.mxu0 %v477
  %497 = vmatpush.msra.mxu0 %v476
  %498 = vmatpush.msra.mxu0 %v475
  %499 = vmatpush.msra.mxu0 %v474
  %500 = vmatpush.msra.mxu0 %v473
  %501 = vmatpush.msra.mxu0 %v472
  %502 = vmatpush.msra.mxu0 %v471
  %503 = vmatmul.f32.gmra.mxu0 %v248
  %v504 = vpop.f32.mrf.mxu0
  %v505 = vadd.f32 0.0, %v504
  %506 = vmatmul.f32.gmra.mxu0 %v250
  %v507 = vpop.f32.mrf.mxu0
  %v508 = vadd.f32 0.0, %v507
  %509 = vmatmul.f32.gmra.mxu0 %v253
  %v510 = vpop.f32.mrf.mxu0
  %v511 = vadd.f32 0.0, %v510
  %512 = vmatmul.f32.gmra.mxu0 %v255
  %v513 = vpop.f32.mrf.mxu0
  %v514 = vadd.f32 0.0, %v513
  %515 = vmatmul.f32.gmra.mxu0 %v258
  %v516 = vpop.f32.mrf.mxu0
  %v517 = vadd.f32 0.0, %v516
  %518 = vmatmul.f32.gmra.mxu0 %v260
  %v519 = vpop.f32.mrf.mxu0
  %v520 = vadd.f32 0.0, %v519
  %521 = vmatmul.f32.gmra.mxu0 %v263
  %v522 = vpop.f32.mrf.mxu0
  %v523 = vadd.f32 0.0, %v522
  %524 = vmatmul.f32.gmra.mxu0 %v265
  %v525 = vpop.f32.mrf.mxu0
  %v526 = vadd.f32 0.0, %v525
  %527 = vmatmul.f32.gmra.mxu0 %v268
  %v528 = vpop.f32.mrf.mxu0
  %v529 = vadd.f32 0.0, %v528
  %530 = vmatmul.f32.gmra.mxu0 %v270
  %v531 = vpop.f32.mrf.mxu0
  %v532 = vadd.f32 0.0, %v531
  %533 = vmatmul.f32.gmra.mxu0 %v273
  %v534 = vpop.f32.mrf.mxu0
  %v535 = vadd.f32 0.0, %v534
  %536 = vmatmul.f32.gmra.mxu0 %v275
  %v537 = vpop.f32.mrf.mxu0
  %v538 = vadd.f32 0.0, %v537
  %539 = vmatmul.f32.gmra.mxu0 %v278
  %v540 = vpop.f32.mrf.mxu0
  %v541 = vadd.f32 0.0, %v540
  %542 = vmatmul.f32.gmra.mxu0 %v280
  %v543 = vpop.f32.mrf.mxu0
  %v544 = vadd.f32 0.0, %v543
  %545 = vmatmul.f32.gmra.mxu0 %v283
  %v546 = vpop.f32.mrf.mxu0
  %v547 = vadd.f32 0.0, %v546
  %548 = vmatmul.f32.gmra.mxu0 %v285
  %v549 = vpop.f32.mrf.mxu0
  %v550 = vadd.f32 0.0, %v549
  %551 = vmatmul.f32.gmra.mxu0 %v288
  %v552 = vpop.f32.mrf.mxu0
  %v553 = vadd.f32 0.0, %v552
  %554 = vmatmul.f32.gmra.mxu0 %v290
  %v555 = vpop.f32.mrf.mxu0
  %v556 = vadd.f32 0.0, %v555
  %557 = vmatmul.f32.gmra.mxu0 %v293
  %v558 = vpop.f32.mrf.mxu0
  %v559 = vadd.f32 0.0, %v558
  %560 = vmatmul.f32.gmra.mxu0 %v295
  %v561 = vpop.f32.mrf.mxu0
  %v562 = vadd.f32 0.0, %v561
  %563 = vmatmul.f32.gmra.mxu0 %v298
  %v564 = vpop.f32.mrf.mxu0
  %v565 = vadd.f32 0.0, %v564
  %566 = vmatmul.f32.gmra.mxu0 %v300
  %v567 = vpop.f32.mrf.mxu0
  %v568 = vadd.f32 0.0, %v567
  %569 = vmatmul.f32.gmra.mxu0 %v303
  %v570 = vpop.f32.mrf.mxu0
  %v571 = vadd.f32 0.0, %v570
  %572 = vmatmul.f32.gmra.mxu0 %v305
  %v573 = vpop.f32.mrf.mxu0
  %v574 = vadd.f32 0.0, %v573
  %575 = vmatmul.f32.gmra.mxu0 %v308
  %v576 = vpop.f32.mrf.mxu0
  %v577 = vadd.f32 0.0, %v576
  %578 = vmatmul.f32.gmra.mxu0 %v310
  %v579 = vpop.f32.mrf.mxu0
  %v580 = vadd.f32 0.0, %v579
  %581 = vmatmul.f32.gmra.mxu0 %v313
  %v582 = vpop.f32.mrf.mxu0
  %v583 = vadd.f32 0.0, %v582
  %584 = vmatmul.f32.gmra.mxu0 %v315
  %v585 = vpop.f32.mrf.mxu0
  %v586 = vadd.f32 0.0, %v585
  %587 = vmatmul.f32.gmra.mxu0 %v318
  %v588 = vpop.f32.mrf.mxu0
  %v589 = vadd.f32 0.0, %v588
  %590 = vmatmul.f32.gmra.mxu0 %v320
  %v591 = vpop.f32.mrf.mxu0
  %v592 = vadd.f32 0.0, %v591
  %593 = vmatmul.f32.gmra.mxu0 %v323
  %v594 = vpop.f32.mrf.mxu0
  %v595 = vadd.f32 0.0, %v594
  %596 = vmatmul.f32.gmra.mxu0 %v325
  %v597 = vpop.f32.mrf.mxu0
  %v598 = vadd.f32 0.0, %v597
  %599 = vmatmul.f32.gmra.mxu0 %v328
  %v600 = vpop.f32.mrf.mxu0
  %v601 = vadd.f32 0.0, %v600
  %602 = vmatmul.f32.gmra.mxu0 %v330
  %v603 = vpop.f32.mrf.mxu0
  %v604 = vadd.f32 0.0, %v603
  %605 = vmatmul.f32.gmra.mxu0 %v333
  %v606 = vpop.f32.mrf.mxu0
  %v607 = vadd.f32 0.0, %v606
  %608 = vmatmul.f32.gmra.mxu0 %v335
  %v609 = vpop.f32.mrf.mxu0
  %v610 = vadd.f32 0.0, %v609
  %611 = vmatmul.f32.gmra.mxu0 %v338
  %v612 = vpop.f32.mrf.mxu0
  %v613 = vadd.f32 0.0, %v612
  %614 = vmatmul.f32.gmra.mxu0 %v340
  %v615 = vpop.f32.mrf.mxu0
  %v616 = vadd.f32 0.0, %v615
  %617 = vmatmul.f32.gmra.mxu0 %v343
  %v618 = vpop.f32.mrf.mxu0
  %v619 = vadd.f32 0.0, %v618
  %620 = vmatmul.f32.gmra.mxu0 %v345
  %v621 = vpop.f32.mrf.mxu0
  %v622 = vadd.f32 0.0, %v621
  %623 = vmatmul.f32.gmra.mxu0 %v348
  %v624 = vpop.f32.mrf.mxu0
  %v625 = vadd.f32 0.0, %v624
  %626 = vmatmul.f32.gmra.mxu0 %v350
  %v627 = vpop.f32.mrf.mxu0
  %v628 = vadd.f32 0.0, %v627
  %629 = vmatmul.f32.gmra.mxu0 %v353
  %v630 = vpop.f32.mrf.mxu0
  %v631 = vadd.f32 0.0, %v630
  %632 = vmatmul.f32.gmra.mxu0 %v355
  %v633 = vpop.f32.mrf.mxu0
  %v634 = vadd.f32 0.0, %v633
  %635 = vmatmul.f32.gmra.mxu0 %v358
  %v636 = vpop.f32.mrf.mxu0
  %v637 = vadd.f32 0.0, %v636
  %638 = vmatmul.f32.gmra.mxu0 %v360
  %v639 = vpop.f32.mrf.mxu0
  %v640 = vadd.f32 0.0, %v639
  %641 = vmatmul.f32.gmra.mxu0 %v363
  %v642 = vpop.f32.mrf.mxu0
  %v643 = vadd.f32 0.0, %v642
  %644 = vmatmul.f32.gmra.mxu0 %v365
  %v645 = vpop.f32.mrf.mxu0
  %v646 = vadd.f32 0.0, %v645
  %647 = vmatmul.f32.gmra.mxu0 %v368
  %v648 = vpop.f32.mrf.mxu0
  %v649 = vadd.f32 0.0, %v648
  %650 = vmatmul.f32.gmra.mxu0 %v370
  %v651 = vpop.f32.mrf.mxu0
  %v652 = vadd.f32 0.0, %v651
  %653 = vmatmul.f32.gmra.mxu0 %v373
  %v654 = vpop.f32.mrf.mxu0
  %v655 = vadd.f32 0.0, %v654
  %656 = vmatmul.f32.gmra.mxu0 %v375
  %v657 = vpop.f32.mrf.mxu0
  %v658 = vadd.f32 0.0, %v657
  %659 = vmatmul.f32.gmra.mxu0 %v378
  %v660 = vpop.f32.mrf.mxu0
  %v661 = vadd.f32 0.0, %v660
  %662 = vmatmul.f32.gmra.mxu0 %v380
  %v663 = vpop.f32.mrf.mxu0
  %v664 = vadd.f32 0.0, %v663
  %665 = vmatmul.f32.gmra.mxu0 %v383
  %v666 = vpop.f32.mrf.mxu0
  %v667 = vadd.f32 0.0, %v666
  %668 = vmatmul.f32.gmra.mxu0 %v385
  %v669 = vpop.f32.mrf.mxu0
  %v670 = vadd.f32 0.0, %v669
  %671 = vmatmul.f32.gmra.mxu0 %v388
  %v672 = vpop.f32.mrf.mxu0
  %v673 = vadd.f32 0.0, %v672
  %674 = vmatmul.f32.gmra.mxu0 %v390
  %v675 = vpop.f32.mrf.mxu0
  %v676 = vadd.f32 0.0, %v675
  %677 = vmatmul.f32.gmra.mxu0 %v393
  %v678 = vpop.f32.mrf.mxu0
  %v679 = vadd.f32 0.0, %v678
  %680 = vmatmul.f32.gmra.mxu0 %v395
  %v681 = vpop.f32.mrf.mxu0
  %v682 = vadd.f32 0.0, %v681
  %683 = vmatmul.f32.gmra.mxu0 %v398
  %v684 = vpop.f32.mrf.mxu0
  %v685 = vadd.f32 0.0, %v684
  %686 = vmatmul.f32.gmra.mxu0 %v400
  %v687 = vpop.f32.mrf.mxu0
  %v688 = vadd.f32 0.0, %v687
  %689 = vmatmul.f32.gmra.mxu0 %v403
  %v690 = vpop.f32.mrf.mxu0
  %v691 = vadd.f32 0.0, %v690
  %692 = vmatmul.f32.gmra.mxu0 %v405
  %v693 = vpop.f32.mrf.mxu0
  %v694 = vadd.f32 0.0, %v693
  %695 = vdwg.mxu0
  %696 = vmatpush.msra.mxu0 %v148
  %697 = vmatpush.msra.mxu0 %v147
  %698 = vmatpush.msra.mxu0 %v146
  %699 = vmatpush.msra.mxu0 %v145
  %700 = vmatpush.msra.mxu0 %v144
  %701 = vmatpush.msra.mxu0 %v143
  %702 = vmatpush.msra.mxu0 %v142
  %703 = vmatpush.msra.mxu0 %v141
  %704 = vmatpush.msra.mxu0 %v140
  %705 = vmatpush.msra.mxu0 %v139
  %706 = vmatpush.msra.mxu0 %v138
  %707 = vmatpush.msra.mxu0 %v137
  %708 = vmatpush.msra.mxu0 %v136
  %709 = vmatpush.msra.mxu0 %v135
  %710 = vmatpush.msra.mxu0 %v134
  %711 = vmatpush.msra.mxu0 %v133
  %712 = vmatmul.f32.gmra.mxu0 %v25
  %v713 = vpop.f32.mrf.mxu0
  %v714 = vadd.f32 %v505, %v713
  %715 = vmatmul.f32.gmra.mxu0 %v26
  %v716 = vpop.f32.mrf.mxu0
  %v717 = vadd.f32 %v508, %v716
  %718 = vmatmul.f32.gmra.mxu0 %v28
  %v719 = vpop.f32.mrf.mxu0
  %v720 = vadd.f32 %v511, %v719
  %721 = vmatmul.f32.gmra.mxu0 %v29
  %v722 = vpop.f32.mrf.mxu0
  %v723 = vadd.f32 %v514, %v722
  %724 = vmatmul.f32.gmra.mxu0 %v31
  %v725 = vpop.f32.mrf.mxu0
  %v726 = vadd.f32 %v517, %v725
  %727 = vmatmul.f32.gmra.mxu0 %v32
  %v728 = vpop.f32.mrf.mxu0
  %v729 = vadd.f32 %v520, %v728
  %730 = vmatmul.f32.gmra.mxu0 %v34
  %v731 = vpop.f32.mrf.mxu0
  %v732 = vadd.f32 %v523, %v731
  %733 = vmatmul.f32.gmra.mxu0 %v35
  %v734 = vpop.f32.mrf.mxu0
  %v735 = vadd.f32 %v526, %v734
  %736 = vmatmul.f32.gmra.mxu0 %v37
  %v737 = vpop.f32.mrf.mxu0
  %v738 = vadd.f32 %v529, %v737
  %739 = vmatmul.f32.gmra.mxu0 %v38
  %v740 = vpop.f32.mrf.mxu0
  %v741 = vadd.f32 %v532, %v740
  %742 = vmatmul.f32.gmra.mxu0 %v40
  %v743 = vpop.f32.mrf.mxu0
  %v744 = vadd.f32 %v535, %v743
  %745 = vmatmul.f32.gmra.mxu0 %v41
  %v746 = vpop.f32.mrf.mxu0
  %v747 = vadd.f32 %v538, %v746
  %748 = vmatmul.f32.gmra.mxu0 %v43
  %v749 = vpop.f32.mrf.mxu0
  %v750 = vadd.f32 %v541, %v749
  %751 = vmatmul.f32.gmra.mxu0 %v44
  %v752 = vpop.f32.mrf.mxu0
  %v753 = vadd.f32 %v544, %v752
  %754 = vmatmul.f32.gmra.mxu0 %v46
  %v755 = vpop.f32.mrf.mxu0
  %v756 = vadd.f32 %v547, %v755
  %757 = vmatmul.f32.gmra.mxu0 %v47
  %v758 = vpop.f32.mrf.mxu0
  %v759 = vadd.f32 %v550, %v758
  %760 = vmatmul.f32.gmra.mxu0 %v49
  %v761 = vpop.f32.mrf.mxu0
  %v762 = vadd.f32 %v553, %v761
  %763 = vmatmul.f32.gmra.mxu0 %v50
  %v764 = vpop.f32.mrf.mxu0
  %v765 = vadd.f32 %v556, %v764
  %766 = vmatmul.f32.gmra.mxu0 %v52
  %v767 = vpop.f32.mrf.mxu0
  %v768 = vadd.f32 %v559, %v767
  %769 = vmatmul.f32.gmra.mxu0 %v53
  %v770 = vpop.f32.mrf.mxu0
  %v771 = vadd.f32 %v562, %v770
  %772 = vmatmul.f32.gmra.mxu0 %v55
  %v773 = vpop.f32.mrf.mxu0
  %v774 = vadd.f32 %v565, %v773
  %775 = vmatmul.f32.gmra.mxu0 %v56
  %v776 = vpop.f32.mrf.mxu0
  %v777 = vadd.f32 %v568, %v776
  %778 = vmatmul.f32.gmra.mxu0 %v58
  %v779 = vpop.f32.mrf.mxu0
  %v780 = vadd.f32 %v571, %v779
  %781 = vmatmul.f32.gmra.mxu0 %v59
  %v782 = vpop.f32.mrf.mxu0
  %v783 = vadd.f32 %v574, %v782
  %784 = vmatmul.f32.gmra.mxu0 %v61
  %v785 = vpop.f32.mrf.mxu0
  %v786 = vadd.f32 %v577, %v785
  %787 = vmatmul.f32.gmra.mxu0 %v62
  %v788 = vpop.f32.mrf.mxu0
  %v789 = vadd.f32 %v580, %v788
  %790 = vmatmul.f32.gmra.mxu0 %v64
  %v791 = vpop.f32.mrf.mxu0
  %v792 = vadd.f32 %v583, %v791
  %793 = vmatmul.f32.gmra.mxu0 %v65
  %v794 = vpop.f32.mrf.mxu0
  %v795 = vadd.f32 %v586, %v794
  %796 = vmatmul.f32.gmra.mxu0 %v67
  %v797 = vpop.f32.mrf.mxu0
  %v798 = vadd.f32 %v589, %v797
  %799 = vmatmul.f32.gmra.mxu0 %v68
  %v800 = vpop.f32.mrf.mxu0
  %v801 = vadd.f32 %v592, %v800
  %802 = vmatmul.f32.gmra.mxu0 %v70
  %v803 = vpop.f32.mrf.mxu0
  %v804 = vadd.f32 %v595, %v803
  %805 = vmatmul.f32.gmra.mxu0 %v71
  %v806 = vpop.f32.mrf.mxu0
  %v807 = vadd.f32 %v598, %v806
  %808 = vmatmul.f32.gmra.mxu0 %v79
  %v809 = vpop.f32.mrf.mxu0
  %v810 = vadd.f32 %v601, %v809
  %811 = vmatmul.f32.gmra.mxu0 %v80
  %v812 = vpop.f32.mrf.mxu0
  %v813 = vadd.f32 %v604, %v812
  %814 = vmatmul.f32.gmra.mxu0 %v82
  %v815 = vpop.f32.mrf.mxu0
  %v816 = vadd.f32 %v607, %v815
  %817 = vmatmul.f32.gmra.mxu0 %v83
  %v818 = vpop.f32.mrf.mxu0
  %v819 = vadd.f32 %v610, %v818
  %820 = vmatmul.f32.gmra.mxu0 %v85
  %v821 = vpop.f32.mrf.mxu0
  %v822 = vadd.f32 %v613, %v821
  %823 = vmatmul.f32.gmra.mxu0 %v86
  %v824 = vpop.f32.mrf.mxu0
  %v825 = vadd.f32 %v616, %v824
  %826 = vmatmul.f32.gmra.mxu0 %v88
  %v827 = vpop.f32.mrf.mxu0
  %v828 = vadd.f32 %v619, %v827
  %829 = vmatmul.f32.gmra.mxu0 %v89
  %v830 = vpop.f32.mrf.mxu0
  %v831 = vadd.f32 %v622, %v830
  %832 = vmatmul.f32.gmra.mxu0 %v91
  %v833 = vpop.f32.mrf.mxu0
  %v834 = vadd.f32 %v625, %v833
  %835 = vmatmul.f32.gmra.mxu0 %v92
  %v836 = vpop.f32.mrf.mxu0
  %v837 = vadd.f32 %v628, %v836
  %838 = vmatmul.f32.gmra.mxu0 %v94
  %v839 = vpop.f32.mrf.mxu0
  %v840 = vadd.f32 %v631, %v839
  %841 = vmatmul.f32.gmra.mxu0 %v95
  %v842 = vpop.f32.mrf.mxu0
  %v843 = vadd.f32 %v634, %v842
  %844 = vmatmul.f32.gmra.mxu0 %v97
  %v845 = vpop.f32.mrf.mxu0
  %v846 = vadd.f32 %v637, %v845
  %847 = vmatmul.f32.gmra.mxu0 %v98
  %v848 = vpop.f32.mrf.mxu0
  %v849 = vadd.f32 %v640, %v848
  %850 = vmatmul.f32.gmra.mxu0 %v100
  %v851 = vpop.f32.mrf.mxu0
  %v852 = vadd.f32 %v643, %v851
  %853 = vmatmul.f32.gmra.mxu0 %v101
  %v854 = vpop.f32.mrf.mxu0
  %v855 = vadd.f32 %v646, %v854
  %856 = vmatmul.f32.gmra.mxu0 %v103
  %v857 = vpop.f32.mrf.mxu0
  %v858 = vadd.f32 %v649, %v857
  %859 = vmatmul.f32.gmra.mxu0 %v104
  %v860 = vpop.f32.mrf.mxu0
  %v861 = vadd.f32 %v652, %v860
  %862 = vmatmul.f32.gmra.mxu0 %v106
  %v863 = vpop.f32.mrf.mxu0
  %v864 = vadd.f32 %v655, %v863
  %865 = vmatmul.f32.gmra.mxu0 %v107
  %v866 = vpop.f32.mrf.mxu0
  %v867 = vadd.f32 %v658, %v866
  %868 = vmatmul.f32.gmra.mxu0 %v109
  %v869 = vpop.f32.mrf.mxu0
  %v870 = vadd.f32 %v661, %v869
  %871 = vmatmul.f32.gmra.mxu0 %v110
  %v872 = vpop.f32.mrf.mxu0
  %v873 = vadd.f32 %v664, %v872
  %874 = vmatmul.f32.gmra.mxu0 %v112
  %v875 = vpop.f32.mrf.mxu0
  %v876 = vadd.f32 %v667, %v875
  %877 = vmatmul.f32.gmra.mxu0 %v113
  %v878 = vpop.f32.mrf.mxu0
  %v879 = vadd.f32 %v670, %v878
  %880 = vmatmul.f32.gmra.mxu0 %v115
  %v881 = vpop.f32.mrf.mxu0
  %v882 = vadd.f32 %v673, %v881
  %883 = vmatmul.f32.gmra.mxu0 %v116
  %v884 = vpop.f32.mrf.mxu0
  %v885 = vadd.f32 %v676, %v884
  %886 = vmatmul.f32.gmra.mxu0 %v118
  %v887 = vpop.f32.mrf.mxu0
  %v888 = vadd.f32 %v679, %v887
  %889 = vmatmul.f32.gmra.mxu0 %v119
  %v890 = vpop.f32.mrf.mxu0
  %v891 = vadd.f32 %v682, %v890
  %892 = vmatmul.f32.gmra.mxu0 %v121
  %v893 = vpop.f32.mrf.mxu0
  %v894 = vadd.f32 %v685, %v893
  %895 = vmatmul.f32.gmra.mxu0 %v122
  %v896 = vpop.f32.mrf.mxu0
  %v897 = vadd.f32 %v688, %v896
  %898 = vmatmul.f32.gmra.mxu0 %v124
  %v899 = vpop.f32.mrf.mxu0
  %v900 = vadd.f32 %v691, %v899
  %901 = vmatmul.f32.gmra.mxu0 %v125
  %v902 = vpop.f32.mrf.mxu0
  %v903 = vadd.f32 %v694, %v902
  %904 = vdwg.mxu0
  %vm905 = vcmask 1045504
  %v906 = vrot.slane %v25, 2
  %v907 = vrot.slane %v26, 2
  %v908 = vsel %vm905, %v906, %v907
  %v909 = vrot.slane %v27, 2
  %v910 = vsel %vm905, %v907, %v909
  %v911 = vrot.slane %v28, 2
  %v912 = vrot.slane %v29, 2
  %v913 = vsel %vm905, %v911, %v912
  %v914 = vrot.slane %v30, 2
  %v915 = vsel %vm905, %v912, %v914
  %v916 = vrot.slane %v31, 2
  %v917 = vrot.slane %v32, 2
  %v918 = vsel %vm905, %v916, %v917
  %v919 = vrot.slane %v33, 2
  %v920 = vsel %vm905, %v917, %v919
  %v921 = vrot.slane %v34, 2
  %v922 = vrot.slane %v35, 2
  %v923 = vsel %vm905, %v921, %v922
  %v924 = vrot.slane %v36, 2
  %v925 = vsel %vm905, %v922, %v924
  %v926 = vrot.slane %v37, 2
  %v927 = vrot.slane %v38, 2
  %v928 = vsel %vm905, %v926, %v927
  %v929 = vrot.slane %v39, 2
  %v930 = vsel %vm905, %v927, %v929
  %v931 = vrot.slane %v40, 2
  %v932 = vrot.slane %v41, 2
  %v933 = vsel %vm905, %v931, %v932
  %v934 = vrot.slane %v42, 2
  %v935 = vsel %vm905, %v932, %v934
  %v936 = vrot.slane %v43, 2
  %v937 = vrot.slane %v44, 2
  %v938 = vsel %vm905, %v936, %v937
  %v939 = vrot.slane %v45, 2
  %v940 = vsel %vm905, %v937, %v939
  %v941 = vrot.slane %v46, 2
  %v942 = vrot.slane %v47, 2
  %v943 = vsel %vm905, %v941, %v942
  %v944 = vrot.slane %v48, 2
  %v945 = vsel %vm905, %v942, %v944
  %v946 = vrot.slane %v49, 2
  %v947 = vrot.slane %v50, 2
  %v948 = vsel %vm905, %v946, %v947
  %v949 = vrot.slane %v51, 2
  %v950 = vsel %vm905, %v947, %v949
  %v951 = vrot.slane %v52, 2
  %v952 = vrot.slane %v53, 2
  %v953 = vsel %vm905, %v951, %v952
  %v954 = vrot.slane %v54, 2
  %v955 = vsel %vm905, %v952, %v954
  %v956 = vrot.slane %v55, 2
  %v957 = vrot.slane %v56, 2
  %v958 = vsel %vm905, %v956, %v957
  %v959 = vrot.slane %v57, 2
  %v960 = vsel %vm905, %v957, %v959
  %v961 = vrot.slane %v58, 2
  %v962 = vrot.slane %v59, 2
  %v963 = vsel %vm905, %v961, %v962
  %v964 = vrot.slane %v60, 2
  %v965 = vsel %vm905, %v962, %v964
  %v966 = vrot.slane %v61, 2
  %v967 = vrot.slane %v62, 2
  %v968 = vsel %vm905, %v966, %v967
  %v969 = vrot.slane %v63, 2
  %v970 = vsel %vm905, %v967, %v969
  %v971 = vrot.slane %v64, 2
  %v972 = vrot.slane %v65, 2
  %v973 = vsel %vm905, %v971, %v972
  %v974 = vrot.slane %v66, 2
  %v975 = vsel %vm905, %v972, %v974
  %v976 = vrot.slane %v67, 2
  %v977 = vrot.slane %v68, 2
  %v978 = vsel %vm905, %v976, %v977
  %v979 = vrot.slane %v69, 2
  %v980 = vsel %vm905, %v977, %v979
  %v981 = vrot.slane %v70, 2
  %v982 = vrot.slane %v71, 2
  %v983 = vsel %vm905, %v981, %v982
  %v984 = vrot.slane %v72, 2
  %v985 = vsel %vm905, %v982, %v984
  %v986 = vrot.slane %v79, 2
  %v987 = vrot.slane %v80, 2
  %v988 = vsel %vm905, %v986, %v987
  %v989 = vrot.slane %v81, 2
  %v990 = vsel %vm905, %v987, %v989
  %v991 = vrot.slane %v82, 2
  %v992 = vrot.slane %v83, 2
  %v993 = vsel %vm905, %v991, %v992
  %v994 = vrot.slane %v84, 2
  %v995 = vsel %vm905, %v992, %v994
  %v996 = vrot.slane %v85, 2
  %v997 = vrot.slane %v86, 2
  %v998 = vsel %vm905, %v996, %v997
  %v999 = vrot.slane %v87, 2
  %v1000 = vsel %vm905, %v997, %v999
  %v1001 = vrot.slane %v88, 2
  %v1002 = vrot.slane %v89, 2
  %v1003 = vsel %vm905, %v1001, %v1002
  %v1004 = vrot.slane %v90, 2
  %v1005 = vsel %vm905, %v1002, %v1004
  %v1006 = vrot.slane %v91, 2
  %v1007 = vrot.slane %v92, 2
  %v1008 = vsel %vm905, %v1006, %v1007
  %v1009 = vrot.slane %v93, 2
  %v1010 = vsel %vm905, %v1007, %v1009
  %v1011 = vrot.slane %v94, 2
  %v1012 = vrot.slane %v95, 2
  %v1013 = vsel %vm905, %v1011, %v1012
  %v1014 = vrot.slane %v96, 2
  %v1015 = vsel %vm905, %v1012, %v1014
  %v1016 = vrot.slane %v97, 2
  %v1017 = vrot.slane %v98, 2
  %v1018 = vsel %vm905, %v1016, %v1017
  %v1019 = vrot.slane %v99, 2
  %v1020 = vsel %vm905, %v1017, %v1019
  %v1021 = vrot.slane %v100, 2
  %v1022 = vrot.slane %v101, 2
  %v1023 = vsel %vm905, %v1021, %v1022
  %v1024 = vrot.slane %v102, 2
  %v1025 = vsel %vm905, %v1022, %v1024
  %v1026 = vrot.slane %v103, 2
  %v1027 = vrot.slane %v104, 2
  %v1028 = vsel %vm905, %v1026, %v1027
  %v1029 = vrot.slane %v105, 2
  %v1030 = vsel %vm905, %v1027, %v1029
  %v1031 = vrot.slane %v106, 2
  %v1032 = vrot.slane %v107, 2
  %v1033 = vsel %vm905, %v1031, %v1032
  %v1034 = vrot.slane %v108, 2
  %v1035 = vsel %vm905, %v1032, %v1034
  %v1036 = vrot.slane %v109, 2
  %v1037 = vrot.slane %v110, 2
  %v1038 = vsel %vm905, %v1036, %v1037
  %v1039 = vrot.slane %v111, 2
  %v1040 = vsel %vm905, %v1037, %v1039
  %v1041 = vrot.slane %v112, 2
  %v1042 = vrot.slane %v113, 2
  %v1043 = vsel %vm905, %v1041, %v1042
  %v1044 = vrot.slane %v114, 2
  %v1045 = vsel %vm905, %v1042, %v1044
  %v1046 = vrot.slane %v115, 2
  %v1047 = vrot.slane %v116, 2
  %v1048 = vsel %vm905, %v1046, %v1047
  %v1049 = vrot.slane %v117, 2
  %v1050 = vsel %vm905, %v1047, %v1049
  %v1051 = vrot.slane %v118, 2
  %v1052 = vrot.slane %v119, 2
  %v1053 = vsel %vm905, %v1051, %v1052
  %v1054 = vrot.slane %v120, 2
  %v1055 = vsel %vm905, %v1052, %v1054
  %v1056 = vrot.slane %v121, 2
  %v1057 = vrot.slane %v122, 2
  %v1058 = vsel %vm905, %v1056, %v1057
  %v1059 = vrot.slane %v123, 2
  %v1060 = vsel %vm905, %v1057, %v1059
  %v1061 = vrot.slane %v124, 2
  %v1062 = vrot.slane %v125, 2
  %v1063 = vsel %vm905, %v1061, %v1062
  %v1064 = vrot.slane %v126, 2
  %v1065 = vsel %vm905, %v1062, %v1064
  %s1130 = scalar_lea.vmem %s1, 256
  %v1131 = vld [vmem:[%s1130] sm:$0xff]
  %v1132 = vld [vmem:[%s1130 + $0x8] sm:$0xff]
  %v1133 = vld [vmem:[%s1130 + $0x10] sm:$0xff]
  %v1134 = vld [vmem:[%s1130 + $0x18] sm:$0xff]
  %v1135 = vld [vmem:[%s1130 + $0x20] sm:$0xff]
  %v1136 = vld [vmem:[%s1130 + $0x28] sm:$0xff]
  %v1137 = vld [vmem:[%s1130 + $0x30] sm:$0xff]
  %v1138 = vld [vmem:[%s1130 + $0x38] sm:$0xff]
  %v1139 = vld [vmem:[%s1130 + $0x40] sm:$0xff]
  %v1140 = vld [vmem:[%s1130 + $0x48] sm:$0xff]
  %v1141 = vld [vmem:[%s1130 + $0x50] sm:$0xff]
  %v1142 = vld [vmem:[%s1130 + $0x58] sm:$0xff]
  %v1143 = vld [vmem:[%s1130 + $0x60] sm:$0xff]
  %v1144 = vld [vmem:[%s1130 + $0x68] sm:$0xff]
  %v1145 = vld [vmem:[%s1130 + $0x70] sm:$0xff]
  %v1146 = vld [vmem:[%s1130 + $0x78] sm:$0xff]
  %1147 = vmatpush.msra.mxu0 %v1146
  %1148 = vmatpush.msra.mxu0 %v1145
  %1149 = vmatpush.msra.mxu0 %v1144
  %1150 = vmatpush.msra.mxu0 %v1143
  %1151 = vmatpush.msra.mxu0 %v1142
  %1152 = vmatpush.msra.mxu0 %v1141
  %1153 = vmatpush.msra.mxu0 %v1140
  %1154 = vmatpush.msra.mxu0 %v1139
  %1155 = vmatpush.msra.mxu0 %v1138
  %1156 = vmatpush.msra.mxu0 %v1137
  %1157 = vmatpush.msra.mxu0 %v1136
  %1158 = vmatpush.msra.mxu0 %v1135
  %1159 = vmatpush.msra.mxu0 %v1134
  %1160 = vmatpush.msra.mxu0 %v1133
  %1161 = vmatpush.msra.mxu0 %v1132
  %1162 = vmatpush.msra.mxu0 %v1131
  %1163 = vmatmul.f32.gmra.mxu0 %v908
  %v1164 = vpop.f32.mrf.mxu0
  %v1165 = vadd.f32 0.0, %v1164
  %1166 = vmatmul.f32.gmra.mxu0 %v910
  %v1167 = vpop.f32.mrf.mxu0
  %v1168 = vadd.f32 0.0, %v1167
  %1169 = vmatmul.f32.gmra.mxu0 %v913
  %v1170 = vpop.f32.mrf.mxu0
  %v1171 = vadd.f32 0.0, %v1170
  %1172 = vmatmul.f32.gmra.mxu0 %v915
  %v1173 = vpop.f32.mrf.mxu0
  %v1174 = vadd.f32 0.0, %v1173
  %1175 = vmatmul.f32.gmra.mxu0 %v918
  %v1176 = vpop.f32.mrf.mxu0
  %v1177 = vadd.f32 0.0, %v1176
  %1178 = vmatmul.f32.gmra.mxu0 %v920
  %v1179 = vpop.f32.mrf.mxu0
  %v1180 = vadd.f32 0.0, %v1179
  %1181 = vmatmul.f32.gmra.mxu0 %v923
  %v1182 = vpop.f32.mrf.mxu0
  %v1183 = vadd.f32 0.0, %v1182
  %1184 = vmatmul.f32.gmra.mxu0 %v925
  %v1185 = vpop.f32.mrf.mxu0
  %v1186 = vadd.f32 0.0, %v1185
  %1187 = vmatmul.f32.gmra.mxu0 %v928
  %v1188 = vpop.f32.mrf.mxu0
  %v1189 = vadd.f32 0.0, %v1188
  %1190 = vmatmul.f32.gmra.mxu0 %v930
  %v1191 = vpop.f32.mrf.mxu0
  %v1192 = vadd.f32 0.0, %v1191
  %1193 = vmatmul.f32.gmra.mxu0 %v933
  %v1194 = vpop.f32.mrf.mxu0
  %v1195 = vadd.f32 0.0, %v1194
  %1196 = vmatmul.f32.gmra.mxu0 %v935
  %v1197 = vpop.f32.mrf.mxu0
  %v1198 = vadd.f32 0.0, %v1197
  %1199 = vmatmul.f32.gmra.mxu0 %v938
  %v1200 = vpop.f32.mrf.mxu0
  %v1201 = vadd.f32 0.0, %v1200
  %1202 = vmatmul.f32.gmra.mxu0 %v940
  %v1203 = vpop.f32.mrf.mxu0
  %v1204 = vadd.f32 0.0, %v1203
  %1205 = vmatmul.f32.gmra.mxu0 %v943
  %v1206 = vpop.f32.mrf.mxu0
  %v1207 = vadd.f32 0.0, %v1206
  %1208 = vmatmul.f32.gmra.mxu0 %v945
  %v1209 = vpop.f32.mrf.mxu0
  %v1210 = vadd.f32 0.0, %v1209
  %1211 = vmatmul.f32.gmra.mxu0 %v948
  %v1212 = vpop.f32.mrf.mxu0
  %v1213 = vadd.f32 0.0, %v1212
  %1214 = vmatmul.f32.gmra.mxu0 %v950
  %v1215 = vpop.f32.mrf.mxu0
  %v1216 = vadd.f32 0.0, %v1215
  %1217 = vmatmul.f32.gmra.mxu0 %v953
  %v1218 = vpop.f32.mrf.mxu0
  %v1219 = vadd.f32 0.0, %v1218
  %1220 = vmatmul.f32.gmra.mxu0 %v955
  %v1221 = vpop.f32.mrf.mxu0
  %v1222 = vadd.f32 0.0, %v1221
  %1223 = vmatmul.f32.gmra.mxu0 %v958
  %v1224 = vpop.f32.mrf.mxu0
  %v1225 = vadd.f32 0.0, %v1224
  %1226 = vmatmul.f32.gmra.mxu0 %v960
  %v1227 = vpop.f32.mrf.mxu0
  %v1228 = vadd.f32 0.0, %v1227
  %1229 = vmatmul.f32.gmra.mxu0 %v963
  %v1230 = vpop.f32.mrf.mxu0
  %v1231 = vadd.f32 0.0, %v1230
  %1232 = vmatmul.f32.gmra.mxu0 %v965
  %v1233 = vpop.f32.mrf.mxu0
  %v1234 = vadd.f32 0.0, %v1233
  %1235 = vmatmul.f32.gmra.mxu0 %v968
  %v1236 = vpop.f32.mrf.mxu0
  %v1237 = vadd.f32 0.0, %v1236
  %1238 = vmatmul.f32.gmra.mxu0 %v970
  %v1239 = vpop.f32.mrf.mxu0
  %v1240 = vadd.f32 0.0, %v1239
  %1241 = vmatmul.f32.gmra.mxu0 %v973
  %v1242 = vpop.f32.mrf.mxu0
  %v1243 = vadd.f32 0.0, %v1242
  %1244 = vmatmul.f32.gmra.mxu0 %v975
  %v1245 = vpop.f32.mrf.mxu0
  %v1246 = vadd.f32 0.0, %v1245
  %1247 = vmatmul.f32.gmra.mxu0 %v978
  %v1248 = vpop.f32.mrf.mxu0
  %v1249 = vadd.f32 0.0, %v1248
  %1250 = vmatmul.f32.gmra.mxu0 %v980
  %v1251 = vpop.f32.mrf.mxu0
  %v1252 = vadd.f32 0.0, %v1251
  %1253 = vmatmul.f32.gmra.mxu0 %v983
  %v1254 = vpop.f32.mrf.mxu0
  %v1255 = vadd.f32 0.0, %v1254
  %1256 = vmatmul.f32.gmra.mxu0 %v985
  %v1257 = vpop.f32.mrf.mxu0
  %v1258 = vadd.f32 0.0, %v1257
  %1259 = vmatmul.f32.gmra.mxu0 %v988
  %v1260 = vpop.f32.mrf.mxu0
  %v1261 = vadd.f32 0.0, %v1260
  %1262 = vmatmul.f32.gmra.mxu0 %v990
  %v1263 = vpop.f32.mrf.mxu0
  %v1264 = vadd.f32 0.0, %v1263
  %1265 = vmatmul.f32.gmra.mxu0 %v993
  %v1266 = vpop.f32.mrf.mxu0
  %v1267 = vadd.f32 0.0, %v1266
  %1268 = vmatmul.f32.gmra.mxu0 %v995
  %v1269 = vpop.f32.mrf.mxu0
  %v1270 = vadd.f32 0.0, %v1269
  %1271 = vmatmul.f32.gmra.mxu0 %v998
  %v1272 = vpop.f32.mrf.mxu0
  %v1273 = vadd.f32 0.0, %v1272
  %1274 = vmatmul.f32.gmra.mxu0 %v1000
  %v1275 = vpop.f32.mrf.mxu0
  %v1276 = vadd.f32 0.0, %v1275
  %1277 = vmatmul.f32.gmra.mxu0 %v1003
  %v1278 = vpop.f32.mrf.mxu0
  %v1279 = vadd.f32 0.0, %v1278
  %1280 = vmatmul.f32.gmra.mxu0 %v1005
  %v1281 = vpop.f32.mrf.mxu0
  %v1282 = vadd.f32 0.0, %v1281
  %1283 = vmatmul.f32.gmra.mxu0 %v1008
  %v1284 = vpop.f32.mrf.mxu0
  %v1285 = vadd.f32 0.0, %v1284
  %1286 = vmatmul.f32.gmra.mxu0 %v1010
  %v1287 = vpop.f32.mrf.mxu0
  %v1288 = vadd.f32 0.0, %v1287
  %1289 = vmatmul.f32.gmra.mxu0 %v1013
  %v1290 = vpop.f32.mrf.mxu0
  %v1291 = vadd.f32 0.0, %v1290
  %1292 = vmatmul.f32.gmra.mxu0 %v1015
  %v1293 = vpop.f32.mrf.mxu0
  %v1294 = vadd.f32 0.0, %v1293
  %1295 = vmatmul.f32.gmra.mxu0 %v1018
  %v1296 = vpop.f32.mrf.mxu0
  %v1297 = vadd.f32 0.0, %v1296
  %1298 = vmatmul.f32.gmra.mxu0 %v1020
  %v1299 = vpop.f32.mrf.mxu0
  %v1300 = vadd.f32 0.0, %v1299
  %1301 = vmatmul.f32.gmra.mxu0 %v1023
  %v1302 = vpop.f32.mrf.mxu0
  %v1303 = vadd.f32 0.0, %v1302
  %1304 = vmatmul.f32.gmra.mxu0 %v1025
  %v1305 = vpop.f32.mrf.mxu0
  %v1306 = vadd.f32 0.0, %v1305
  %1307 = vmatmul.f32.gmra.mxu0 %v1028
  %v1308 = vpop.f32.mrf.mxu0
  %v1309 = vadd.f32 0.0, %v1308
  %1310 = vmatmul.f32.gmra.mxu0 %v1030
  %v1311 = vpop.f32.mrf.mxu0
  %v1312 = vadd.f32 0.0, %v1311
  %1313 = vmatmul.f32.gmra.mxu0 %v1033
  %v1314 = vpop.f32.mrf.mxu0
  %v1315 = vadd.f32 0.0, %v1314
  %1316 = vmatmul.f32.gmra.mxu0 %v1035
  %v1317 = vpop.f32.mrf.mxu0
  %v1318 = vadd.f32 0.0, %v1317
  %1319 = vmatmul.f32.gmra.mxu0 %v1038
  %v1320 = vpop.f32.mrf.mxu0
  %v1321 = vadd.f32 0.0, %v1320
  %1322 = vmatmul.f32.gmra.mxu0 %v1040
  %v1323 = vpop.f32.mrf.mxu0
  %v1324 = vadd.f32 0.0, %v1323
  %1325 = vmatmul.f32.gmra.mxu0 %v1043
  %v1326 = vpop.f32.mrf.mxu0
  %v1327 = vadd.f32 0.0, %v1326
  %1328 = vmatmul.f32.gmra.mxu0 %v1045
  %v1329 = vpop.f32.mrf.mxu0
  %v1330 = vadd.f32 0.0, %v1329
  %1331 = vmatmul.f32.gmra.mxu0 %v1048
  %v1332 = vpop.f32.mrf.mxu0
  %v1333 = vadd.f32 0.0, %v1332
  %1334 = vmatmul.f32.gmra.mxu0 %v1050
  %v1335 = vpop.f32.mrf.mxu0
  %v1336 = vadd.f32 0.0, %v1335
  %1337 = vmatmul.f32.gmra.mxu0 %v1053
  %v1338 = vpop.f32.mrf.mxu0
  %v1339 = vadd.f32 0.0, %v1338
  %1340 = vmatmul.f32.gmra.mxu0 %v1055
  %v1341 = vpop.f32.mrf.mxu0
  %v1342 = vadd.f32 0.0, %v1341
  %1343 = vmatmul.f32.gmra.mxu0 %v1058
  %v1344 = vpop.f32.mrf.mxu0
  %v1345 = vadd.f32 0.0, %v1344
  %1346 = vmatmul.f32.gmra.mxu0 %v1060
  %v1347 = vpop.f32.mrf.mxu0
  %v1348 = vadd.f32 0.0, %v1347
  %1349 = vmatmul.f32.gmra.mxu0 %v1063
  %v1350 = vpop.f32.mrf.mxu0
  %v1351 = vadd.f32 0.0, %v1350
  %1352 = vmatmul.f32.gmra.mxu0 %v1065
  %v1353 = vpop.f32.mrf.mxu0
  %v1354 = vadd.f32 0.0, %v1353
  %1355 = vdwg.mxu0
  %v1356 = vadd.f32 %v714, %v1165
  %v1357 = vadd.f32 %v717, %v1168
  %v1358 = vadd.f32 %v720, %v1171
  %v1359 = vadd.f32 %v723, %v1174
  %v1360 = vadd.f32 %v726, %v1177
  %v1361 = vadd.f32 %v729, %v1180
  %v1362 = vadd.f32 %v732, %v1183
  %v1363 = vadd.f32 %v735, %v1186
  %v1364 = vadd.f32 %v738, %v1189
  %v1365 = vadd.f32 %v741, %v1192
  %v1366 = vadd.f32 %v744, %v1195
  %v1367 = vadd.f32 %v747, %v1198
  %v1368 = vadd.f32 %v750, %v1201
  %v1369 = vadd.f32 %v753, %v1204
  %v1370 = vadd.f32 %v756, %v1207
  %v1371 = vadd.f32 %v759, %v1210
  %v1372 = vadd.f32 %v762, %v1213
  %v1373 = vadd.f32 %v765, %v1216
  %v1374 = vadd.f32 %v768, %v1219
  %v1375 = vadd.f32 %v771, %v1222
  %v1376 = vadd.f32 %v774, %v1225
  %v1377 = vadd.f32 %v777, %v1228
  %v1378 = vadd.f32 %v780, %v1231
  %v1379 = vadd.f32 %v783, %v1234
  %v1380 = vadd.f32 %v786, %v1237
  %v1381 = vadd.f32 %v789, %v1240
  %v1382 = vadd.f32 %v792, %v1243
  %v1383 = vadd.f32 %v795, %v1246
  %v1384 = vadd.f32 %v798, %v1249
  %v1385 = vadd.f32 %v801, %v1252
  %v1386 = vadd.f32 %v804, %v1255
  %v1387 = vadd.f32 %v807, %v1258
  %v1388 = vadd.f32 %v810, %v1261
  %v1389 = vadd.f32 %v813, %v1264
  %v1390 = vadd.f32 %v816, %v1267
  %v1391 = vadd.f32 %v819, %v1270
  %v1392 = vadd.f32 %v822, %v1273
  %v1393 = vadd.f32 %v825, %v1276
  %v1394 = vadd.f32 %v828, %v1279
  %v1395 = vadd.f32 %v831, %v1282
  %v1396 = vadd.f32 %v834, %v1285
  %v1397 = vadd.f32 %v837, %v1288
  %v1398 = vadd.f32 %v840, %v1291
  %v1399 = vadd.f32 %v843, %v1294
  %v1400 = vadd.f32 %v846, %v1297
  %v1401 = vadd.f32 %v849, %v1300
  %v1402 = vadd.f32 %v852, %v1303
  %v1403 = vadd.f32 %v855, %v1306
  %v1404 = vadd.f32 %v858, %v1309
  %v1405 = vadd.f32 %v861, %v1312
  %v1406 = vadd.f32 %v864, %v1315
  %v1407 = vadd.f32 %v867, %v1318
  %v1408 = vadd.f32 %v870, %v1321
  %v1409 = vadd.f32 %v873, %v1324
  %v1410 = vadd.f32 %v876, %v1327
  %v1411 = vadd.f32 %v879, %v1330
  %v1412 = vadd.f32 %v882, %v1333
  %v1413 = vadd.f32 %v885, %v1336
  %v1414 = vadd.f32 %v888, %v1339
  %v1415 = vadd.f32 %v891, %v1342
  %v1416 = vadd.f32 %v894, %v1345
  %v1417 = vadd.f32 %v897, %v1348
  %v1418 = vadd.f32 %v900, %v1351
  %v1419 = vadd.f32 %v903, %v1354
  %s1420 = scalar_lea.vmem %s1, 384
  %v1421 = vld [vmem:[%s1420] sm:$0xff]
  %v1422 = vld [vmem:[%s1420 + $0x8] sm:$0xff]
  %v1423 = vld [vmem:[%s1420 + $0x10] sm:$0xff]
  %v1424 = vld [vmem:[%s1420 + $0x18] sm:$0xff]
  %v1425 = vld [vmem:[%s1420 + $0x20] sm:$0xff]
  %v1426 = vld [vmem:[%s1420 + $0x28] sm:$0xff]
  %v1427 = vld [vmem:[%s1420 + $0x30] sm:$0xff]
  %v1428 = vld [vmem:[%s1420 + $0x38] sm:$0xff]
  %v1429 = vld [vmem:[%s1420 + $0x40] sm:$0xff]
  %v1430 = vld [vmem:[%s1420 + $0x48] sm:$0xff]
  %v1431 = vld [vmem:[%s1420 + $0x50] sm:$0xff]
  %v1432 = vld [vmem:[%s1420 + $0x58] sm:$0xff]
  %v1433 = vld [vmem:[%s1420 + $0x60] sm:$0xff]
  %v1434 = vld [vmem:[%s1420 + $0x68] sm:$0xff]
  %v1435 = vld [vmem:[%s1420 + $0x70] sm:$0xff]
  %v1436 = vld [vmem:[%s1420 + $0x78] sm:$0xff]
  %1437 = vmatpush.msra.mxu0 %v1436
  %1438 = vmatpush.msra.mxu0 %v1435
  %1439 = vmatpush.msra.mxu0 %v1434
  %1440 = vmatpush.msra.mxu0 %v1433
  %1441 = vmatpush.msra.mxu0 %v1432
  %1442 = vmatpush.msra.mxu0 %v1431
  %1443 = vmatpush.msra.mxu0 %v1430
  %1444 = vmatpush.msra.mxu0 %v1429
  %1445 = vmatpush.msra.mxu0 %v1428
  %1446 = vmatpush.msra.mxu0 %v1427
  %1447 = vmatpush.msra.mxu0 %v1426
  %1448 = vmatpush.msra.mxu0 %v1425
  %1449 = vmatpush.msra.mxu0 %v1424
  %1450 = vmatpush.msra.mxu0 %v1423
  %1451 = vmatpush.msra.mxu0 %v1422
  %1452 = vmatpush.msra.mxu0 %v1421
  %1453 = vmatmul.f32.gmra.mxu0 %v28
  %v1454 = vpop.f32.mrf.mxu0
  %v1455 = vadd.f32 0.0, %v1454
  %1456 = vmatmul.f32.gmra.mxu0 %v29
  %v1457 = vpop.f32.mrf.mxu0
  %v1458 = vadd.f32 0.0, %v1457
  %1459 = vmatmul.f32.gmra.mxu0 %v31
  %v1460 = vpop.f32.mrf.mxu0
  %v1461 = vadd.f32 0.0, %v1460
  %1462 = vmatmul.f32.gmra.mxu0 %v32
  %v1463 = vpop.f32.mrf.mxu0
  %v1464 = vadd.f32 0.0, %v1463
  %1465 = vmatmul.f32.gmra.mxu0 %v34
  %v1466 = vpop.f32.mrf.mxu0
  %v1467 = vadd.f32 0.0, %v1466
  %1468 = vmatmul.f32.gmra.mxu0 %v35
  %v1469 = vpop.f32.mrf.mxu0
  %v1470 = vadd.f32 0.0, %v1469
  %1471 = vmatmul.f32.gmra.mxu0 %v37
  %v1472 = vpop.f32.mrf.mxu0
  %v1473 = vadd.f32 0.0, %v1472
  %1474 = vmatmul.f32.gmra.mxu0 %v38
  %v1475 = vpop.f32.mrf.mxu0
  %v1476 = vadd.f32 0.0, %v1475
  %1477 = vmatmul.f32.gmra.mxu0 %v40
  %v1478 = vpop.f32.mrf.mxu0
  %v1479 = vadd.f32 0.0, %v1478
  %1480 = vmatmul.f32.gmra.mxu0 %v41
  %v1481 = vpop.f32.mrf.mxu0
  %v1482 = vadd.f32 0.0, %v1481
  %1483 = vmatmul.f32.gmra.mxu0 %v43
  %v1484 = vpop.f32.mrf.mxu0
  %v1485 = vadd.f32 0.0, %v1484
  %1486 = vmatmul.f32.gmra.mxu0 %v44
  %v1487 = vpop.f32.mrf.mxu0
  %v1488 = vadd.f32 0.0, %v1487
  %1489 = vmatmul.f32.gmra.mxu0 %v46
  %v1490 = vpop.f32.mrf.mxu0
  %v1491 = vadd.f32 0.0, %v1490
  %1492 = vmatmul.f32.gmra.mxu0 %v47
  %v1493 = vpop.f32.mrf.mxu0
  %v1494 = vadd.f32 0.0, %v1493
  %1495 = vmatmul.f32.gmra.mxu0 %v49
  %v1496 = vpop.f32.mrf.mxu0
  %v1497 = vadd.f32 0.0, %v1496
  %1498 = vmatmul.f32.gmra.mxu0 %v50
  %v1499 = vpop.f32.mrf.mxu0
  %v1500 = vadd.f32 0.0, %v1499
  %1501 = vmatmul.f32.gmra.mxu0 %v52
  %v1502 = vpop.f32.mrf.mxu0
  %v1503 = vadd.f32 0.0, %v1502
  %1504 = vmatmul.f32.gmra.mxu0 %v53
  %v1505 = vpop.f32.mrf.mxu0
  %v1506 = vadd.f32 0.0, %v1505
  %1507 = vmatmul.f32.gmra.mxu0 %v55
  %v1508 = vpop.f32.mrf.mxu0
  %v1509 = vadd.f32 0.0, %v1508
  %1510 = vmatmul.f32.gmra.mxu0 %v56
  %v1511 = vpop.f32.mrf.mxu0
  %v1512 = vadd.f32 0.0, %v1511
  %1513 = vmatmul.f32.gmra.mxu0 %v58
  %v1514 = vpop.f32.mrf.mxu0
  %v1515 = vadd.f32 0.0, %v1514
  %1516 = vmatmul.f32.gmra.mxu0 %v59
  %v1517 = vpop.f32.mrf.mxu0
  %v1518 = vadd.f32 0.0, %v1517
  %1519 = vmatmul.f32.gmra.mxu0 %v61
  %v1520 = vpop.f32.mrf.mxu0
  %v1521 = vadd.f32 0.0, %v1520
  %1522 = vmatmul.f32.gmra.mxu0 %v62
  %v1523 = vpop.f32.mrf.mxu0
  %v1524 = vadd.f32 0.0, %v1523
  %1525 = vmatmul.f32.gmra.mxu0 %v64
  %v1526 = vpop.f32.mrf.mxu0
  %v1527 = vadd.f32 0.0, %v1526
  %1528 = vmatmul.f32.gmra.mxu0 %v65
  %v1529 = vpop.f32.mrf.mxu0
  %v1530 = vadd.f32 0.0, %v1529
  %1531 = vmatmul.f32.gmra.mxu0 %v67
  %v1532 = vpop.f32.mrf.mxu0
  %v1533 = vadd.f32 0.0, %v1532
  %1534 = vmatmul.f32.gmra.mxu0 %v68
  %v1535 = vpop.f32.mrf.mxu0
  %v1536 = vadd.f32 0.0, %v1535
  %1537 = vmatmul.f32.gmra.mxu0 %v70
  %v1538 = vpop.f32.mrf.mxu0
  %v1539 = vadd.f32 0.0, %v1538
  %1540 = vmatmul.f32.gmra.mxu0 %v71
  %v1541 = vpop.f32.mrf.mxu0
  %v1542 = vadd.f32 0.0, %v1541
  %1543 = vmatmul.f32.gmra.mxu0 %v73
  %v1544 = vpop.f32.mrf.mxu0
  %v1545 = vadd.f32 0.0, %v1544
  %1546 = vmatmul.f32.gmra.mxu0 %v74
  %v1547 = vpop.f32.mrf.mxu0
  %v1548 = vadd.f32 0.0, %v1547
  %1549 = vmatmul.f32.gmra.mxu0 %v82
  %v1550 = vpop.f32.mrf.mxu0
  %v1551 = vadd.f32 0.0, %v1550
  %1552 = vmatmul.f32.gmra.mxu0 %v83
  %v1553 = vpop.f32.mrf.mxu0
  %v1554 = vadd.f32 0.0, %v1553
  %1555 = vmatmul.f32.gmra.mxu0 %v85
  %v1556 = vpop.f32.mrf.mxu0
  %v1557 = vadd.f32 0.0, %v1556
  %1558 = vmatmul.f32.gmra.mxu0 %v86
  %v1559 = vpop.f32.mrf.mxu0
  %v1560 = vadd.f32 0.0, %v1559
  %1561 = vmatmul.f32.gmra.mxu0 %v88
  %v1562 = vpop.f32.mrf.mxu0
  %v1563 = vadd.f32 0.0, %v1562
  %1564 = vmatmul.f32.gmra.mxu0 %v89
  %v1565 = vpop.f32.mrf.mxu0
  %v1566 = vadd.f32 0.0, %v1565
  %1567 = vmatmul.f32.gmra.mxu0 %v91
  %v1568 = vpop.f32.mrf.mxu0
  %v1569 = vadd.f32 0.0, %v1568
  %1570 = vmatmul.f32.gmra.mxu0 %v92
  %v1571 = vpop.f32.mrf.mxu0
  %v1572 = vadd.f32 0.0, %v1571
  %1573 = vmatmul.f32.gmra.mxu0 %v94
  %v1574 = vpop.f32.mrf.mxu0
  %v1575 = vadd.f32 0.0, %v1574
  %1576 = vmatmul.f32.gmra.mxu0 %v95
  %v1577 = vpop.f32.mrf.mxu0
  %v1578 = vadd.f32 0.0, %v1577
  %1579 = vmatmul.f32.gmra.mxu0 %v97
  %v1580 = vpop.f32.mrf.mxu0
  %v1581 = vadd.f32 0.0, %v1580
  %1582 = vmatmul.f32.gmra.mxu0 %v98
  %v1583 = vpop.f32.mrf.mxu0
  %v1584 = vadd.f32 0.0, %v1583
  %1585 = vmatmul.f32.gmra.mxu0 %v100
  %v1586 = vpop.f32.mrf.mxu0
  %v1587 = vadd.f32 0.0, %v1586
  %1588 = vmatmul.f32.gmra.mxu0 %v101
  %v1589 = vpop.f32.mrf.mxu0
  %v1590 = vadd.f32 0.0, %v1589
  %1591 = vmatmul.f32.gmra.mxu0 %v103
  %v1592 = vpop.f32.mrf.mxu0
  %v1593 = vadd.f32 0.0, %v1592
  %1594 = vmatmul.f32.gmra.mxu0 %v104
  %v1595 = vpop.f32.mrf.mxu0
  %v1596 = vadd.f32 0.0, %v1595
  %1597 = vmatmul.f32.gmra.mxu0 %v106
  %v1598 = vpop.f32.mrf.mxu0
  %v1599 = vadd.f32 0.0, %v1598
  %1600 = vmatmul.f32.gmra.mxu0 %v107
  %v1601 = vpop.f32.mrf.mxu0
  %v1602 = vadd.f32 0.0, %v1601
  %1603 = vmatmul.f32.gmra.mxu0 %v109
  %v1604 = vpop.f32.mrf.mxu0
  %v1605 = vadd.f32 0.0, %v1604
  %1606 = vmatmul.f32.gmra.mxu0 %v110
  %v1607 = vpop.f32.mrf.mxu0
  %v1608 = vadd.f32 0.0, %v1607
  %1609 = vmatmul.f32.gmra.mxu0 %v112
  %v1610 = vpop.f32.mrf.mxu0
  %v1611 = vadd.f32 0.0, %v1610
  %1612 = vmatmul.f32.gmra.mxu0 %v113
  %v1613 = vpop.f32.mrf.mxu0
  %v1614 = vadd.f32 0.0, %v1613
  %1615 = vmatmul.f32.gmra.mxu0 %v115
  %v1616 = vpop.f32.mrf.mxu0
  %v1617 = vadd.f32 0.0, %v1616
  %1618 = vmatmul.f32.gmra.mxu0 %v116
  %v1619 = vpop.f32.mrf.mxu0
  %v1620 = vadd.f32 0.0, %v1619
  %1621 = vmatmul.f32.gmra.mxu0 %v118
  %v1622 = vpop.f32.mrf.mxu0
  %v1623 = vadd.f32 0.0, %v1622
  %1624 = vmatmul.f32.gmra.mxu0 %v119
  %v1625 = vpop.f32.mrf.mxu0
  %v1626 = vadd.f32 0.0, %v1625
  %1627 = vmatmul.f32.gmra.mxu0 %v121
  %v1628 = vpop.f32.mrf.mxu0
  %v1629 = vadd.f32 0.0, %v1628
  %1630 = vmatmul.f32.gmra.mxu0 %v122
  %v1631 = vpop.f32.mrf.mxu0
  %v1632 = vadd.f32 0.0, %v1631
  %1633 = vmatmul.f32.gmra.mxu0 %v124
  %v1634 = vpop.f32.mrf.mxu0
  %v1635 = vadd.f32 0.0, %v1634
  %1636 = vmatmul.f32.gmra.mxu0 %v125
  %v1637 = vpop.f32.mrf.mxu0
  %v1638 = vadd.f32 0.0, %v1637
  %1639 = vmatmul.f32.gmra.mxu0 %v127
  %v1640 = vpop.f32.mrf.mxu0
  %v1641 = vadd.f32 0.0, %v1640
  %1642 = vmatmul.f32.gmra.mxu0 %v128
  %v1643 = vpop.f32.mrf.mxu0
  %v1644 = vadd.f32 0.0, %v1643
  %1645 = vdwg.mxu0
  %v1646 = vadd.f32 %v1356, %v1455
  %v1647 = vadd.f32 %v1357, %v1458
  %v1648 = vadd.f32 %v1358, %v1461
  %v1649 = vadd.f32 %v1359, %v1464
  %v1650 = vadd.f32 %v1360, %v1467
  %v1651 = vadd.f32 %v1361, %v1470
  %v1652 = vadd.f32 %v1362, %v1473
  %v1653 = vadd.f32 %v1363, %v1476
  %v1654 = vadd.f32 %v1364, %v1479
  %v1655 = vadd.f32 %v1365, %v1482
  %v1656 = vadd.f32 %v1366, %v1485
  %v1657 = vadd.f32 %v1367, %v1488
  %v1658 = vadd.f32 %v1368, %v1491
  %v1659 = vadd.f32 %v1369, %v1494
  %v1660 = vadd.f32 %v1370, %v1497
  %v1661 = vadd.f32 %v1371, %v1500
  %v1662 = vadd.f32 %v1372, %v1503
  %v1663 = vadd.f32 %v1373, %v1506
  %v1664 = vadd.f32 %v1374, %v1509
  %v1665 = vadd.f32 %v1375, %v1512
  %v1666 = vadd.f32 %v1376, %v1515
  %v1667 = vadd.f32 %v1377, %v1518
  %v1668 = vadd.f32 %v1378, %v1521
  %v1669 = vadd.f32 %v1379, %v1524
  %v1670 = vadd.f32 %v1380, %v1527
  %v1671 = vadd.f32 %v1381, %v1530
  %v1672 = vadd.f32 %v1382, %v1533
  %v1673 = vadd.f32 %v1383, %v1536
  %v1674 = vadd.f32 %v1384, %v1539
  %v1675 = vadd.f32 %v1385, %v1542
  %v1676 = vadd.f32 %v1386, %v1545
  %v1677 = vadd.f32 %v1387, %v1548
  %v1678 = vadd.f32 %v1388, %v1551
  %v1679 = vadd.f32 %v1389, %v1554
  %v1680 = vadd.f32 %v1390, %v1557
  %v1681 = vadd.f32 %v1391, %v1560
  %v1682 = vadd.f32 %v1392, %v1563
  %v1683 = vadd.f32 %v1393, %v1566
  %v1684 = vadd.f32 %v1394, %v1569
  %v1685 = vadd.f32 %v1395, %v1572
  %v1686 = vadd.f32 %v1396, %v1575
  %v1687 = vadd.f32 %v1397, %v1578
  %v1688 = vadd.f32 %v1398, %v1581
  %v1689 = vadd.f32 %v1399, %v1584
  %v1690 = vadd.f32 %v1400, %v1587
  %v1691 = vadd.f32 %v1401, %v1590
  %v1692 = vadd.f32 %v1402, %v1593
  %v1693 = vadd.f32 %v1403, %v1596
  %v1694 = vadd.f32 %v1404, %v1599
  %v1695 = vadd.f32 %v1405, %v1602
  %v1696 = vadd.f32 %v1406, %v1605
  %v1697 = vadd.f32 %v1407, %v1608
  %v1698 = vadd.f32 %v1408, %v1611
  %v1699 = vadd.f32 %v1409, %v1614
  %v1700 = vadd.f32 %v1410, %v1617
  %v1701 = vadd.f32 %v1411, %v1620
  %v1702 = vadd.f32 %v1412, %v1623
  %v1703 = vadd.f32 %v1413, %v1626
  %v1704 = vadd.f32 %v1414, %v1629
  %v1705 = vadd.f32 %v1415, %v1632
  %v1706 = vadd.f32 %v1416, %v1635
  %v1707 = vadd.f32 %v1417, %v1638
  %v1708 = vadd.f32 %v1418, %v1641
  %v1709 = vadd.f32 %v1419, %v1644
  %v1716 = vrot.slane %v73, 1
  %v1717 = vrot.slane %v74, 1
  %v1718 = vsel %vm245, %v1716, %v1717
  %v1719 = vrot.slane %v75, 1
  %v1720 = vsel %vm245, %v1717, %v1719
  %v1721 = vrot.slane %v127, 1
  %v1722 = vrot.slane %v128, 1
  %v1723 = vsel %vm245, %v1721, %v1722
  %v1724 = vrot.slane %v129, 1
  %v1725 = vsel %vm245, %v1722, %v1724
  %s1730 = scalar_lea.vmem %s1, 512
  %v1731 = vld [vmem:[%s1730] sm:$0xff]
  %v1732 = vld [vmem:[%s1730 + $0x8] sm:$0xff]
  %v1733 = vld [vmem:[%s1730 + $0x10] sm:$0xff]
  %v1734 = vld [vmem:[%s1730 + $0x18] sm:$0xff]
  %v1735 = vld [vmem:[%s1730 + $0x20] sm:$0xff]
  %v1736 = vld [vmem:[%s1730 + $0x28] sm:$0xff]
  %v1737 = vld [vmem:[%s1730 + $0x30] sm:$0xff]
  %v1738 = vld [vmem:[%s1730 + $0x38] sm:$0xff]
  %v1739 = vld [vmem:[%s1730 + $0x40] sm:$0xff]
  %v1740 = vld [vmem:[%s1730 + $0x48] sm:$0xff]
  %v1741 = vld [vmem:[%s1730 + $0x50] sm:$0xff]
  %v1742 = vld [vmem:[%s1730 + $0x58] sm:$0xff]
  %v1743 = vld [vmem:[%s1730 + $0x60] sm:$0xff]
  %v1744 = vld [vmem:[%s1730 + $0x68] sm:$0xff]
  %v1745 = vld [vmem:[%s1730 + $0x70] sm:$0xff]
  %v1746 = vld [vmem:[%s1730 + $0x78] sm:$0xff]
  %1747 = vmatpush.msra.mxu0 %v1746
  %1748 = vmatpush.msra.mxu0 %v1745
  %1749 = vmatpush.msra.mxu0 %v1744
  %1750 = vmatpush.msra.mxu0 %v1743
  %1751 = vmatpush.msra.mxu0 %v1742
  %1752 = vmatpush.msra.mxu0 %v1741
  %1753 = vmatpush.msra.mxu0 %v1740
  %1754 = vmatpush.msra.mxu0 %v1739
  %1755 = vmatpush.msra.mxu0 %v1738
  %1756 = vmatpush.msra.mxu0 %v1737
  %1757 = vmatpush.msra.mxu0 %v1736
  %1758 = vmatpush.msra.mxu0 %v1735
  %1759 = vmatpush.msra.mxu0 %v1734
  %1760 = vmatpush.msra.mxu0 %v1733
  %1761 = vmatpush.msra.mxu0 %v1732
  %1762 = vmatpush.msra.mxu0 %v1731
  %1763 = vmatmul.f32.gmra.mxu0 %v253
  %v1764 = vpop.f32.mrf.mxu0
  %v1765 = vadd.f32 0.0, %v1764
  %1766 = vmatmul.f32.gmra.mxu0 %v255
  %v1767 = vpop.f32.mrf.mxu0
  %v1768 = vadd.f32 0.0, %v1767
  %1769 = vmatmul.f32.gmra.mxu0 %v258
  %v1770 = vpop.f32.mrf.mxu0
  %v1771 = vadd.f32 0.0, %v1770
  %1772 = vmatmul.f32.gmra.mxu0 %v260
  %v1773 = vpop.f32.mrf.mxu0
  %v1774 = vadd.f32 0.0, %v1773
  %1775 = vmatmul.f32.gmra.mxu0 %v263
  %v1776 = vpop.f32.mrf.mxu0
  %v1777 = vadd.f32 0.0, %v1776
  %1778 = vmatmul.f32.gmra.mxu0 %v265
  %v1779 = vpop.f32.mrf.mxu0
  %v1780 = vadd.f32 0.0, %v1779
  %1781 = vmatmul.f32.gmra.mxu0 %v268
  %v1782 = vpop.f32.mrf.mxu0
  %v1783 = vadd.f32 0.0, %v1782
  %1784 = vmatmul.f32.gmra.mxu0 %v270
  %v1785 = vpop.f32.mrf.mxu0
  %v1786 = vadd.f32 0.0, %v1785
  %1787 = vmatmul.f32.gmra.mxu0 %v273
  %v1788 = vpop.f32.mrf.mxu0
  %v1789 = vadd.f32 0.0, %v1788
  %1790 = vmatmul.f32.gmra.mxu0 %v275
  %v1791 = vpop.f32.mrf.mxu0
  %v1792 = vadd.f32 0.0, %v1791
  %1793 = vmatmul.f32.gmra.mxu0 %v278
  %v1794 = vpop.f32.mrf.mxu0
  %v1795 = vadd.f32 0.0, %v1794
  %1796 = vmatmul.f32.gmra.mxu0 %v280
  %v1797 = vpop.f32.mrf.mxu0
  %v1798 = vadd.f32 0.0, %v1797
  %1799 = vmatmul.f32.gmra.mxu0 %v283
  %v1800 = vpop.f32.mrf.mxu0
  %v1801 = vadd.f32 0.0, %v1800
  %1802 = vmatmul.f32.gmra.mxu0 %v285
  %v1803 = vpop.f32.mrf.mxu0
  %v1804 = vadd.f32 0.0, %v1803
  %1805 = vmatmul.f32.gmra.mxu0 %v288
  %v1806 = vpop.f32.mrf.mxu0
  %v1807 = vadd.f32 0.0, %v1806
  %1808 = vmatmul.f32.gmra.mxu0 %v290
  %v1809 = vpop.f32.mrf.mxu0
  %v1810 = vadd.f32 0.0, %v1809
  %1811 = vmatmul.f32.gmra.mxu0 %v293
  %v1812 = vpop.f32.mrf.mxu0
  %v1813 = vadd.f32 0.0, %v1812
  %1814 = vmatmul.f32.gmra.mxu0 %v295
  %v1815 = vpop.f32.mrf.mxu0
  %v1816 = vadd.f32 0.0, %v1815
  %1817 = vmatmul.f32.gmra.mxu0 %v298
  %v1818 = vpop.f32.mrf.mxu0
  %v1819 = vadd.f32 0.0, %v1818
  %1820 = vmatmul.f32.gmra.mxu0 %v300
  %v1821 = vpop.f32.mrf.mxu0
  %v1822 = vadd.f32 0.0, %v1821
  %1823 = vmatmul.f32.gmra.mxu0 %v303
  %v1824 = vpop.f32.mrf.mxu0
  %v1825 = vadd.f32 0.0, %v1824
  %1826 = vmatmul.f32.gmra.mxu0 %v305
  %v1827 = vpop.f32.mrf.mxu0
  %v1828 = vadd.f32 0.0, %v1827
  %1829 = vmatmul.f32.gmra.mxu0 %v308
  %v1830 = vpop.f32.mrf.mxu0
  %v1831 = vadd.f32 0.0, %v1830
  %1832 = vmatmul.f32.gmra.mxu0 %v310
  %v1833 = vpop.f32.mrf.mxu0
  %v1834 = vadd.f32 0.0, %v1833
  %1835 = vmatmul.f32.gmra.mxu0 %v313
  %v1836 = vpop.f32.mrf.mxu0
  %v1837 = vadd.f32 0.0, %v1836
  %1838 = vmatmul.f32.gmra.mxu0 %v315
  %v1839 = vpop.f32.mrf.mxu0
  %v1840 = vadd.f32 0.0, %v1839
  %1841 = vmatmul.f32.gmra.mxu0 %v318
  %v1842 = vpop.f32.mrf.mxu0
  %v1843 = vadd.f32 0.0, %v1842
  %1844 = vmatmul.f32.gmra.mxu0 %v320
  %v1845 = vpop.f32.mrf.mxu0
  %v1846 = vadd.f32 0.0, %v1845
  %1847 = vmatmul.f32.gmra.mxu0 %v323
  %v1848 = vpop.f32.mrf.mxu0
  %v1849 = vadd.f32 0.0, %v1848
  %1850 = vmatmul.f32.gmra.mxu0 %v325
  %v1851 = vpop.f32.mrf.mxu0
  %v1852 = vadd.f32 0.0, %v1851
  %1853 = vmatmul.f32.gmra.mxu0 %v1718
  %v1854 = vpop.f32.mrf.mxu0
  %v1855 = vadd.f32 0.0, %v1854
  %1856 = vmatmul.f32.gmra.mxu0 %v1720
  %v1857 = vpop.f32.mrf.mxu0
  %v1858 = vadd.f32 0.0, %v1857
  %1859 = vmatmul.f32.gmra.mxu0 %v333
  %v1860 = vpop.f32.mrf.mxu0
  %v1861 = vadd.f32 0.0, %v1860
  %1862 = vmatmul.f32.gmra.mxu0 %v335
  %v1863 = vpop.f32.mrf.mxu0
  %v1864 = vadd.f32 0.0, %v1863
  %1865 = vmatmul.f32.gmra.mxu0 %v338
  %v1866 = vpop.f32.mrf.mxu0
  %v1867 = vadd.f32 0.0, %v1866
  %1868 = vmatmul.f32.gmra.mxu0 %v340
  %v1869 = vpop.f32.mrf.mxu0
  %v1870 = vadd.f32 0.0, %v1869
  %1871 = vmatmul.f32.gmra.mxu0 %v343
  %v1872 = vpop.f32.mrf.mxu0
  %v1873 = vadd.f32 0.0, %v1872
  %1874 = vmatmul.f32.gmra.mxu0 %v345
  %v1875 = vpop.f32.mrf.mxu0
  %v1876 = vadd.f32 0.0, %v1875
  %1877 = vmatmul.f32.gmra.mxu0 %v348
  %v1878 = vpop.f32.mrf.mxu0
  %v1879 = vadd.f32 0.0, %v1878
  %1880 = vmatmul.f32.gmra.mxu0 %v350
  %v1881 = vpop.f32.mrf.mxu0
  %v1882 = vadd.f32 0.0, %v1881
  %1883 = vmatmul.f32.gmra.mxu0 %v353
  %v1884 = vpop.f32.mrf.mxu0
  %v1885 = vadd.f32 0.0, %v1884
  %1886 = vmatmul.f32.gmra.mxu0 %v355
  %v1887 = vpop.f32.mrf.mxu0
  %v1888 = vadd.f32 0.0, %v1887
  %1889 = vmatmul.f32.gmra.mxu0 %v358
  %v1890 = vpop.f32.mrf.mxu0
  %v1891 = vadd.f32 0.0, %v1890
  %1892 = vmatmul.f32.gmra.mxu0 %v360
  %v1893 = vpop.f32.mrf.mxu0
  %v1894 = vadd.f32 0.0, %v1893
  %1895 = vmatmul.f32.gmra.mxu0 %v363
  %v1896 = vpop.f32.mrf.mxu0
  %v1897 = vadd.f32 0.0, %v1896
  %1898 = vmatmul.f32.gmra.mxu0 %v365
  %v1899 = vpop.f32.mrf.mxu0
  %v1900 = vadd.f32 0.0, %v1899
  %1901 = vmatmul.f32.gmra.mxu0 %v368
  %v1902 = vpop.f32.mrf.mxu0
  %v1903 = vadd.f32 0.0, %v1902
  %1904 = vmatmul.f32.gmra.mxu0 %v370
  %v1905 = vpop.f32.mrf.mxu0
  %v1906 = vadd.f32 0.0, %v1905
  %1907 = vmatmul.f32.gmra.mxu0 %v373
  %v1908 = vpop.f32.mrf.mxu0
  %v1909 = vadd.f32 0.0, %v1908
  %1910 = vmatmul.f32.gmra.mxu0 %v375
  %v1911 = vpop.f32.mrf.mxu0
  %v1912 = vadd.f32 0.0, %v1911
  %1913 = vmatmul.f32.gmra.mxu0 %v378
  %v1914 = vpop.f32.mrf.mxu0
  %v1915 = vadd.f32 0.0, %v1914
  %1916 = vmatmul.f32.gmra.mxu0 %v380
  %v1917 = vpop.f32.mrf.mxu0
  %v1918 = vadd.f32 0.0, %v1917
  %1919 = vmatmul.f32.gmra.mxu0 %v383
  %v1920 = vpop.f32.mrf.mxu0
  %v1921 = vadd.f32 0.0, %v1920
  %1922 = vmatmul.f32.gmra.mxu0 %v385
  %v1923 = vpop.f32.mrf.mxu0
  %v1924 = vadd.f32 0.0, %v1923
  %1925 = vmatmul.f32.gmra.mxu0 %v388
  %v1926 = vpop.f32.mrf.mxu0
  %v1927 = vadd.f32 0.0, %v1926
  %1928 = vmatmul.f32.gmra.mxu0 %v390
  %v1929 = vpop.f32.mrf.mxu0
  %v1930 = vadd.f32 0.0, %v1929
  %1931 = vmatmul.f32.gmra.mxu0 %v393
  %v1932 = vpop.f32.mrf.mxu0
  %v1933 = vadd.f32 0.0, %v1932
  %1934 = vmatmul.f32.gmra.mxu0 %v395
  %v1935 = vpop.f32.mrf.mxu0
  %v1936 = vadd.f32 0.0, %v1935
  %1937 = vmatmul.f32.gmra.mxu0 %v398
  %v1938 = vpop.f32.mrf.mxu0
  %v1939 = vadd.f32 0.0, %v1938
  %1940 = vmatmul.f32.gmra.mxu0 %v400
  %v1941 = vpop.f32.mrf.mxu0
  %v1942 = vadd.f32 0.0, %v1941
  %1943 = vmatmul.f32.gmra.mxu0 %v403
  %v1944 = vpop.f32.mrf.mxu0
  %v1945 = vadd.f32 0.0, %v1944
  %1946 = vmatmul.f32.gmra.mxu0 %v405
  %v1947 = vpop.f32.mrf.mxu0
  %v1948 = vadd.f32 0.0, %v1947
  %1949 = vmatmul.f32.gmra.mxu0 %v1723
  %v1950 = vpop.f32.mrf.mxu0
  %v1951 = vadd.f32 0.0, %v1950
  %1952 = vmatmul.f32.gmra.mxu0 %v1725
  %v1953 = vpop.f32.mrf.mxu0
  %v1954 = vadd.f32 0.0, %v1953
  %1955 = vdwg.mxu0
  %v1956 = vadd.f32 %v1646, %v1765
  %v1957 = vadd.f32 %v1647, %v1768
  %v1958 = vadd.f32 %v1648, %v1771
  %v1959 = vadd.f32 %v1649, %v1774
  %v1960 = vadd.f32 %v1650, %v1777
  %v1961 = vadd.f32 %v1651, %v1780
  %v1962 = vadd.f32 %v1652, %v1783
  %v1963 = vadd.f32 %v1653, %v1786
  %v1964 = vadd.f32 %v1654, %v1789
  %v1965 = vadd.f32 %v1655, %v1792
  %v1966 = vadd.f32 %v1656, %v1795
  %v1967 = vadd.f32 %v1657, %v1798
  %v1968 = vadd.f32 %v1658, %v1801
  %v1969 = vadd.f32 %v1659, %v1804
  %v1970 = vadd.f32 %v1660, %v1807
  %v1971 = vadd.f32 %v1661, %v1810
  %v1972 = vadd.f32 %v1662, %v1813
  %v1973 = vadd.f32 %v1663, %v1816
  %v1974 = vadd.f32 %v1664, %v1819
  %v1975 = vadd.f32 %v1665, %v1822
  %v1976 = vadd.f32 %v1666, %v1825
  %v1977 = vadd.f32 %v1667, %v1828
  %v1978 = vadd.f32 %v1668, %v1831
  %v1979 = vadd.f32 %v1669, %v1834
  %v1980 = vadd.f32 %v1670, %v1837
  %v1981 = vadd.f32 %v1671, %v1840
  %v1982 = vadd.f32 %v1672, %v1843
  %v1983 = vadd.f32 %v1673, %v1846
  %v1984 = vadd.f32 %v1674, %v1849
  %v1985 = vadd.f32 %v1675, %v1852
  %v1986 = vadd.f32 %v1676, %v1855
  %v1987 = vadd.f32 %v1677, %v1858
  %v1988 = vadd.f32 %v1678, %v1861
  %v1989 = vadd.f32 %v1679, %v1864
  %v1990 = vadd.f32 %v1680, %v1867
  %v1991 = vadd.f32 %v1681, %v1870
  %v1992 = vadd.f32 %v1682, %v1873
  %v1993 = vadd.f32 %v1683, %v1876
  %v1994 = vadd.f32 %v1684, %v1879
  %v1995 = vadd.f32 %v1685, %v1882
  %v1996 = vadd.f32 %v1686, %v1885
  %v1997 = vadd.f32 %v1687, %v1888
  %v1998 = vadd.f32 %v1688, %v1891
  %v1999 = vadd.f32 %v1689, %v1894
  %v2000 = vadd.f32 %v1690, %v1897
  %v2001 = vadd.f32 %v1691, %v1900
  %v2002 = vadd.f32 %v1692, %v1903
  %v2003 = vadd.f32 %v1693, %v1906
  %v2004 = vadd.f32 %v1694, %v1909
  %v2005 = vadd.f32 %v1695, %v1912
  %v2006 = vadd.f32 %v1696, %v1915
  %v2007 = vadd.f32 %v1697, %v1918
  %v2008 = vadd.f32 %v1698, %v1921
  %v2009 = vadd.f32 %v1699, %v1924
  %v2010 = vadd.f32 %v1700, %v1927
  %v2011 = vadd.f32 %v1701, %v1930
  %v2012 = vadd.f32 %v1702, %v1933
  %v2013 = vadd.f32 %v1703, %v1936
  %v2014 = vadd.f32 %v1704, %v1939
  %v2015 = vadd.f32 %v1705, %v1942
  %v2016 = vadd.f32 %v1706, %v1945
  %v2017 = vadd.f32 %v1707, %v1948
  %v2018 = vadd.f32 %v1708, %v1951
  %v2019 = vadd.f32 %v1709, %v1954
  %v2020 = vrot.slane %v73, 2
  %v2021 = vrot.slane %v74, 2
  %v2022 = vsel %vm905, %v2020, %v2021
  %v2023 = vrot.slane %v75, 2
  %v2024 = vsel %vm905, %v2021, %v2023
  %v2025 = vrot.slane %v127, 2
  %v2026 = vrot.slane %v128, 2
  %v2027 = vsel %vm905, %v2025, %v2026
  %v2028 = vrot.slane %v129, 2
  %v2029 = vsel %vm905, %v2026, %v2028
  %s2034 = scalar_lea.vmem %s1, 640
  %v2035 = vld [vmem:[%s2034] sm:$0xff]
  %v2036 = vld [vmem:[%s2034 + $0x8] sm:$0xff]
  %v2037 = vld [vmem:[%s2034 + $0x10] sm:$0xff]
  %v2038 = vld [vmem:[%s2034 + $0x18] sm:$0xff]
  %v2039 = vld [vmem:[%s2034 + $0x20] sm:$0xff]
  %v2040 = vld [vmem:[%s2034 + $0x28] sm:$0xff]
  %v2041 = vld [vmem:[%s2034 + $0x30] sm:$0xff]
  %v2042 = vld [vmem:[%s2034 + $0x38] sm:$0xff]
  %v2043 = vld [vmem:[%s2034 + $0x40] sm:$0xff]
  %v2044 = vld [vmem:[%s2034 + $0x48] sm:$0xff]
  %v2045 = vld [vmem:[%s2034 + $0x50] sm:$0xff]
  %v2046 = vld [vmem:[%s2034 + $0x58] sm:$0xff]
  %v2047 = vld [vmem:[%s2034 + $0x60] sm:$0xff]
  %v2048 = vld [vmem:[%s2034 + $0x68] sm:$0xff]
  %v2049 = vld [vmem:[%s2034 + $0x70] sm:$0xff]
  %v2050 = vld [vmem:[%s2034 + $0x78] sm:$0xff]
  %2051 = vmatpush.msra.mxu0 %v2050
  %2052 = vmatpush.msra.mxu0 %v2049
  %2053 = vmatpush.msra.mxu0 %v2048
  %2054 = vmatpush.msra.mxu0 %v2047
  %2055 = vmatpush.msra.mxu0 %v2046
  %2056 = vmatpush.msra.mxu0 %v2045
  %2057 = vmatpush.msra.mxu0 %v2044
  %2058 = vmatpush.msra.mxu0 %v2043
  %2059 = vmatpush.msra.mxu0 %v2042
  %2060 = vmatpush.msra.mxu0 %v2041
  %2061 = vmatpush.msra.mxu0 %v2040
  %2062 = vmatpush.msra.mxu0 %v2039
  %2063 = vmatpush.msra.mxu0 %v2038
  %2064 = vmatpush.msra.mxu0 %v2037
  %2065 = vmatpush.msra.mxu0 %v2036
  %2066 = vmatpush.msra.mxu0 %v2035
  %2067 = vmatmul.f32.gmra.mxu0 %v913
  %v2068 = vpop.f32.mrf.mxu0
  %v2069 = vadd.f32 0.0, %v2068
  %2070 = vmatmul.f32.gmra.mxu0 %v915
  %v2071 = vpop.f32.mrf.mxu0
  %v2072 = vadd.f32 0.0, %v2071
  %2073 = vmatmul.f32.gmra.mxu0 %v918
  %v2074 = vpop.f32.mrf.mxu0
  %v2075 = vadd.f32 0.0, %v2074
  %2076 = vmatmul.f32.gmra.mxu0 %v920
  %v2077 = vpop.f32.mrf.mxu0
  %v2078 = vadd.f32 0.0, %v2077
  %2079 = vmatmul.f32.gmra.mxu0 %v923
  %v2080 = vpop.f32.mrf.mxu0
  %v2081 = vadd.f32 0.0, %v2080
  %2082 = vmatmul.f32.gmra.mxu0 %v925
  %v2083 = vpop.f32.mrf.mxu0
  %v2084 = vadd.f32 0.0, %v2083
  %2085 = vmatmul.f32.gmra.mxu0 %v928
  %v2086 = vpop.f32.mrf.mxu0
  %v2087 = vadd.f32 0.0, %v2086
  %2088 = vmatmul.f32.gmra.mxu0 %v930
  %v2089 = vpop.f32.mrf.mxu0
  %v2090 = vadd.f32 0.0, %v2089
  %2091 = vmatmul.f32.gmra.mxu0 %v933
  %v2092 = vpop.f32.mrf.mxu0
  %v2093 = vadd.f32 0.0, %v2092
  %2094 = vmatmul.f32.gmra.mxu0 %v935
  %v2095 = vpop.f32.mrf.mxu0
  %v2096 = vadd.f32 0.0, %v2095
  %2097 = vmatmul.f32.gmra.mxu0 %v938
  %v2098 = vpop.f32.mrf.mxu0
  %v2099 = vadd.f32 0.0, %v2098
  %2100 = vmatmul.f32.gmra.mxu0 %v940
  %v2101 = vpop.f32.mrf.mxu0
  %v2102 = vadd.f32 0.0, %v2101
  %2103 = vmatmul.f32.gmra.mxu0 %v943
  %v2104 = vpop.f32.mrf.mxu0
  %v2105 = vadd.f32 0.0, %v2104
  %2106 = vmatmul.f32.gmra.mxu0 %v945
  %v2107 = vpop.f32.mrf.mxu0
  %v2108 = vadd.f32 0.0, %v2107
  %2109 = vmatmul.f32.gmra.mxu0 %v948
  %v2110 = vpop.f32.mrf.mxu0
  %v2111 = vadd.f32 0.0, %v2110
  %2112 = vmatmul.f32.gmra.mxu0 %v950
  %v2113 = vpop.f32.mrf.mxu0
  %v2114 = vadd.f32 0.0, %v2113
  %2115 = vmatmul.f32.gmra.mxu0 %v953
  %v2116 = vpop.f32.mrf.mxu0
  %v2117 = vadd.f32 0.0, %v2116
  %2118 = vmatmul.f32.gmra.mxu0 %v955
  %v2119 = vpop.f32.mrf.mxu0
  %v2120 = vadd.f32 0.0, %v2119
  %2121 = vmatmul.f32.gmra.mxu0 %v958
  %v2122 = vpop.f32.mrf.mxu0
  %v2123 = vadd.f32 0.0, %v2122
  %2124 = vmatmul.f32.gmra.mxu0 %v960
  %v2125 = vpop.f32.mrf.mxu0
  %v2126 = vadd.f32 0.0, %v2125
  %2127 = vmatmul.f32.gmra.mxu0 %v963
  %v2128 = vpop.f32.mrf.mxu0
  %v2129 = vadd.f32 0.0, %v2128
  %2130 = vmatmul.f32.gmra.mxu0 %v965
  %v2131 = vpop.f32.mrf.mxu0
  %v2132 = vadd.f32 0.0, %v2131
  %2133 = vmatmul.f32.gmra.mxu0 %v968
  %v2134 = vpop.f32.mrf.mxu0
  %v2135 = vadd.f32 0.0, %v2134
  %2136 = vmatmul.f32.gmra.mxu0 %v970
  %v2137 = vpop.f32.mrf.mxu0
  %v2138 = vadd.f32 0.0, %v2137
  %2139 = vmatmul.f32.gmra.mxu0 %v973
  %v2140 = vpop.f32.mrf.mxu0
  %v2141 = vadd.f32 0.0, %v2140
  %2142 = vmatmul.f32.gmra.mxu0 %v975
  %v2143 = vpop.f32.mrf.mxu0
  %v2144 = vadd.f32 0.0, %v2143
  %2145 = vmatmul.f32.gmra.mxu0 %v978
  %v2146 = vpop.f32.mrf.mxu0
  %v2147 = vadd.f32 0.0, %v2146
  %2148 = vmatmul.f32.gmra.mxu0 %v980
  %v2149 = vpop.f32.mrf.mxu0
  %v2150 = vadd.f32 0.0, %v2149
  %2151 = vmatmul.f32.gmra.mxu0 %v983
  %v2152 = vpop.f32.mrf.mxu0
  %v2153 = vadd.f32 0.0, %v2152
  %2154 = vmatmul.f32.gmra.mxu0 %v985
  %v2155 = vpop.f32.mrf.mxu0
  %v2156 = vadd.f32 0.0, %v2155
  %2157 = vmatmul.f32.gmra.mxu0 %v2022
  %v2158 = vpop.f32.mrf.mxu0
  %v2159 = vadd.f32 0.0, %v2158
  %2160 = vmatmul.f32.gmra.mxu0 %v2024
  %v2161 = vpop.f32.mrf.mxu0
  %v2162 = vadd.f32 0.0, %v2161
  %2163 = vmatmul.f32.gmra.mxu0 %v993
  %v2164 = vpop.f32.mrf.mxu0
  %v2165 = vadd.f32 0.0, %v2164
  %2166 = vmatmul.f32.gmra.mxu0 %v995
  %v2167 = vpop.f32.mrf.mxu0
  %v2168 = vadd.f32 0.0, %v2167
  %2169 = vmatmul.f32.gmra.mxu0 %v998
  %v2170 = vpop.f32.mrf.mxu0
  %v2171 = vadd.f32 0.0, %v2170
  %2172 = vmatmul.f32.gmra.mxu0 %v1000
  %v2173 = vpop.f32.mrf.mxu0
  %v2174 = vadd.f32 0.0, %v2173
  %2175 = vmatmul.f32.gmra.mxu0 %v1003
  %v2176 = vpop.f32.mrf.mxu0
  %v2177 = vadd.f32 0.0, %v2176
  %2178 = vmatmul.f32.gmra.mxu0 %v1005
  %v2179 = vpop.f32.mrf.mxu0
  %v2180 = vadd.f32 0.0, %v2179
  %2181 = vmatmul.f32.gmra.mxu0 %v1008
  %v2182 = vpop.f32.mrf.mxu0
  %v2183 = vadd.f32 0.0, %v2182
  %2184 = vmatmul.f32.gmra.mxu0 %v1010
  %v2185 = vpop.f32.mrf.mxu0
  %v2186 = vadd.f32 0.0, %v2185
  %2187 = vmatmul.f32.gmra.mxu0 %v1013
  %v2188 = vpop.f32.mrf.mxu0
  %v2189 = vadd.f32 0.0, %v2188
  %2190 = vmatmul.f32.gmra.mxu0 %v1015
  %v2191 = vpop.f32.mrf.mxu0
  %v2192 = vadd.f32 0.0, %v2191
  %2193 = vmatmul.f32.gmra.mxu0 %v1018
  %v2194 = vpop.f32.mrf.mxu0
  %v2195 = vadd.f32 0.0, %v2194
  %2196 = vmatmul.f32.gmra.mxu0 %v1020
  %v2197 = vpop.f32.mrf.mxu0
  %v2198 = vadd.f32 0.0, %v2197
  %2199 = vmatmul.f32.gmra.mxu0 %v1023
  %v2200 = vpop.f32.mrf.mxu0
  %v2201 = vadd.f32 0.0, %v2200
  %2202 = vmatmul.f32.gmra.mxu0 %v1025
  %v2203 = vpop.f32.mrf.mxu0
  %v2204 = vadd.f32 0.0, %v2203
  %2205 = vmatmul.f32.gmra.mxu0 %v1028
  %v2206 = vpop.f32.mrf.mxu0
  %v2207 = vadd.f32 0.0, %v2206
  %2208 = vmatmul.f32.gmra.mxu0 %v1030
  %v2209 = vpop.f32.mrf.mxu0
  %v2210 = vadd.f32 0.0, %v2209
  %2211 = vmatmul.f32.gmra.mxu0 %v1033
  %v2212 = vpop.f32.mrf.mxu0
  %v2213 = vadd.f32 0.0, %v2212
  %2214 = vmatmul.f32.gmra.mxu0 %v1035
  %v2215 = vpop.f32.mrf.mxu0
  %v2216 = vadd.f32 0.0, %v2215
  %2217 = vmatmul.f32.gmra.mxu0 %v1038
  %v2218 = vpop.f32.mrf.mxu0
  %v2219 = vadd.f32 0.0, %v2218
  %2220 = vmatmul.f32.gmra.mxu0 %v1040
  %v2221 = vpop.f32.mrf.mxu0
  %v2222 = vadd.f32 0.0, %v2221
  %2223 = vmatmul.f32.gmra.mxu0 %v1043
  %v2224 = vpop.f32.mrf.mxu0
  %v2225 = vadd.f32 0.0, %v2224
  %2226 = vmatmul.f32.gmra.mxu0 %v1045
  %v2227 = vpop.f32.mrf.mxu0
  %v2228 = vadd.f32 0.0, %v2227
  %2229 = vmatmul.f32.gmra.mxu0 %v1048
  %v2230 = vpop.f32.mrf.mxu0
  %v2231 = vadd.f32 0.0, %v2230
  %2232 = vmatmul.f32.gmra.mxu0 %v1050
  %v2233 = vpop.f32.mrf.mxu0
  %v2234 = vadd.f32 0.0, %v2233
  %2235 = vmatmul.f32.gmra.mxu0 %v1053
  %v2236 = vpop.f32.mrf.mxu0
  %v2237 = vadd.f32 0.0, %v2236
  %2238 = vmatmul.f32.gmra.mxu0 %v1055
  %v2239 = vpop.f32.mrf.mxu0
  %v2240 = vadd.f32 0.0, %v2239
  %2241 = vmatmul.f32.gmra.mxu0 %v1058
  %v2242 = vpop.f32.mrf.mxu0
  %v2243 = vadd.f32 0.0, %v2242
  %2244 = vmatmul.f32.gmra.mxu0 %v1060
  %v2245 = vpop.f32.mrf.mxu0
  %v2246 = vadd.f32 0.0, %v2245
  %2247 = vmatmul.f32.gmra.mxu0 %v1063
  %v2248 = vpop.f32.mrf.mxu0
  %v2249 = vadd.f32 0.0, %v2248
  %2250 = vmatmul.f32.gmra.mxu0 %v1065
  %v2251 = vpop.f32.mrf.mxu0
  %v2252 = vadd.f32 0.0, %v2251
  %2253 = vmatmul.f32.gmra.mxu0 %v2027
  %v2254 = vpop.f32.mrf.mxu0
  %v2255 = vadd.f32 0.0, %v2254
  %2256 = vmatmul.f32.gmra.mxu0 %v2029
  %v2257 = vpop.f32.mrf.mxu0
  %v2258 = vadd.f32 0.0, %v2257
  %2259 = vdwg.mxu0
  %v2260 = vadd.f32 %v1956, %v2069
  %v2261 = vadd.f32 %v1957, %v2072
  %v2262 = vadd.f32 %v1958, %v2075
  %v2263 = vadd.f32 %v1959, %v2078
  %v2264 = vadd.f32 %v1960, %v2081
  %v2265 = vadd.f32 %v1961, %v2084
  %v2266 = vadd.f32 %v1962, %v2087
  %v2267 = vadd.f32 %v1963, %v2090
  %v2268 = vadd.f32 %v1964, %v2093
  %v2269 = vadd.f32 %v1965, %v2096
  %v2270 = vadd.f32 %v1966, %v2099
  %v2271 = vadd.f32 %v1967, %v2102
  %v2272 = vadd.f32 %v1968, %v2105
  %v2273 = vadd.f32 %v1969, %v2108
  %v2274 = vadd.f32 %v1970, %v2111
  %v2275 = vadd.f32 %v1971, %v2114
  %v2276 = vadd.f32 %v1972, %v2117
  %v2277 = vadd.f32 %v1973, %v2120
  %v2278 = vadd.f32 %v1974, %v2123
  %v2279 = vadd.f32 %v1975, %v2126
  %v2280 = vadd.f32 %v1976, %v2129
  %v2281 = vadd.f32 %v1977, %v2132
  %v2282 = vadd.f32 %v1978, %v2135
  %v2283 = vadd.f32 %v1979, %v2138
  %v2284 = vadd.f32 %v1980, %v2141
  %v2285 = vadd.f32 %v1981, %v2144
  %v2286 = vadd.f32 %v1982, %v2147
  %v2287 = vadd.f32 %v1983, %v2150
  %v2288 = vadd.f32 %v1984, %v2153
  %v2289 = vadd.f32 %v1985, %v2156
  %v2290 = vadd.f32 %v1986, %v2159
  %v2291 = vadd.f32 %v1987, %v2162
  %v2292 = vadd.f32 %v1988, %v2165
  %v2293 = vadd.f32 %v1989, %v2168
  %v2294 = vadd.f32 %v1990, %v2171
  %v2295 = vadd.f32 %v1991, %v2174
  %v2296 = vadd.f32 %v1992, %v2177
  %v2297 = vadd.f32 %v1993, %v2180
  %v2298 = vadd.f32 %v1994, %v2183
  %v2299 = vadd.f32 %v1995, %v2186
  %v2300 = vadd.f32 %v1996, %v2189
  %v2301 = vadd.f32 %v1997, %v2192
  %v2302 = vadd.f32 %v1998, %v2195
  %v2303 = vadd.f32 %v1999, %v2198
  %v2304 = vadd.f32 %v2000, %v2201
  %v2305 = vadd.f32 %v2001, %v2204
  %v2306 = vadd.f32 %v2002, %v2207
  %v2307 = vadd.f32 %v2003, %v2210
  %v2308 = vadd.f32 %v2004, %v2213
  %v2309 = vadd.f32 %v2005, %v2216
  %v2310 = vadd.f32 %v2006, %v2219
  %v2311 = vadd.f32 %v2007, %v2222
  %v2312 = vadd.f32 %v2008, %v2225
  %v2313 = vadd.f32 %v2009, %v2228
  %v2314 = vadd.f32 %v2010, %v2231
  %v2315 = vadd.f32 %v2011, %v2234
  %v2316 = vadd.f32 %v2012, %v2237
  %v2317 = vadd.f32 %v2013, %v2240
  %v2318 = vadd.f32 %v2014, %v2243
  %v2319 = vadd.f32 %v2015, %v2246
  %v2320 = vadd.f32 %v2016, %v2249
  %v2321 = vadd.f32 %v2017, %v2252
  %v2322 = vadd.f32 %v2018, %v2255
  %v2323 = vadd.f32 %v2019, %v2258
  %s2324 = scalar_lea.vmem %s1, 768
  %v2325 = vld [vmem:[%s2324] sm:$0xff]
  %v2326 = vld [vmem:[%s2324 + $0x8] sm:$0xff]
  %v2327 = vld [vmem:[%s2324 + $0x10] sm:$0xff]
  %v2328 = vld [vmem:[%s2324 + $0x18] sm:$0xff]
  %v2329 = vld [vmem:[%s2324 + $0x20] sm:$0xff]
  %v2330 = vld [vmem:[%s2324 + $0x28] sm:$0xff]
  %v2331 = vld [vmem:[%s2324 + $0x30] sm:$0xff]
  %v2332 = vld [vmem:[%s2324 + $0x38] sm:$0xff]
  %v2333 = vld [vmem:[%s2324 + $0x40] sm:$0xff]
  %v2334 = vld [vmem:[%s2324 + $0x48] sm:$0xff]
  %v2335 = vld [vmem:[%s2324 + $0x50] sm:$0xff]
  %v2336 = vld [vmem:[%s2324 + $0x58] sm:$0xff]
  %v2337 = vld [vmem:[%s2324 + $0x60] sm:$0xff]
  %v2338 = vld [vmem:[%s2324 + $0x68] sm:$0xff]
  %v2339 = vld [vmem:[%s2324 + $0x70] sm:$0xff]
  %v2340 = vld [vmem:[%s2324 + $0x78] sm:$0xff]
  %2341 = vmatpush.msra.mxu0 %v2340
  %2342 = vmatpush.msra.mxu0 %v2339
  %2343 = vmatpush.msra.mxu0 %v2338
  %2344 = vmatpush.msra.mxu0 %v2337
  %2345 = vmatpush.msra.mxu0 %v2336
  %2346 = vmatpush.msra.mxu0 %v2335
  %2347 = vmatpush.msra.mxu0 %v2334
  %2348 = vmatpush.msra.mxu0 %v2333
  %2349 = vmatpush.msra.mxu0 %v2332
  %2350 = vmatpush.msra.mxu0 %v2331
  %2351 = vmatpush.msra.mxu0 %v2330
  %2352 = vmatpush.msra.mxu0 %v2329
  %2353 = vmatpush.msra.mxu0 %v2328
  %2354 = vmatpush.msra.mxu0 %v2327
  %2355 = vmatpush.msra.mxu0 %v2326
  %2356 = vmatpush.msra.mxu0 %v2325
  %2357 = vmatmul.f32.gmra.mxu0 %v31
  %v2358 = vpop.f32.mrf.mxu0
  %v2359 = vadd.f32 0.0, %v2358
  %2360 = vmatmul.f32.gmra.mxu0 %v32
  %v2361 = vpop.f32.mrf.mxu0
  %v2362 = vadd.f32 0.0, %v2361
  %2363 = vmatmul.f32.gmra.mxu0 %v34
  %v2364 = vpop.f32.mrf.mxu0
  %v2365 = vadd.f32 0.0, %v2364
  %2366 = vmatmul.f32.gmra.mxu0 %v35
  %v2367 = vpop.f32.mrf.mxu0
  %v2368 = vadd.f32 0.0, %v2367
  %2369 = vmatmul.f32.gmra.mxu0 %v37
  %v2370 = vpop.f32.mrf.mxu0
  %v2371 = vadd.f32 0.0, %v2370
  %2372 = vmatmul.f32.gmra.mxu0 %v38
  %v2373 = vpop.f32.mrf.mxu0
  %v2374 = vadd.f32 0.0, %v2373
  %2375 = vmatmul.f32.gmra.mxu0 %v40
  %v2376 = vpop.f32.mrf.mxu0
  %v2377 = vadd.f32 0.0, %v2376
  %2378 = vmatmul.f32.gmra.mxu0 %v41
  %v2379 = vpop.f32.mrf.mxu0
  %v2380 = vadd.f32 0.0, %v2379
  %2381 = vmatmul.f32.gmra.mxu0 %v43
  %v2382 = vpop.f32.mrf.mxu0
  %v2383 = vadd.f32 0.0, %v2382
  %2384 = vmatmul.f32.gmra.mxu0 %v44
  %v2385 = vpop.f32.mrf.mxu0
  %v2386 = vadd.f32 0.0, %v2385
  %2387 = vmatmul.f32.gmra.mxu0 %v46
  %v2388 = vpop.f32.mrf.mxu0
  %v2389 = vadd.f32 0.0, %v2388
  %2390 = vmatmul.f32.gmra.mxu0 %v47
  %v2391 = vpop.f32.mrf.mxu0
  %v2392 = vadd.f32 0.0, %v2391
  %2393 = vmatmul.f32.gmra.mxu0 %v49
  %v2394 = vpop.f32.mrf.mxu0
  %v2395 = vadd.f32 0.0, %v2394
  %2396 = vmatmul.f32.gmra.mxu0 %v50
  %v2397 = vpop.f32.mrf.mxu0
  %v2398 = vadd.f32 0.0, %v2397
  %2399 = vmatmul.f32.gmra.mxu0 %v52
  %v2400 = vpop.f32.mrf.mxu0
  %v2401 = vadd.f32 0.0, %v2400
  %2402 = vmatmul.f32.gmra.mxu0 %v53
  %v2403 = vpop.f32.mrf.mxu0
  %v2404 = vadd.f32 0.0, %v2403
  %2405 = vmatmul.f32.gmra.mxu0 %v55
  %v2406 = vpop.f32.mrf.mxu0
  %v2407 = vadd.f32 0.0, %v2406
  %2408 = vmatmul.f32.gmra.mxu0 %v56
  %v2409 = vpop.f32.mrf.mxu0
  %v2410 = vadd.f32 0.0, %v2409
  %2411 = vmatmul.f32.gmra.mxu0 %v58
  %v2412 = vpop.f32.mrf.mxu0
  %v2413 = vadd.f32 0.0, %v2412
  %2414 = vmatmul.f32.gmra.mxu0 %v59
  %v2415 = vpop.f32.mrf.mxu0
  %v2416 = vadd.f32 0.0, %v2415
  %2417 = vmatmul.f32.gmra.mxu0 %v61
  %v2418 = vpop.f32.mrf.mxu0
  %v2419 = vadd.f32 0.0, %v2418
  %2420 = vmatmul.f32.gmra.mxu0 %v62
  %v2421 = vpop.f32.mrf.mxu0
  %v2422 = vadd.f32 0.0, %v2421
  %2423 = vmatmul.f32.gmra.mxu0 %v64
  %v2424 = vpop.f32.mrf.mxu0
  %v2425 = vadd.f32 0.0, %v2424
  %2426 = vmatmul.f32.gmra.mxu0 %v65
  %v2427 = vpop.f32.mrf.mxu0
  %v2428 = vadd.f32 0.0, %v2427
  %2429 = vmatmul.f32.gmra.mxu0 %v67
  %v2430 = vpop.f32.mrf.mxu0
  %v2431 = vadd.f32 0.0, %v2430
  %2432 = vmatmul.f32.gmra.mxu0 %v68
  %v2433 = vpop.f32.mrf.mxu0
  %v2434 = vadd.f32 0.0, %v2433
  %2435 = vmatmul.f32.gmra.mxu0 %v70
  %v2436 = vpop.f32.mrf.mxu0
  %v2437 = vadd.f32 0.0, %v2436
  %2438 = vmatmul.f32.gmra.mxu0 %v71
  %v2439 = vpop.f32.mrf.mxu0
  %v2440 = vadd.f32 0.0, %v2439
  %2441 = vmatmul.f32.gmra.mxu0 %v73
  %v2442 = vpop.f32.mrf.mxu0
  %v2443 = vadd.f32 0.0, %v2442
  %2444 = vmatmul.f32.gmra.mxu0 %v74
  %v2445 = vpop.f32.mrf.mxu0
  %v2446 = vadd.f32 0.0, %v2445
  %2447 = vmatmul.f32.gmra.mxu0 %v76
  %v2448 = vpop.f32.mrf.mxu0
  %v2449 = vadd.f32 0.0, %v2448
  %2450 = vmatmul.f32.gmra.mxu0 %v77
  %v2451 = vpop.f32.mrf.mxu0
  %v2452 = vadd.f32 0.0, %v2451
  %2453 = vmatmul.f32.gmra.mxu0 %v85
  %v2454 = vpop.f32.mrf.mxu0
  %v2455 = vadd.f32 0.0, %v2454
  %2456 = vmatmul.f32.gmra.mxu0 %v86
  %v2457 = vpop.f32.mrf.mxu0
  %v2458 = vadd.f32 0.0, %v2457
  %2459 = vmatmul.f32.gmra.mxu0 %v88
  %v2460 = vpop.f32.mrf.mxu0
  %v2461 = vadd.f32 0.0, %v2460
  %2462 = vmatmul.f32.gmra.mxu0 %v89
  %v2463 = vpop.f32.mrf.mxu0
  %v2464 = vadd.f32 0.0, %v2463
  %2465 = vmatmul.f32.gmra.mxu0 %v91
  %v2466 = vpop.f32.mrf.mxu0
  %v2467 = vadd.f32 0.0, %v2466
  %2468 = vmatmul.f32.gmra.mxu0 %v92
  %v2469 = vpop.f32.mrf.mxu0
  %v2470 = vadd.f32 0.0, %v2469
  %2471 = vmatmul.f32.gmra.mxu0 %v94
  %v2472 = vpop.f32.mrf.mxu0
  %v2473 = vadd.f32 0.0, %v2472
  %2474 = vmatmul.f32.gmra.mxu0 %v95
  %v2475 = vpop.f32.mrf.mxu0
  %v2476 = vadd.f32 0.0, %v2475
  %2477 = vmatmul.f32.gmra.mxu0 %v97
  %v2478 = vpop.f32.mrf.mxu0
  %v2479 = vadd.f32 0.0, %v2478
  %2480 = vmatmul.f32.gmra.mxu0 %v98
  %v2481 = vpop.f32.mrf.mxu0
  %v2482 = vadd.f32 0.0, %v2481
  %2483 = vmatmul.f32.gmra.mxu0 %v100
  %v2484 = vpop.f32.mrf.mxu0
  %v2485 = vadd.f32 0.0, %v2484
  %2486 = vmatmul.f32.gmra.mxu0 %v101
  %v2487 = vpop.f32.mrf.mxu0
  %v2488 = vadd.f32 0.0, %v2487
  %2489 = vmatmul.f32.gmra.mxu0 %v103
  %v2490 = vpop.f32.mrf.mxu0
  %v2491 = vadd.f32 0.0, %v2490
  %2492 = vmatmul.f32.gmra.mxu0 %v104
  %v2493 = vpop.f32.mrf.mxu0
  %v2494 = vadd.f32 0.0, %v2493
  %2495 = vmatmul.f32.gmra.mxu0 %v106
  %v2496 = vpop.f32.mrf.mxu0
  %v2497 = vadd.f32 0.0, %v2496
  %2498 = vmatmul.f32.gmra.mxu0 %v107
  %v2499 = vpop.f32.mrf.mxu0
  %v2500 = vadd.f32 0.0, %v2499
  %2501 = vmatmul.f32.gmra.mxu0 %v109
  %v2502 = vpop.f32.mrf.mxu0
  %v2503 = vadd.f32 0.0, %v2502
  %2504 = vmatmul.f32.gmra.mxu0 %v110
  %v2505 = vpop.f32.mrf.mxu0
  %v2506 = vadd.f32 0.0, %v2505
  %2507 = vmatmul.f32.gmra.mxu0 %v112
  %v2508 = vpop.f32.mrf.mxu0
  %v2509 = vadd.f32 0.0, %v2508
  %2510 = vmatmul.f32.gmra.mxu0 %v113
  %v2511 = vpop.f32.mrf.mxu0
  %v2512 = vadd.f32 0.0, %v2511
  %2513 = vmatmul.f32.gmra.mxu0 %v115
  %v2514 = vpop.f32.mrf.mxu0
  %v2515 = vadd.f32 0.0, %v2514
  %2516 = vmatmul.f32.gmra.mxu0 %v116
  %v2517 = vpop.f32.mrf.mxu0
  %v2518 = vadd.f32 0.0, %v2517
  %2519 = vmatmul.f32.gmra.mxu0 %v118
  %v2520 = vpop.f32.mrf.mxu0
  %v2521 = vadd.f32 0.0, %v2520
  %2522 = vmatmul.f32.gmra.mxu0 %v119
  %v2523 = vpop.f32.mrf.mxu0
  %v2524 = vadd.f32 0.0, %v2523
  %2525 = vmatmul.f32.gmra.mxu0 %v121
  %v2526 = vpop.f32.mrf.mxu0
  %v2527 = vadd.f32 0.0, %v2526
  %2528 = vmatmul.f32.gmra.mxu0 %v122
  %v2529 = vpop.f32.mrf.mxu0
  %v2530 = vadd.f32 0.0, %v2529
  %2531 = vmatmul.f32.gmra.mxu0 %v124
  %v2532 = vpop.f32.mrf.mxu0
  %v2533 = vadd.f32 0.0, %v2532
  %2534 = vmatmul.f32.gmra.mxu0 %v125
  %v2535 = vpop.f32.mrf.mxu0
  %v2536 = vadd.f32 0.0, %v2535
  %2537 = vmatmul.f32.gmra.mxu0 %v127
  %v2538 = vpop.f32.mrf.mxu0
  %v2539 = vadd.f32 0.0, %v2538
  %2540 = vmatmul.f32.gmra.mxu0 %v128
  %v2541 = vpop.f32.mrf.mxu0
  %v2542 = vadd.f32 0.0, %v2541
  %2543 = vmatmul.f32.gmra.mxu0 %v130
  %v2544 = vpop.f32.mrf.mxu0
  %v2545 = vadd.f32 0.0, %v2544
  %2546 = vmatmul.f32.gmra.mxu0 %v131
  %v2547 = vpop.f32.mrf.mxu0
  %v2548 = vadd.f32 0.0, %v2547
  %2549 = vdwg.mxu0
  %v2550 = vadd.f32 %v2260, %v2359
  %v2551 = vadd.f32 %v2261, %v2362
  %v2552 = vadd.f32 %v2262, %v2365
  %v2553 = vadd.f32 %v2263, %v2368
  %v2554 = vadd.f32 %v2264, %v2371
  %v2555 = vadd.f32 %v2265, %v2374
  %v2556 = vadd.f32 %v2266, %v2377
  %v2557 = vadd.f32 %v2267, %v2380
  %v2558 = vadd.f32 %v2268, %v2383
  %v2559 = vadd.f32 %v2269, %v2386
  %v2560 = vadd.f32 %v2270, %v2389
  %v2561 = vadd.f32 %v2271, %v2392
  %v2562 = vadd.f32 %v2272, %v2395
  %v2563 = vadd.f32 %v2273, %v2398
  %v2564 = vadd.f32 %v2274, %v2401
  %v2565 = vadd.f32 %v2275, %v2404
  %v2566 = vadd.f32 %v2276, %v2407
  %v2567 = vadd.f32 %v2277, %v2410
  %v2568 = vadd.f32 %v2278, %v2413
  %v2569 = vadd.f32 %v2279, %v2416
  %v2570 = vadd.f32 %v2280, %v2419
  %v2571 = vadd.f32 %v2281, %v2422
  %v2572 = vadd.f32 %v2282, %v2425
  %v2573 = vadd.f32 %v2283, %v2428
  %v2574 = vadd.f32 %v2284, %v2431
  %v2575 = vadd.f32 %v2285, %v2434
  %v2576 = vadd.f32 %v2286, %v2437
  %v2577 = vadd.f32 %v2287, %v2440
  %v2578 = vadd.f32 %v2288, %v2443
  %v2579 = vadd.f32 %v2289, %v2446
  %v2580 = vadd.f32 %v2290, %v2449
  %v2581 = vadd.f32 %v2291, %v2452
  %v2582 = vadd.f32 %v2292, %v2455
  %v2583 = vadd.f32 %v2293, %v2458
  %v2584 = vadd.f32 %v2294, %v2461
  %v2585 = vadd.f32 %v2295, %v2464
  %v2586 = vadd.f32 %v2296, %v2467
  %v2587 = vadd.f32 %v2297, %v2470
  %v2588 = vadd.f32 %v2298, %v2473
  %v2589 = vadd.f32 %v2299, %v2476
  %v2590 = vadd.f32 %v2300, %v2479
  %v2591 = vadd.f32 %v2301, %v2482
  %v2592 = vadd.f32 %v2302, %v2485
  %v2593 = vadd.f32 %v2303, %v2488
  %v2594 = vadd.f32 %v2304, %v2491
  %v2595 = vadd.f32 %v2305, %v2494
  %v2596 = vadd.f32 %v2306, %v2497
  %v2597 = vadd.f32 %v2307, %v2500
  %v2598 = vadd.f32 %v2308, %v2503
  %v2599 = vadd.f32 %v2309, %v2506
  %v2600 = vadd.f32 %v2310, %v2509
  %v2601 = vadd.f32 %v2311, %v2512
  %v2602 = vadd.f32 %v2312, %v2515
  %v2603 = vadd.f32 %v2313, %v2518
  %v2604 = vadd.f32 %v2314, %v2521
  %v2605 = vadd.f32 %v2315, %v2524
  %v2606 = vadd.f32 %v2316, %v2527
  %v2607 = vadd.f32 %v2317, %v2530
  %v2608 = vadd.f32 %v2318, %v2533
  %v2609 = vadd.f32 %v2319, %v2536
  %v2610 = vadd.f32 %v2320, %v2539
  %v2611 = vadd.f32 %v2321, %v2542
  %v2612 = vadd.f32 %v2322, %v2545
  %v2613 = vadd.f32 %v2323, %v2548
  %v2620 = vrot.slane %v76, 1
  %v2621 = vrot.slane %v77, 1
  %v2622 = vsel %vm245, %v2620, %v2621
  %v2623 = vrot.slane %v78, 1
  %v2624 = vsel %vm245, %v2621, %v2623
  %v2625 = vrot.slane %v130, 1
  %v2626 = vrot.slane %v131, 1
  %v2627 = vsel %vm245, %v2625, %v2626
  %v2628 = vrot.slane %v132, 1
  %v2629 = vsel %vm245, %v2626, %v2628
  %s2634 = scalar_lea.vmem %s1, 896
  %v2635 = vld [vmem:[%s2634] sm:$0xff]
  %v2636 = vld [vmem:[%s2634 + $0x8] sm:$0xff]
  %v2637 = vld [vmem:[%s2634 + $0x10] sm:$0xff]
  %v2638 = vld [vmem:[%s2634 + $0x18] sm:$0xff]
  %v2639 = vld [vmem:[%s2634 + $0x20] sm:$0xff]
  %v2640 = vld [vmem:[%s2634 + $0x28] sm:$0xff]
  %v2641 = vld [vmem:[%s2634 + $0x30] sm:$0xff]
  %v2642 = vld [vmem:[%s2634 + $0x38] sm:$0xff]
  %v2643 = vld [vmem:[%s2634 + $0x40] sm:$0xff]
  %v2644 = vld [vmem:[%s2634 + $0x48] sm:$0xff]
  %v2645 = vld [vmem:[%s2634 + $0x50] sm:$0xff]
  %v2646 = vld [vmem:[%s2634 + $0x58] sm:$0xff]
  %v2647 = vld [vmem:[%s2634 + $0x60] sm:$0xff]
  %v2648 = vld [vmem:[%s2634 + $0x68] sm:$0xff]
  %v2649 = vld [vmem:[%s2634 + $0x70] sm:$0xff]
  %v2650 = vld [vmem:[%s2634 + $0x78] sm:$0xff]
  %2651 = vmatpush.msra.mxu0 %v2650
  %2652 = vmatpush.msra.mxu0 %v2649
  %2653 = vmatpush.msra.mxu0 %v2648
  %2654 = vmatpush.msra.mxu0 %v2647
  %2655 = vmatpush.msra.mxu0 %v2646
  %2656 = vmatpush.msra.mxu0 %v2645
  %2657 = vmatpush.msra.mxu0 %v2644
  %2658 = vmatpush.msra.mxu0 %v2643
  %2659 = vmatpush.msra.mxu0 %v2642
  %2660 = vmatpush.msra.mxu0 %v2641
  %2661 = vmatpush.msra.mxu0 %v2640
  %2662 = vmatpush.msra.mxu0 %v2639
  %2663 = vmatpush.msra.mxu0 %v2638
  %2664 = vmatpush.msra.mxu0 %v2637
  %2665 = vmatpush.msra.mxu0 %v2636
  %2666 = vmatpush.msra.mxu0 %v2635
  %2667 = vmatmul.f32.gmra.mxu0 %v258
  %v2668 = vpop.f32.mrf.mxu0
  %v2669 = vadd.f32 0.0, %v2668
  %2670 = vmatmul.f32.gmra.mxu0 %v260
  %v2671 = vpop.f32.mrf.mxu0
  %v2672 = vadd.f32 0.0, %v2671
  %2673 = vmatmul.f32.gmra.mxu0 %v263
  %v2674 = vpop.f32.mrf.mxu0
  %v2675 = vadd.f32 0.0, %v2674
  %2676 = vmatmul.f32.gmra.mxu0 %v265
  %v2677 = vpop.f32.mrf.mxu0
  %v2678 = vadd.f32 0.0, %v2677
  %2679 = vmatmul.f32.gmra.mxu0 %v268
  %v2680 = vpop.f32.mrf.mxu0
  %v2681 = vadd.f32 0.0, %v2680
  %2682 = vmatmul.f32.gmra.mxu0 %v270
  %v2683 = vpop.f32.mrf.mxu0
  %v2684 = vadd.f32 0.0, %v2683
  %2685 = vmatmul.f32.gmra.mxu0 %v273
  %v2686 = vpop.f32.mrf.mxu0
  %v2687 = vadd.f32 0.0, %v2686
  %2688 = vmatmul.f32.gmra.mxu0 %v275
  %v2689 = vpop.f32.mrf.mxu0
  %v2690 = vadd.f32 0.0, %v2689
  %2691 = vmatmul.f32.gmra.mxu0 %v278
  %v2692 = vpop.f32.mrf.mxu0
  %v2693 = vadd.f32 0.0, %v2692
  %2694 = vmatmul.f32.gmra.mxu0 %v280
  %v2695 = vpop.f32.mrf.mxu0
  %v2696 = vadd.f32 0.0, %v2695
  %2697 = vmatmul.f32.gmra.mxu0 %v283
  %v2698 = vpop.f32.mrf.mxu0
  %v2699 = vadd.f32 0.0, %v2698
  %2700 = vmatmul.f32.gmra.mxu0 %v285
  %v2701 = vpop.f32.mrf.mxu0
  %v2702 = vadd.f32 0.0, %v2701
  %2703 = vmatmul.f32.gmra.mxu0 %v288
  %v2704 = vpop.f32.mrf.mxu0
  %v2705 = vadd.f32 0.0, %v2704
  %2706 = vmatmul.f32.gmra.mxu0 %v290
  %v2707 = vpop.f32.mrf.mxu0
  %v2708 = vadd.f32 0.0, %v2707
  %2709 = vmatmul.f32.gmra.mxu0 %v293
  %v2710 = vpop.f32.mrf.mxu0
  %v2711 = vadd.f32 0.0, %v2710
  %2712 = vmatmul.f32.gmra.mxu0 %v295
  %v2713 = vpop.f32.mrf.mxu0
  %v2714 = vadd.f32 0.0, %v2713
  %2715 = vmatmul.f32.gmra.mxu0 %v298
  %v2716 = vpop.f32.mrf.mxu0
  %v2717 = vadd.f32 0.0, %v2716
  %2718 = vmatmul.f32.gmra.mxu0 %v300
  %v2719 = vpop.f32.mrf.mxu0
  %v2720 = vadd.f32 0.0, %v2719
  %2721 = vmatmul.f32.gmra.mxu0 %v303
  %v2722 = vpop.f32.mrf.mxu0
  %v2723 = vadd.f32 0.0, %v2722
  %2724 = vmatmul.f32.gmra.mxu0 %v305
  %v2725 = vpop.f32.mrf.mxu0
  %v2726 = vadd.f32 0.0, %v2725
  %2727 = vmatmul.f32.gmra.mxu0 %v308
  %v2728 = vpop.f32.mrf.mxu0
  %v2729 = vadd.f32 0.0, %v2728
  %2730 = vmatmul.f32.gmra.mxu0 %v310
  %v2731 = vpop.f32.mrf.mxu0
  %v2732 = vadd.f32 0.0, %v2731
  %2733 = vmatmul.f32.gmra.mxu0 %v313
  %v2734 = vpop.f32.mrf.mxu0
  %v2735 = vadd.f32 0.0, %v2734
  %2736 = vmatmul.f32.gmra.mxu0 %v315
  %v2737 = vpop.f32.mrf.mxu0
  %v2738 = vadd.f32 0.0, %v2737
  %2739 = vmatmul.f32.gmra.mxu0 %v318
  %v2740 = vpop.f32.mrf.mxu0
  %v2741 = vadd.f32 0.0, %v2740
  %2742 = vmatmul.f32.gmra.mxu0 %v320
  %v2743 = vpop.f32.mrf.mxu0
  %v2744 = vadd.f32 0.0, %v2743
  %2745 = vmatmul.f32.gmra.mxu0 %v323
  %v2746 = vpop.f32.mrf.mxu0
  %v2747 = vadd.f32 0.0, %v2746
  %2748 = vmatmul.f32.gmra.mxu0 %v325
  %v2749 = vpop.f32.mrf.mxu0
  %v2750 = vadd.f32 0.0, %v2749
  %2751 = vmatmul.f32.gmra.mxu0 %v1718
  %v2752 = vpop.f32.mrf.mxu0
  %v2753 = vadd.f32 0.0, %v2752
  %2754 = vmatmul.f32.gmra.mxu0 %v1720
  %v2755 = vpop.f32.mrf.mxu0
  %v2756 = vadd.f32 0.0, %v2755
  %2757 = vmatmul.f32.gmra.mxu0 %v2622
  %v2758 = vpop.f32.mrf.mxu0
  %v2759 = vadd.f32 0.0, %v2758
  %2760 = vmatmul.f32.gmra.mxu0 %v2624
  %v2761 = vpop.f32.mrf.mxu0
  %v2762 = vadd.f32 0.0, %v2761
  %2763 = vmatmul.f32.gmra.mxu0 %v338
  %v2764 = vpop.f32.mrf.mxu0
  %v2765 = vadd.f32 0.0, %v2764
  %2766 = vmatmul.f32.gmra.mxu0 %v340
  %v2767 = vpop.f32.mrf.mxu0
  %v2768 = vadd.f32 0.0, %v2767
  %2769 = vmatmul.f32.gmra.mxu0 %v343
  %v2770 = vpop.f32.mrf.mxu0
  %v2771 = vadd.f32 0.0, %v2770
  %2772 = vmatmul.f32.gmra.mxu0 %v345
  %v2773 = vpop.f32.mrf.mxu0
  %v2774 = vadd.f32 0.0, %v2773
  %2775 = vmatmul.f32.gmra.mxu0 %v348
  %v2776 = vpop.f32.mrf.mxu0
  %v2777 = vadd.f32 0.0, %v2776
  %2778 = vmatmul.f32.gmra.mxu0 %v350
  %v2779 = vpop.f32.mrf.mxu0
  %v2780 = vadd.f32 0.0, %v2779
  %2781 = vmatmul.f32.gmra.mxu0 %v353
  %v2782 = vpop.f32.mrf.mxu0
  %v2783 = vadd.f32 0.0, %v2782
  %2784 = vmatmul.f32.gmra.mxu0 %v355
  %v2785 = vpop.f32.mrf.mxu0
  %v2786 = vadd.f32 0.0, %v2785
  %2787 = vmatmul.f32.gmra.mxu0 %v358
  %v2788 = vpop.f32.mrf.mxu0
  %v2789 = vadd.f32 0.0, %v2788
  %2790 = vmatmul.f32.gmra.mxu0 %v360
  %v2791 = vpop.f32.mrf.mxu0
  %v2792 = vadd.f32 0.0, %v2791
  %2793 = vmatmul.f32.gmra.mxu0 %v363
  %v2794 = vpop.f32.mrf.mxu0
  %v2795 = vadd.f32 0.0, %v2794
  %2796 = vmatmul.f32.gmra.mxu0 %v365
  %v2797 = vpop.f32.mrf.mxu0
  %v2798 = vadd.f32 0.0, %v2797
  %2799 = vmatmul.f32.gmra.mxu0 %v368
  %v2800 = vpop.f32.mrf.mxu0
  %v2801 = vadd.f32 0.0, %v2800
  %2802 = vmatmul.f32.gmra.mxu0 %v370
  %v2803 = vpop.f32.mrf.mxu0
  %v2804 = vadd.f32 0.0, %v2803
  %2805 = vmatmul.f32.gmra.mxu0 %v373
  %v2806 = vpop.f32.mrf.mxu0
  %v2807 = vadd.f32 0.0, %v2806
  %2808 = vmatmul.f32.gmra.mxu0 %v375
  %v2809 = vpop.f32.mrf.mxu0
  %v2810 = vadd.f32 0.0, %v2809
  %2811 = vmatmul.f32.gmra.mxu0 %v378
  %v2812 = vpop.f32.mrf.mxu0
  %v2813 = vadd.f32 0.0, %v2812
  %2814 = vmatmul.f32.gmra.mxu0 %v380
  %v2815 = vpop.f32.mrf.mxu0
  %v2816 = vadd.f32 0.0, %v2815
  %2817 = vmatmul.f32.gmra.mxu0 %v383
  %v2818 = vpop.f32.mrf.mxu0
  %v2819 = vadd.f32 0.0, %v2818
  %2820 = vmatmul.f32.gmra.mxu0 %v385
  %v2821 = vpop.f32.mrf.mxu0
  %v2822 = vadd.f32 0.0, %v2821
  %2823 = vmatmul.f32.gmra.mxu0 %v388
  %v2824 = vpop.f32.mrf.mxu0
  %v2825 = vadd.f32 0.0, %v2824
  %2826 = vmatmul.f32.gmra.mxu0 %v390
  %v2827 = vpop.f32.mrf.mxu0
  %v2828 = vadd.f32 0.0, %v2827
  %2829 = vmatmul.f32.gmra.mxu0 %v393
  %v2830 = vpop.f32.mrf.mxu0
  %v2831 = vadd.f32 0.0, %v2830
  %2832 = vmatmul.f32.gmra.mxu0 %v395
  %v2833 = vpop.f32.mrf.mxu0
  %v2834 = vadd.f32 0.0, %v2833
  %2835 = vmatmul.f32.gmra.mxu0 %v398
  %v2836 = vpop.f32.mrf.mxu0
  %v2837 = vadd.f32 0.0, %v2836
  %2838 = vmatmul.f32.gmra.mxu0 %v400
  %v2839 = vpop.f32.mrf.mxu0
  %v2840 = vadd.f32 0.0, %v2839
  %2841 = vmatmul.f32.gmra.mxu0 %v403
  %v2842 = vpop.f32.mrf.mxu0
  %v2843 = vadd.f32 0.0, %v2842
  %2844 = vmatmul.f32.gmra.mxu0 %v405
  %v2845 = vpop.f32.mrf.mxu0
  %v2846 = vadd.f32 0.0, %v2845
  %2847 = vmatmul.f32.gmra.mxu0 %v1723
  %v2848 = vpop.f32.mrf.mxu0
  %v2849 = vadd.f32 0.0, %v2848
  %2850 = vmatmul.f32.gmra.mxu0 %v1725
  %v2851 = vpop.f32.mrf.mxu0
  %v2852 = vadd.f32 0.0, %v2851
  %2853 = vmatmul.f32.gmra.mxu0 %v2627
  %v2854 = vpop.f32.mrf.mxu0
  %v2855 = vadd.f32 0.0, %v2854
  %2856 = vmatmul.f32.gmra.mxu0 %v2629
  %v2857 = vpop.f32.mrf.mxu0
  %v2858 = vadd.f32 0.0, %v2857
  %2859 = vdwg.mxu0
  %v2860 = vadd.f32 %v2550, %v2669
  %v2861 = vadd.f32 %v2551, %v2672
  %v2862 = vadd.f32 %v2552, %v2675
  %v2863 = vadd.f32 %v2553, %v2678
  %v2864 = vadd.f32 %v2554, %v2681
  %v2865 = vadd.f32 %v2555, %v2684
  %v2866 = vadd.f32 %v2556, %v2687
  %v2867 = vadd.f32 %v2557, %v2690
  %v2868 = vadd.f32 %v2558, %v2693
  %v2869 = vadd.f32 %v2559, %v2696
  %v2870 = vadd.f32 %v2560, %v2699
  %v2871 = vadd.f32 %v2561, %v2702
  %v2872 = vadd.f32 %v2562, %v2705
  %v2873 = vadd.f32 %v2563, %v2708
  %v2874 = vadd.f32 %v2564, %v2711
  %v2875 = vadd.f32 %v2565, %v2714
  %v2876 = vadd.f32 %v2566, %v2717
  %v2877 = vadd.f32 %v2567, %v2720
  %v2878 = vadd.f32 %v2568, %v2723
  %v2879 = vadd.f32 %v2569, %v2726
  %v2880 = vadd.f32 %v2570, %v2729
  %v2881 = vadd.f32 %v2571, %v2732
  %v2882 = vadd.f32 %v2572, %v2735
  %v2883 = vadd.f32 %v2573, %v2738
  %v2884 = vadd.f32 %v2574, %v2741
  %v2885 = vadd.f32 %v2575, %v2744
  %v2886 = vadd.f32 %v2576, %v2747
  %v2887 = vadd.f32 %v2577, %v2750
  %v2888 = vadd.f32 %v2578, %v2753
  %v2889 = vadd.f32 %v2579, %v2756
  %v2890 = vadd.f32 %v2580, %v2759
  %v2891 = vadd.f32 %v2581, %v2762
  %v2892 = vadd.f32 %v2582, %v2765
  %v2893 = vadd.f32 %v2583, %v2768
  %v2894 = vadd.f32 %v2584, %v2771
  %v2895 = vadd.f32 %v2585, %v2774
  %v2896 = vadd.f32 %v2586, %v2777
  %v2897 = vadd.f32 %v2587, %v2780
  %v2898 = vadd.f32 %v2588, %v2783
  %v2899 = vadd.f32 %v2589, %v2786
  %v2900 = vadd.f32 %v2590, %v2789
  %v2901 = vadd.f32 %v2591, %v2792
  %v2902 = vadd.f32 %v2592, %v2795
  %v2903 = vadd.f32 %v2593, %v2798
  %v2904 = vadd.f32 %v2594, %v2801
  %v2905 = vadd.f32 %v2595, %v2804
  %v2906 = vadd.f32 %v2596, %v2807
  %v2907 = vadd.f32 %v2597, %v2810
  %v2908 = vadd.f32 %v2598, %v2813
  %v2909 = vadd.f32 %v2599, %v2816
  %v2910 = vadd.f32 %v2600, %v2819
  %v2911 = vadd.f32 %v2601, %v2822
  %v2912 = vadd.f32 %v2602, %v2825
  %v2913 = vadd.f32 %v2603, %v2828
  %v2914 = vadd.f32 %v2604, %v2831
  %v2915 = vadd.f32 %v2605, %v2834
  %v2916 = vadd.f32 %v2606, %v2837
  %v2917 = vadd.f32 %v2607, %v2840
  %v2918 = vadd.f32 %v2608, %v2843
  %v2919 = vadd.f32 %v2609, %v2846
  %v2920 = vadd.f32 %v2610, %v2849
  %v2921 = vadd.f32 %v2611, %v2852
  %v2922 = vadd.f32 %v2612, %v2855
  %v2923 = vadd.f32 %v2613, %v2858
  %v2924 = vrot.slane %v76, 2
  %v2925 = vrot.slane %v77, 2
  %v2926 = vsel %vm905, %v2924, %v2925
  %v2927 = vrot.slane %v78, 2
  %v2928 = vsel %vm905, %v2925, %v2927
  %v2929 = vrot.slane %v130, 2
  %v2930 = vrot.slane %v131, 2
  %v2931 = vsel %vm905, %v2929, %v2930
  %v2932 = vrot.slane %v132, 2
  %v2933 = vsel %vm905, %v2930, %v2932
  %s2938 = scalar_lea.vmem %s1, 1024
  %v2939 = vld [vmem:[%s2938] sm:$0xff]
  %v2940 = vld [vmem:[%s2938 + $0x8] sm:$0xff]
  %v2941 = vld [vmem:[%s2938 + $0x10] sm:$0xff]
  %v2942 = vld [vmem:[%s2938 + $0x18] sm:$0xff]
  %v2943 = vld [vmem:[%s2938 + $0x20] sm:$0xff]
  %v2944 = vld [vmem:[%s2938 + $0x28] sm:$0xff]
  %v2945 = vld [vmem:[%s2938 + $0x30] sm:$0xff]
  %v2946 = vld [vmem:[%s2938 + $0x38] sm:$0xff]
  %v2947 = vld [vmem:[%s2938 + $0x40] sm:$0xff]
  %v2948 = vld [vmem:[%s2938 + $0x48] sm:$0xff]
  %v2949 = vld [vmem:[%s2938 + $0x50] sm:$0xff]
  %v2950 = vld [vmem:[%s2938 + $0x58] sm:$0xff]
  %v2951 = vld [vmem:[%s2938 + $0x60] sm:$0xff]
  %v2952 = vld [vmem:[%s2938 + $0x68] sm:$0xff]
  %v2953 = vld [vmem:[%s2938 + $0x70] sm:$0xff]
  %v2954 = vld [vmem:[%s2938 + $0x78] sm:$0xff]
  %2955 = vmatpush.msra.mxu0 %v2954
  %2956 = vmatpush.msra.mxu0 %v2953
  %2957 = vmatpush.msra.mxu0 %v2952
  %2958 = vmatpush.msra.mxu0 %v2951
  %2959 = vmatpush.msra.mxu0 %v2950
  %2960 = vmatpush.msra.mxu0 %v2949
  %2961 = vmatpush.msra.mxu0 %v2948
  %2962 = vmatpush.msra.mxu0 %v2947
  %2963 = vmatpush.msra.mxu0 %v2946
  %2964 = vmatpush.msra.mxu0 %v2945
  %2965 = vmatpush.msra.mxu0 %v2944
  %2966 = vmatpush.msra.mxu0 %v2943
  %2967 = vmatpush.msra.mxu0 %v2942
  %2968 = vmatpush.msra.mxu0 %v2941
  %2969 = vmatpush.msra.mxu0 %v2940
  %2970 = vmatpush.msra.mxu0 %v2939
  %2971 = vmatmul.f32.gmra.mxu0 %v918
  %v2972 = vpop.f32.mrf.mxu0
  %v2973 = vadd.f32 0.0, %v2972
  %2974 = vmatmul.f32.gmra.mxu0 %v920
  %v2975 = vpop.f32.mrf.mxu0
  %v2976 = vadd.f32 0.0, %v2975
  %2977 = vmatmul.f32.gmra.mxu0 %v923
  %v2978 = vpop.f32.mrf.mxu0
  %v2979 = vadd.f32 0.0, %v2978
  %2980 = vmatmul.f32.gmra.mxu0 %v925
  %v2981 = vpop.f32.mrf.mxu0
  %v2982 = vadd.f32 0.0, %v2981
  %2983 = vmatmul.f32.gmra.mxu0 %v928
  %v2984 = vpop.f32.mrf.mxu0
  %v2985 = vadd.f32 0.0, %v2984
  %2986 = vmatmul.f32.gmra.mxu0 %v930
  %v2987 = vpop.f32.mrf.mxu0
  %v2988 = vadd.f32 0.0, %v2987
  %2989 = vmatmul.f32.gmra.mxu0 %v933
  %v2990 = vpop.f32.mrf.mxu0
  %v2991 = vadd.f32 0.0, %v2990
  %2992 = vmatmul.f32.gmra.mxu0 %v935
  %v2993 = vpop.f32.mrf.mxu0
  %v2994 = vadd.f32 0.0, %v2993
  %2995 = vmatmul.f32.gmra.mxu0 %v938
  %v2996 = vpop.f32.mrf.mxu0
  %v2997 = vadd.f32 0.0, %v2996
  %2998 = vmatmul.f32.gmra.mxu0 %v940
  %v2999 = vpop.f32.mrf.mxu0
  %v3000 = vadd.f32 0.0, %v2999
  %3001 = vmatmul.f32.gmra.mxu0 %v943
  %v3002 = vpop.f32.mrf.mxu0
  %v3003 = vadd.f32 0.0, %v3002
  %3004 = vmatmul.f32.gmra.mxu0 %v945
  %v3005 = vpop.f32.mrf.mxu0
  %v3006 = vadd.f32 0.0, %v3005
  %3007 = vmatmul.f32.gmra.mxu0 %v948
  %v3008 = vpop.f32.mrf.mxu0
  %v3009 = vadd.f32 0.0, %v3008
  %3010 = vmatmul.f32.gmra.mxu0 %v950
  %v3011 = vpop.f32.mrf.mxu0
  %v3012 = vadd.f32 0.0, %v3011
  %3013 = vmatmul.f32.gmra.mxu0 %v953
  %v3014 = vpop.f32.mrf.mxu0
  %v3015 = vadd.f32 0.0, %v3014
  %3016 = vmatmul.f32.gmra.mxu0 %v955
  %v3017 = vpop.f32.mrf.mxu0
  %v3018 = vadd.f32 0.0, %v3017
  %3019 = vmatmul.f32.gmra.mxu0 %v958
  %v3020 = vpop.f32.mrf.mxu0
  %v3021 = vadd.f32 0.0, %v3020
  %3022 = vmatmul.f32.gmra.mxu0 %v960
  %v3023 = vpop.f32.mrf.mxu0
  %v3024 = vadd.f32 0.0, %v3023
  %3025 = vmatmul.f32.gmra.mxu0 %v963
  %v3026 = vpop.f32.mrf.mxu0
  %v3027 = vadd.f32 0.0, %v3026
  %3028 = vmatmul.f32.gmra.mxu0 %v965
  %v3029 = vpop.f32.mrf.mxu0
  %v3030 = vadd.f32 0.0, %v3029
  %3031 = vmatmul.f32.gmra.mxu0 %v968
  %v3032 = vpop.f32.mrf.mxu0
  %v3033 = vadd.f32 0.0, %v3032
  %3034 = vmatmul.f32.gmra.mxu0 %v970
  %v3035 = vpop.f32.mrf.mxu0
  %v3036 = vadd.f32 0.0, %v3035
  %3037 = vmatmul.f32.gmra.mxu0 %v973
  %v3038 = vpop.f32.mrf.mxu0
  %v3039 = vadd.f32 0.0, %v3038
  %3040 = vmatmul.f32.gmra.mxu0 %v975
  %v3041 = vpop.f32.mrf.mxu0
  %v3042 = vadd.f32 0.0, %v3041
  %3043 = vmatmul.f32.gmra.mxu0 %v978
  %v3044 = vpop.f32.mrf.mxu0
  %v3045 = vadd.f32 0.0, %v3044
  %3046 = vmatmul.f32.gmra.mxu0 %v980
  %v3047 = vpop.f32.mrf.mxu0
  %v3048 = vadd.f32 0.0, %v3047
  %3049 = vmatmul.f32.gmra.mxu0 %v983
  %v3050 = vpop.f32.mrf.mxu0
  %v3051 = vadd.f32 0.0, %v3050
  %3052 = vmatmul.f32.gmra.mxu0 %v985
  %v3053 = vpop.f32.mrf.mxu0
  %v3054 = vadd.f32 0.0, %v3053
  %3055 = vmatmul.f32.gmra.mxu0 %v2022
  %v3056 = vpop.f32.mrf.mxu0
  %v3057 = vadd.f32 0.0, %v3056
  %3058 = vmatmul.f32.gmra.mxu0 %v2024
  %v3059 = vpop.f32.mrf.mxu0
  %v3060 = vadd.f32 0.0, %v3059
  %3061 = vmatmul.f32.gmra.mxu0 %v2926
  %v3062 = vpop.f32.mrf.mxu0
  %v3063 = vadd.f32 0.0, %v3062
  %3064 = vmatmul.f32.gmra.mxu0 %v2928
  %v3065 = vpop.f32.mrf.mxu0
  %v3066 = vadd.f32 0.0, %v3065
  %3067 = vmatmul.f32.gmra.mxu0 %v998
  %v3068 = vpop.f32.mrf.mxu0
  %v3069 = vadd.f32 0.0, %v3068
  %3070 = vmatmul.f32.gmra.mxu0 %v1000
  %v3071 = vpop.f32.mrf.mxu0
  %v3072 = vadd.f32 0.0, %v3071
  %3073 = vmatmul.f32.gmra.mxu0 %v1003
  %v3074 = vpop.f32.mrf.mxu0
  %v3075 = vadd.f32 0.0, %v3074
  %3076 = vmatmul.f32.gmra.mxu0 %v1005
  %v3077 = vpop.f32.mrf.mxu0
  %v3078 = vadd.f32 0.0, %v3077
  %3079 = vmatmul.f32.gmra.mxu0 %v1008
  %v3080 = vpop.f32.mrf.mxu0
  %v3081 = vadd.f32 0.0, %v3080
  %3082 = vmatmul.f32.gmra.mxu0 %v1010
  %v3083 = vpop.f32.mrf.mxu0
  %v3084 = vadd.f32 0.0, %v3083
  %3085 = vmatmul.f32.gmra.mxu0 %v1013
  %v3086 = vpop.f32.mrf.mxu0
  %v3087 = vadd.f32 0.0, %v3086
  %3088 = vmatmul.f32.gmra.mxu0 %v1015
  %v3089 = vpop.f32.mrf.mxu0
  %v3090 = vadd.f32 0.0, %v3089
  %3091 = vmatmul.f32.gmra.mxu0 %v1018
  %v3092 = vpop.f32.mrf.mxu0
  %v3093 = vadd.f32 0.0, %v3092
  %3094 = vmatmul.f32.gmra.mxu0 %v1020
  %v3095 = vpop.f32.mrf.mxu0
  %v3096 = vadd.f32 0.0, %v3095
  %3097 = vmatmul.f32.gmra.mxu0 %v1023
  %v3098 = vpop.f32.mrf.mxu0
  %v3099 = vadd.f32 0.0, %v3098
  %3100 = vmatmul.f32.gmra.mxu0 %v1025
  %v3101 = vpop.f32.mrf.mxu0
  %v3102 = vadd.f32 0.0, %v3101
  %3103 = vmatmul.f32.gmra.mxu0 %v1028
  %v3104 = vpop.f32.mrf.mxu0
  %v3105 = vadd.f32 0.0, %v3104
  %3106 = vmatmul.f32.gmra.mxu0 %v1030
  %v3107 = vpop.f32.mrf.mxu0
  %v3108 = vadd.f32 0.0, %v3107
  %3109 = vmatmul.f32.gmra.mxu0 %v1033
  %v3110 = vpop.f32.mrf.mxu0
  %v3111 = vadd.f32 0.0, %v3110
  %3112 = vmatmul.f32.gmra.mxu0 %v1035
  %v3113 = vpop.f32.mrf.mxu0
  %v3114 = vadd.f32 0.0, %v3113
  %3115 = vmatmul.f32.gmra.mxu0 %v1038
  %v3116 = vpop.f32.mrf.mxu0
  %v3117 = vadd.f32 0.0, %v3116
  %3118 = vmatmul.f32.gmra.mxu0 %v1040
  %v3119 = vpop.f32.mrf.mxu0
  %v3120 = vadd.f32 0.0, %v3119
  %3121 = vmatmul.f32.gmra.mxu0 %v1043
  %v3122 = vpop.f32.mrf.mxu0
  %v3123 = vadd.f32 0.0, %v3122
  %3124 = vmatmul.f32.gmra.mxu0 %v1045
  %v3125 = vpop.f32.mrf.mxu0
  %v3126 = vadd.f32 0.0, %v3125
  %3127 = vmatmul.f32.gmra.mxu0 %v1048
  %v3128 = vpop.f32.mrf.mxu0
  %v3129 = vadd.f32 0.0, %v3128
  %3130 = vmatmul.f32.gmra.mxu0 %v1050
  %v3131 = vpop.f32.mrf.mxu0
  %v3132 = vadd.f32 0.0, %v3131
  %3133 = vmatmul.f32.gmra.mxu0 %v1053
  %v3134 = vpop.f32.mrf.mxu0
  %v3135 = vadd.f32 0.0, %v3134
  %3136 = vmatmul.f32.gmra.mxu0 %v1055
  %v3137 = vpop.f32.mrf.mxu0
  %v3138 = vadd.f32 0.0, %v3137
  %3139 = vmatmul.f32.gmra.mxu0 %v1058
  %v3140 = vpop.f32.mrf.mxu0
  %v3141 = vadd.f32 0.0, %v3140
  %3142 = vmatmul.f32.gmra.mxu0 %v1060
  %v3143 = vpop.f32.mrf.mxu0
  %v3144 = vadd.f32 0.0, %v3143
  %3145 = vmatmul.f32.gmra.mxu0 %v1063
  %v3146 = vpop.f32.mrf.mxu0
  %v3147 = vadd.f32 0.0, %v3146
  %3148 = vmatmul.f32.gmra.mxu0 %v1065
  %v3149 = vpop.f32.mrf.mxu0
  %v3150 = vadd.f32 0.0, %v3149
  %3151 = vmatmul.f32.gmra.mxu0 %v2027
  %v3152 = vpop.f32.mrf.mxu0
  %v3153 = vadd.f32 0.0, %v3152
  %3154 = vmatmul.f32.gmra.mxu0 %v2029
  %v3155 = vpop.f32.mrf.mxu0
  %v3156 = vadd.f32 0.0, %v3155
  %3157 = vmatmul.f32.gmra.mxu0 %v2931
  %v3158 = vpop.f32.mrf.mxu0
  %v3159 = vadd.f32 0.0, %v3158
  %3160 = vmatmul.f32.gmra.mxu0 %v2933
  %v3161 = vpop.f32.mrf.mxu0
  %v3162 = vadd.f32 0.0, %v3161
  %3163 = vdwg.mxu0
  %v3164 = vadd.f32 %v2860, %v2973
  %v3165 = vadd.f32 %v2861, %v2976
  %v3166 = vadd.f32 %v2862, %v2979
  %v3167 = vadd.f32 %v2863, %v2982
  %v3168 = vadd.f32 %v2864, %v2985
  %v3169 = vadd.f32 %v2865, %v2988
  %v3170 = vadd.f32 %v2866, %v2991
  %v3171 = vadd.f32 %v2867, %v2994
  %v3172 = vadd.f32 %v2868, %v2997
  %v3173 = vadd.f32 %v2869, %v3000
  %v3174 = vadd.f32 %v2870, %v3003
  %v3175 = vadd.f32 %v2871, %v3006
  %v3176 = vadd.f32 %v2872, %v3009
  %v3177 = vadd.f32 %v2873, %v3012
  %v3178 = vadd.f32 %v2874, %v3015
  %v3179 = vadd.f32 %v2875, %v3018
  %v3180 = vadd.f32 %v2876, %v3021
  %v3181 = vadd.f32 %v2877, %v3024
  %v3182 = vadd.f32 %v2878, %v3027
  %v3183 = vadd.f32 %v2879, %v3030
  %v3184 = vadd.f32 %v2880, %v3033
  %v3185 = vadd.f32 %v2881, %v3036
  %v3186 = vadd.f32 %v2882, %v3039
  %v3187 = vadd.f32 %v2883, %v3042
  %v3188 = vadd.f32 %v2884, %v3045
  %v3189 = vadd.f32 %v2885, %v3048
  %v3190 = vadd.f32 %v2886, %v3051
  %v3191 = vadd.f32 %v2887, %v3054
  %v3192 = vadd.f32 %v2888, %v3057
  %v3193 = vadd.f32 %v2889, %v3060
  %v3194 = vadd.f32 %v2890, %v3063
  %v3195 = vadd.f32 %v2891, %v3066
  %v3196 = vadd.f32 %v2892, %v3069
  %v3197 = vadd.f32 %v2893, %v3072
  %v3198 = vadd.f32 %v2894, %v3075
  %v3199 = vadd.f32 %v2895, %v3078
  %v3200 = vadd.f32 %v2896, %v3081
  %v3201 = vadd.f32 %v2897, %v3084
  %v3202 = vadd.f32 %v2898, %v3087
  %v3203 = vadd.f32 %v2899, %v3090
  %v3204 = vadd.f32 %v2900, %v3093
  %v3205 = vadd.f32 %v2901, %v3096
  %v3206 = vadd.f32 %v2902, %v3099
  %v3207 = vadd.f32 %v2903, %v3102
  %v3208 = vadd.f32 %v2904, %v3105
  %v3209 = vadd.f32 %v2905, %v3108
  %v3210 = vadd.f32 %v2906, %v3111
  %v3211 = vadd.f32 %v2907, %v3114
  %v3212 = vadd.f32 %v2908, %v3117
  %v3213 = vadd.f32 %v2909, %v3120
  %v3214 = vadd.f32 %v2910, %v3123
  %v3215 = vadd.f32 %v2911, %v3126
  %v3216 = vadd.f32 %v2912, %v3129
  %v3217 = vadd.f32 %v2913, %v3132
  %v3218 = vadd.f32 %v2914, %v3135
  %v3219 = vadd.f32 %v2915, %v3138
  %v3220 = vadd.f32 %v2916, %v3141
  %v3221 = vadd.f32 %v2917, %v3144
  %v3222 = vadd.f32 %v2918, %v3147
  %v3223 = vadd.f32 %v2919, %v3150
  %v3224 = vadd.f32 %v2920, %v3153
  %v3225 = vadd.f32 %v2921, %v3156
  %v3226 = vadd.f32 %v2922, %v3159
  %v3227 = vadd.f32 %v2923, %v3162
  %v3228 = vld [vmem:[%s2] sm:$0x1]
  %v3230 = vperm.slane %v3228, 0
  %v3232 = vadd.f32 %v3164, %v3230
  %v3233 = vadd.f32 %v3165, %v3230
  %v3234 = vadd.f32 %v3166, %v3230
  %v3235 = vadd.f32 %v3167, %v3230
  %v3236 = vadd.f32 %v3168, %v3230
  %v3237 = vadd.f32 %v3169, %v3230
  %v3238 = vadd.f32 %v3170, %v3230
  %v3239 = vadd.f32 %v3171, %v3230
  %v3240 = vadd.f32 %v3172, %v3230
  %v3241 = vadd.f32 %v3173, %v3230
  %v3242 = vadd.f32 %v3174, %v3230
  %v3243 = vadd.f32 %v3175, %v3230
  %v3244 = vadd.f32 %v3176, %v3230
  %v3245 = vadd.f32 %v3177, %v3230
  %v3246 = vadd.f32 %v3178, %v3230
  %v3247 = vadd.f32 %v3179, %v3230
  %v3248 = vadd.f32 %v3180, %v3230
  %v3249 = vadd.f32 %v3181, %v3230
  %v3250 = vadd.f32 %v3182, %v3230
  %v3251 = vadd.f32 %v3183, %v3230
  %v3252 = vadd.f32 %v3184, %v3230
  %v3253 = vadd.f32 %v3185, %v3230
  %v3254 = vadd.f32 %v3186, %v3230
  %v3255 = vadd.f32 %v3187, %v3230
  %v3256 = vadd.f32 %v3188, %v3230
  %v3257 = vadd.f32 %v3189, %v3230
  %v3258 = vadd.f32 %v3190, %v3230
  %v3259 = vadd.f32 %v3191, %v3230
  %v3260 = vadd.f32 %v3192, %v3230
  %v3261 = vadd.f32 %v3193, %v3230
  %v3262 = vadd.f32 %v3194, %v3230
  %v3263 = vadd.f32 %v3195, %v3230
  %v3264 = vadd.f32 %v3196, %v3230
  %v3265 = vadd.f32 %v3197, %v3230
  %v3266 = vadd.f32 %v3198, %v3230
  %v3267 = vadd.f32 %v3199, %v3230
  %v3268 = vadd.f32 %v3200, %v3230
  %v3269 = vadd.f32 %v3201, %v3230
  %v3270 = vadd.f32 %v3202, %v3230
  %v3271 = vadd.f32 %v3203, %v3230
  %v3272 = vadd.f32 %v3204, %v3230
  %v3273 = vadd.f32 %v3205, %v3230
  %v3274 = vadd.f32 %v3206, %v3230
  %v3275 = vadd.f32 %v3207, %v3230
  %v3276 = vadd.f32 %v3208, %v3230
  %v3277 = vadd.f32 %v3209, %v3230
  %v3278 = vadd.f32 %v3210, %v3230
  %v3279 = vadd.f32 %v3211, %v3230
  %v3280 = vadd.f32 %v3212, %v3230
  %v3281 = vadd.f32 %v3213, %v3230
  %v3282 = vadd.f32 %v3214, %v3230
  %v3283 = vadd.f32 %v3215, %v3230
  %v3284 = vadd.f32 %v3216, %v3230
  %v3285 = vadd.f32 %v3217, %v3230
  %v3286 = vadd.f32 %v3218, %v3230
  %v3287 = vadd.f32 %v3219, %v3230
  %v3288 = vadd.f32 %v3220, %v3230
  %v3289 = vadd.f32 %v3221, %v3230
  %v3290 = vadd.f32 %v3222, %v3230
  %v3291 = vadd.f32 %v3223, %v3230
  %v3292 = vadd.f32 %v3224, %v3230
  %v3293 = vadd.f32 %v3225, %v3230
  %v3294 = vadd.f32 %v3226, %v3230
  %v3295 = vadd.f32 %v3227, %v3230
  %vm3296 = vcmp.ge.f32.partialorder %v3232, 0.0
  %vm3297 = vcmp.ge.f32.partialorder %v3233, 0.0
  %vm3298 = vcmp.ge.f32.partialorder %v3234, 0.0
  %vm3299 = vcmp.ge.f32.partialorder %v3235, 0.0
  %vm3300 = vcmp.ge.f32.partialorder %v3236, 0.0
  %vm3301 = vcmp.ge.f32.partialorder %v3237, 0.0
  %vm3302 = vcmp.ge.f32.partialorder %v3238, 0.0
  %vm3303 = vcmp.ge.f32.partialorder %v3239, 0.0
  %vm3304 = vcmp.ge.f32.partialorder %v3240, 0.0
  %vm3305 = vcmp.ge.f32.partialorder %v3241, 0.0
  %vm3306 = vcmp.ge.f32.partialorder %v3242, 0.0
  %vm3307 = vcmp.ge.f32.partialorder %v3243, 0.0
  %vm3308 = vcmp.ge.f32.partialorder %v3244, 0.0
  %vm3309 = vcmp.ge.f32.partialorder %v3245, 0.0
  %vm3310 = vcmp.ge.f32.partialorder %v3246, 0.0
  %vm3311 = vcmp.ge.f32.partialorder %v3247, 0.0
  %vm3312 = vcmp.ge.f32.partialorder %v3248, 0.0
  %vm3313 = vcmp.ge.f32.partialorder %v3249, 0.0
  %vm3314 = vcmp.ge.f32.partialorder %v3250, 0.0
  %vm3315 = vcmp.ge.f32.partialorder %v3251, 0.0
  %vm3316 = vcmp.ge.f32.partialorder %v3252, 0.0
  %vm3317 = vcmp.ge.f32.partialorder %v3253, 0.0
  %vm3318 = vcmp.ge.f32.partialorder %v3254, 0.0
  %vm3319 = vcmp.ge.f32.partialorder %v3255, 0.0
  %vm3320 = vcmp.ge.f32.partialorder %v3256, 0.0
  %vm3321 = vcmp.ge.f32.partialorder %v3257, 0.0
  %vm3322 = vcmp.ge.f32.partialorder %v3258, 0.0
  %vm3323 = vcmp.ge.f32.partialorder %v3259, 0.0
  %vm3324 = vcmp.ge.f32.partialorder %v3260, 0.0
  %vm3325 = vcmp.ge.f32.partialorder %v3261, 0.0
  %vm3326 = vcmp.ge.f32.partialorder %v3262, 0.0
  %vm3327 = vcmp.ge.f32.partialorder %v3263, 0.0
  %vm3328 = vcmp.ge.f32.partialorder %v3264, 0.0
  %vm3329 = vcmp.ge.f32.partialorder %v3265, 0.0
  %vm3330 = vcmp.ge.f32.partialorder %v3266, 0.0
  %vm3331 = vcmp.ge.f32.partialorder %v3267, 0.0
  %vm3332 = vcmp.ge.f32.partialorder %v3268, 0.0
  %vm3333 = vcmp.ge.f32.partialorder %v3269, 0.0
  %vm3334 = vcmp.ge.f32.partialorder %v3270, 0.0
  %vm3335 = vcmp.ge.f32.partialorder %v3271, 0.0
  %vm3336 = vcmp.ge.f32.partialorder %v3272, 0.0
  %vm3337 = vcmp.ge.f32.partialorder %v3273, 0.0
  %vm3338 = vcmp.ge.f32.partialorder %v3274, 0.0
  %vm3339 = vcmp.ge.f32.partialorder %v3275, 0.0
  %vm3340 = vcmp.ge.f32.partialorder %v3276, 0.0
  %vm3341 = vcmp.ge.f32.partialorder %v3277, 0.0
  %vm3342 = vcmp.ge.f32.partialorder %v3278, 0.0
  %vm3343 = vcmp.ge.f32.partialorder %v3279, 0.0
  %vm3344 = vcmp.ge.f32.partialorder %v3280, 0.0
  %vm3345 = vcmp.ge.f32.partialorder %v3281, 0.0
  %vm3346 = vcmp.ge.f32.partialorder %v3282, 0.0
  %vm3347 = vcmp.ge.f32.partialorder %v3283, 0.0
  %vm3348 = vcmp.ge.f32.partialorder %v3284, 0.0
  %vm3349 = vcmp.ge.f32.partialorder %v3285, 0.0
  %vm3350 = vcmp.ge.f32.partialorder %v3286, 0.0
  %vm3351 = vcmp.ge.f32.partialorder %v3287, 0.0
  %vm3352 = vcmp.ge.f32.partialorder %v3288, 0.0
  %vm3353 = vcmp.ge.f32.partialorder %v3289, 0.0
  %vm3354 = vcmp.ge.f32.partialorder %v3290, 0.0
  %vm3355 = vcmp.ge.f32.partialorder %v3291, 0.0
  %vm3356 = vcmp.ge.f32.partialorder %v3292, 0.0
  %vm3357 = vcmp.ge.f32.partialorder %v3293, 0.0
  %vm3358 = vcmp.ge.f32.partialorder %v3294, 0.0
  %vm3359 = vcmp.ge.f32.partialorder %v3295, 0.0
  %v3360 = vmul.f32 %v3232, 0.2
  %v3361 = vmul.f32 %v3233, 0.2
  %v3362 = vmul.f32 %v3234, 0.2
  %v3363 = vmul.f32 %v3235, 0.2
  %v3364 = vmul.f32 %v3236, 0.2
  %v3365 = vmul.f32 %v3237, 0.2
  %v3366 = vmul.f32 %v3238, 0.2
  %v3367 = vmul.f32 %v3239, 0.2
  %v3368 = vmul.f32 %v3240, 0.2
  %v3369 = vmul.f32 %v3241, 0.2
  %v3370 = vmul.f32 %v3242, 0.2
  %v3371 = vmul.f32 %v3243, 0.2
  %v3372 = vmul.f32 %v3244, 0.2
  %v3373 = vmul.f32 %v3245, 0.2
  %v3374 = vmul.f32 %v3246, 0.2
  %v3375 = vmul.f32 %v3247, 0.2
  %v3376 = vmul.f32 %v3248, 0.2
  %v3377 = vmul.f32 %v3249, 0.2
  %v3378 = vmul.f32 %v3250, 0.2
  %v3379 = vmul.f32 %v3251, 0.2
  %v3380 = vmul.f32 %v3252, 0.2
  %v3381 = vmul.f32 %v3253, 0.2
  %v3382 = vmul.f32 %v3254, 0.2
  %v3383 = vmul.f32 %v3255, 0.2
  %v3384 = vmul.f32 %v3256, 0.2
  %v3385 = vmul.f32 %v3257, 0.2
  %v3386 = vmul.f32 %v3258, 0.2
  %v3387 = vmul.f32 %v3259, 0.2
  %v3388 = vmul.f32 %v3260, 0.2
  %v3389 = vmul.f32 %v3261, 0.2
  %v3390 = vmul.f32 %v3262, 0.2
  %v3391 = vmul.f32 %v3263, 0.2
  %v3392 = vmul.f32 %v3264, 0.2
  %v3393 = vmul.f32 %v3265, 0.2
  %v3394 = vmul.f32 %v3266, 0.2
  %v3395 = vmul.f32 %v3267, 0.2
  %v3396 = vmul.f32 %v3268, 0.2
  %v3397 = vmul.f32 %v3269, 0.2
  %v3398 = vmul.f32 %v3270, 0.2
  %v3399 = vmul.f32 %v3271, 0.2
  %v3400 = vmul.f32 %v3272, 0.2
  %v3401 = vmul.f32 %v3273, 0.2
  %v3402 = vmul.f32 %v3274, 0.2
  %v3403 = vmul.f32 %v3275, 0.2
  %v3404 = vmul.f32 %v3276, 0.2
  %v3405 = vmul.f32 %v3277, 0.2
  %v3406 = vmul.f32 %v3278, 0.2
  %v3407 = vmul.f32 %v3279, 0.2
  %v3408 = vmul.f32 %v3280, 0.2
  %v3409 = vmul.f32 %v3281, 0.2
  %v3410 = vmul.f32 %v3282, 0.2
  %v3411 = vmul.f32 %v3283, 0.2
  %v3412 = vmul.f32 %v3284, 0.2
  %v3413 = vmul.f32 %v3285, 0.2
  %v3414 = vmul.f32 %v3286, 0.2
  %v3415 = vmul.f32 %v3287, 0.2
  %v3416 = vmul.f32 %v3288, 0.2
  %v3417 = vmul.f32 %v3289, 0.2
  %v3418 = vmul.f32 %v3290, 0.2
  %v3419 = vmul.f32 %v3291, 0.2
  %v3420 = vmul.f32 %v3292, 0.2
  %v3421 = vmul.f32 %v3293, 0.2
  %v3422 = vmul.f32 %v3294, 0.2
  %v3423 = vmul.f32 %v3295, 0.2
  %v3424 = vsel %vm3296, %v3232, %v3360
  %v3425 = vsel %vm3297, %v3233, %v3361
  %v3426 = vsel %vm3298, %v3234, %v3362
  %v3427 = vsel %vm3299, %v3235, %v3363
  %v3428 = vsel %vm3300, %v3236, %v3364
  %v3429 = vsel %vm3301, %v3237, %v3365
  %v3430 = vsel %vm3302, %v3238, %v3366
  %v3431 = vsel %vm3303, %v3239, %v3367
  %v3432 = vsel %vm3304, %v3240, %v3368
  %v3433 = vsel %vm3305, %v3241, %v3369
  %v3434 = vsel %vm3306, %v3242, %v3370
  %v3435 = vsel %vm3307, %v3243, %v3371
  %v3436 = vsel %vm3308, %v3244, %v3372
  %v3437 = vsel %vm3309, %v3245, %v3373
  %v3438 = vsel %vm3310, %v3246, %v3374
  %v3439 = vsel %vm3311, %v3247, %v3375
  %v3440 = vsel %vm3312, %v3248, %v3376
  %v3441 = vsel %vm3313, %v3249, %v3377
  %v3442 = vsel %vm3314, %v3250, %v3378
  %v3443 = vsel %vm3315, %v3251, %v3379
  %v3444 = vsel %vm3316, %v3252, %v3380
  %v3445 = vsel %vm3317, %v3253, %v3381
  %v3446 = vsel %vm3318, %v3254, %v3382
  %v3447 = vsel %vm3319, %v3255, %v3383
  %v3448 = vsel %vm3320, %v3256, %v3384
  %v3449 = vsel %vm3321, %v3257, %v3385
  %v3450 = vsel %vm3322, %v3258, %v3386
  %v3451 = vsel %vm3323, %v3259, %v3387
  %v3452 = vsel %vm3324, %v3260, %v3388
  %v3453 = vsel %vm3325, %v3261, %v3389
  %v3454 = vsel %vm3326, %v3262, %v3390
  %v3455 = vsel %vm3327, %v3263, %v3391
  %v3456 = vsel %vm3328, %v3264, %v3392
  %v3457 = vsel %vm3329, %v3265, %v3393
  %v3458 = vsel %vm3330, %v3266, %v3394
  %v3459 = vsel %vm3331, %v3267, %v3395
  %v3460 = vsel %vm3332, %v3268, %v3396
  %v3461 = vsel %vm3333, %v3269, %v3397
  %v3462 = vsel %vm3334, %v3270, %v3398
  %v3463 = vsel %vm3335, %v3271, %v3399
  %v3464 = vsel %vm3336, %v3272, %v3400
  %v3465 = vsel %vm3337, %v3273, %v3401
  %v3466 = vsel %vm3338, %v3274, %v3402
  %v3467 = vsel %vm3339, %v3275, %v3403
  %v3468 = vsel %vm3340, %v3276, %v3404
  %v3469 = vsel %vm3341, %v3277, %v3405
  %v3470 = vsel %vm3342, %v3278, %v3406
  %v3471 = vsel %vm3343, %v3279, %v3407
  %v3472 = vsel %vm3344, %v3280, %v3408
  %v3473 = vsel %vm3345, %v3281, %v3409
  %v3474 = vsel %vm3346, %v3282, %v3410
  %v3475 = vsel %vm3347, %v3283, %v3411
  %v3476 = vsel %vm3348, %v3284, %v3412
  %v3477 = vsel %vm3349, %v3285, %v3413
  %v3478 = vsel %vm3350, %v3286, %v3414
  %v3479 = vsel %vm3351, %v3287, %v3415
  %v3480 = vsel %vm3352, %v3288, %v3416
  %v3481 = vsel %vm3353, %v3289, %v3417
  %v3482 = vsel %vm3354, %v3290, %v3418
  %v3483 = vsel %vm3355, %v3291, %v3419
  %v3484 = vsel %vm3356, %v3292, %v3420
  %v3485 = vsel %vm3357, %v3293, %v3421
  %v3486 = vsel %vm3358, %v3294, %v3422
  %v3487 = vsel %vm3359, %v3295, %v3423
  %v3488 = vld [vmem:[%s3] sm:$0xff]
  %v3489 = vld [vmem:[%s3 + $0x8] sm:$0xff]
  %v3490 = vld [vmem:[%s3 + $0x10] sm:$0xff]
  %v3491 = vld [vmem:[%s3 + $0x18] sm:$0xff]
  %v3492 = vld [vmem:[%s3 + $0x20] sm:$0xff]
  %v3493 = vld [vmem:[%s3 + $0x28] sm:$0xff]
  %v3494 = vld [vmem:[%s3 + $0x30] sm:$0xff]
  %v3495 = vld [vmem:[%s3 + $0x38] sm:$0xff]
  %v3496 = vld [vmem:[%s3 + $0x40] sm:$0xff]
  %v3497 = vld [vmem:[%s3 + $0x48] sm:$0xff]
  %v3498 = vld [vmem:[%s3 + $0x50] sm:$0xff]
  %v3499 = vld [vmem:[%s3 + $0x58] sm:$0xff]
  %v3500 = vld [vmem:[%s3 + $0x60] sm:$0xff]
  %v3501 = vld [vmem:[%s3 + $0x68] sm:$0xff]
  %v3502 = vld [vmem:[%s3 + $0x70] sm:$0xff]
  %v3503 = vld [vmem:[%s3 + $0x78] sm:$0xff]
  %v3504 = vld [vmem:[%s3 + $0x80] sm:$0xff]
  %v3505 = vld [vmem:[%s3 + $0x88] sm:$0xff]
  %v3506 = vld [vmem:[%s3 + $0x90] sm:$0xff]
  %v3507 = vld [vmem:[%s3 + $0x98] sm:$0xff]
  %v3508 = vld [vmem:[%s3 + $0xa0] sm:$0xff]
  %v3509 = vld [vmem:[%s3 + $0xa8] sm:$0xff]
  %v3510 = vld [vmem:[%s3 + $0xb0] sm:$0xff]
  %v3511 = vld [vmem:[%s3 + $0xb8] sm:$0xff]
  %v3512 = vld [vmem:[%s3 + $0xc0] sm:$0xff]
  %v3513 = vld [vmem:[%s3 + $0xc8] sm:$0xff]
  %v3514 = vld [vmem:[%s3 + $0xd0] sm:$0xff]
  %v3515 = vld [vmem:[%s3 + $0xd8] sm:$0xff]
  %v3516 = vld [vmem:[%s3 + $0xe0] sm:$0xff]
  %v3517 = vld [vmem:[%s3 + $0xe8] sm:$0xff]
  %v3518 = vld [vmem:[%s3 + $0xf0] sm:$0xff]
  %v3519 = vld [vmem:[%s3 + $0xf8] sm:$0xff]
  %v3520 = vld [vmem:[%s3 + $0x100] sm:$0xff]
  %v3521 = vld [vmem:[%s3 + $0x108] sm:$0xff]
  %v3522 = vld [vmem:[%s3 + $0x110] sm:$0xff]
  %v3523 = vld [vmem:[%s3 + $0x118] sm:$0xff]
  %v3524 = vld [vmem:[%s3 + $0x120] sm:$0xff]
  %v3525 = vld [vmem:[%s3 + $0x128] sm:$0xff]
  %v3526 = vld [vmem:[%s3 + $0x130] sm:$0xff]
  %v3527 = vld [vmem:[%s3 + $0x138] sm:$0xff]
  %v3528 = vld [vmem:[%s3 + $0x140] sm:$0xff]
  %v3529 = vld [vmem:[%s3 + $0x148] sm:$0xff]
  %v3530 = vld [vmem:[%s3 + $0x150] sm:$0xff]
  %v3531 = vld [vmem:[%s3 + $0x158] sm:$0xff]
  %v3532 = vld [vmem:[%s3 + $0x160] sm:$0xff]
  %v3533 = vld [vmem:[%s3 + $0x168] sm:$0xff]
  %v3534 = vld [vmem:[%s3 + $0x170] sm:$0xff]
  %v3535 = vld [vmem:[%s3 + $0x178] sm:$0xff]
  %v3536 = vld [vmem:[%s3 + $0x180] sm:$0xff]
  %v3537 = vld [vmem:[%s3 + $0x188] sm:$0xff]
  %v3538 = vld [vmem:[%s3 + $0x190] sm:$0xff]
  %v3539 = vld [vmem:[%s3 + $0x198] sm:$0xff]
  %v3540 = vld [vmem:[%s3 + $0x1a0] sm:$0xff]
  %v3541 = vld [vmem:[%s3 + $0x1a8] sm:$0xff]
  %v3542 = vld [vmem:[%s3 + $0x1b0] sm:$0xff]
  %v3543 = vld [vmem:[%s3 + $0x1b8] sm:$0xff]
  %v3544 = vld [vmem:[%s3 + $0x1c0] sm:$0xff]
  %v3545 = vld [vmem:[%s3 + $0x1c8] sm:$0xff]
  %v3546 = vld [vmem:[%s3 + $0x1d0] sm:$0xff]
  %v3547 = vld [vmem:[%s3 + $0x1d8] sm:$0xff]
  %v3548 = vld [vmem:[%s3 + $0x1e0] sm:$0xff]
  %v3549 = vld [vmem:[%s3 + $0x1e8] sm:$0xff]
  %v3550 = vld [vmem:[%s3 + $0x1f0] sm:$0xff]
  %v3551 = vld [vmem:[%s3 + $0x1f8] sm:$0xff]
  %v3552 = vld [vmem:[%s5] sm:$0xff]
  %v3553 = vld [vmem:[%s5 + $0x8] sm:$0xff]
  %v3554 = vld [vmem:[%s5 + $0x10] sm:$0xff]
  %v3555 = vld [vmem:[%s5 + $0x18] sm:$0xff]
  %v3556 = vld [vmem:[%s5 + $0x20] sm:$0xff]
  %v3557 = vld [vmem:[%s5 + $0x28] sm:$0xff]
  %v3558 = vld [vmem:[%s5 + $0x30] sm:$0xff]
  %v3559 = vld [vmem:[%s5 + $0x38] sm:$0xff]
  %v3560 = vld [vmem:[%s5 + $0x40] sm:$0xff]
  %v3561 = vld [vmem:[%s5 + $0x48] sm:$0xff]
  %v3562 = vld [vmem:[%s5 + $0x50] sm:$0xff]
  %v3563 = vld [vmem:[%s5 + $0x58] sm:$0xff]
  %v3564 = vld [vmem:[%s5 + $0x60] sm:$0xff]
  %v3565 = vld [vmem:[%s5 + $0x68] sm:$0xff]
  %v3566 = vld [vmem:[%s5 + $0x70] sm:$0xff]
  %v3567 = vld [vmem:[%s5 + $0x78] sm:$0xff]
  %v3568 = vld [vmem:[#allocation2] sm:$0x1]
  %v3569 = vmul.f32 %v3424, %v3488
  %v3570 = vmul.f32 %v3425, %v3489
  %v3571 = vmul.f32 %v3426, %v3490
  %v3572 = vmul.f32 %v3427, %v3491
  %v3573 = vmul.f32 %v3428, %v3492
  %v3574 = vmul.f32 %v3429, %v3493
  %v3575 = vmul.f32 %v3430, %v3494
  %v3576 = vmul.f32 %v3431, %v3495
  %v3577 = vmul.f32 %v3432, %v3496
  %v3578 = vmul.f32 %v3433, %v3497
  %v3579 = vmul.f32 %v3434, %v3498
  %v3580 = vmul.f32 %v3435, %v3499
  %v3581 = vmul.f32 %v3436, %v3500
  %v3582 = vmul.f32 %v3437, %v3501
  %v3583 = vmul.f32 %v3438, %v3502
  %v3584 = vmul.f32 %v3439, %v3503
  %v3585 = vmul.f32 %v3440, %v3504
  %v3586 = vmul.f32 %v3441, %v3505
  %v3587 = vmul.f32 %v3442, %v3506
  %v3588 = vmul.f32 %v3443, %v3507
  %v3589 = vmul.f32 %v3444, %v3508
  %v3590 = vmul.f32 %v3445, %v3509
  %v3591 = vmul.f32 %v3446, %v3510
  %v3592 = vmul.f32 %v3447, %v3511
  %v3593 = vmul.f32 %v3448, %v3512
  %v3594 = vmul.f32 %v3449, %v3513
  %v3595 = vmul.f32 %v3450, %v3514
  %v3596 = vmul.f32 %v3451, %v3515
  %v3597 = vmul.f32 %v3452, %v3516
  %v3598 = vmul.f32 %v3453, %v3517
  %v3599 = vmul.f32 %v3454, %v3518
  %v3600 = vmul.f32 %v3455, %v3519
  %v3601 = vmul.f32 %v3456, %v3520
  %v3602 = vmul.f32 %v3457, %v3521
  %v3603 = vmul.f32 %v3458, %v3522
  %v3604 = vmul.f32 %v3459, %v3523
  %v3605 = vmul.f32 %v3460, %v3524
  %v3606 = vmul.f32 %v3461, %v3525
  %v3607 = vmul.f32 %v3462, %v3526
  %v3608 = vmul.f32 %v3463, %v3527
  %v3609 = vmul.f32 %v3464, %v3528
  %v3610 = vmul.f32 %v3465, %v3529
  %v3611 = vmul.f32 %v3466, %v3530
  %v3612 = vmul.f32 %v3467, %v3531
  %v3613 = vmul.f32 %v3468, %v3532
  %v3614 = vmul.f32 %v3469, %v3533
  %v3615 = vmul.f32 %v3470, %v3534
  %v3616 = vmul.f32 %v3471, %v3535
  %v3617 = vmul.f32 %v3472, %v3536
  %v3618 = vmul.f32 %v3473, %v3537
  %v3619 = vmul.f32 %v3474, %v3538
  %v3620 = vmul.f32 %v3475, %v3539
  %v3621 = vmul.f32 %v3476, %v3540
  %v3622 = vmul.f32 %v3477, %v3541
  %v3623 = vmul.f32 %v3478, %v3542
  %v3624 = vmul.f32 %v3479, %v3543
  %v3625 = vmul.f32 %v3480, %v3544
  %v3626 = vmul.f32 %v3481, %v3545
  %v3627 = vmul.f32 %v3482, %v3546
  %v3628 = vmul.f32 %v3483, %v3547
  %v3629 = vmul.f32 %v3484, %v3548
  %v3630 = vmul.f32 %v3485, %v3549
  %v3631 = vmul.f32 %v3486, %v3550
  %v3632 = vmul.f32 %v3487, %v3551
  %vm3633 = vcmask 523264
  %v3634 = vsel %vm3633, %v3569, 0.0
  %3635 = vadd.xlane.f32.xlu0 %v3634
  %v3636 = vpop.xlane.xlu0 %3635
  %v3637 = vsel %vm3633, %v3570, 0.0
  %3638 = vadd.xlane.f32.xlu0 %v3637
  %v3639 = vpop.xlane.xlu0 %3638
  %v3640 = vsel %vm3633, %v3571, 0.0
  %3641 = vadd.xlane.f32.xlu0 %v3640
  %v3642 = vpop.xlane.xlu0 %3641
  %v3643 = vsel %vm3633, %v3572, 0.0
  %3644 = vadd.xlane.f32.xlu0 %v3643
  %v3645 = vpop.xlane.xlu0 %3644
  %v3646 = vsel %vm3633, %v3573, 0.0
  %3647 = vadd.xlane.f32.xlu0 %v3646
  %v3648 = vpop.xlane.xlu0 %3647
  %v3649 = vsel %vm3633, %v3574, 0.0
  %3650 = vadd.xlane.f32.xlu0 %v3649
  %v3651 = vpop.xlane.xlu0 %3650
  %v3652 = vsel %vm3633, %v3575, 0.0
  %3653 = vadd.xlane.f32.xlu0 %v3652
  %v3654 = vpop.xlane.xlu0 %3653
  %v3655 = vsel %vm3633, %v3576, 0.0
  %3656 = vadd.xlane.f32.xlu0 %v3655
  %v3657 = vpop.xlane.xlu0 %3656
  %v3658 = vsel %vm3633, %v3577, 0.0
  %3659 = vadd.xlane.f32.xlu0 %v3658
  %v3660 = vpop.xlane.xlu0 %3659
  %v3661 = vsel %vm3633, %v3578, 0.0
  %3662 = vadd.xlane.f32.xlu0 %v3661
  %v3663 = vpop.xlane.xlu0 %3662
  %v3664 = vsel %vm3633, %v3579, 0.0
  %3665 = vadd.xlane.f32.xlu0 %v3664
  %v3666 = vpop.xlane.xlu0 %3665
  %v3667 = vsel %vm3633, %v3580, 0.0
  %3668 = vadd.xlane.f32.xlu0 %v3667
  %v3669 = vpop.xlane.xlu0 %3668
  %v3670 = vsel %vm3633, %v3581, 0.0
  %3671 = vadd.xlane.f32.xlu0 %v3670
  %v3672 = vpop.xlane.xlu0 %3671
  %v3673 = vsel %vm3633, %v3582, 0.0
  %3674 = vadd.xlane.f32.xlu0 %v3673
  %v3675 = vpop.xlane.xlu0 %3674
  %v3676 = vsel %vm3633, %v3583, 0.0
  %3677 = vadd.xlane.f32.xlu0 %v3676
  %v3678 = vpop.xlane.xlu0 %3677
  %v3679 = vsel %vm3633, %v3584, 0.0
  %3680 = vadd.xlane.f32.xlu0 %v3679
  %v3681 = vpop.xlane.xlu0 %3680
  %v3682 = vsel %vm3633, %v3585, 0.0
  %3683 = vadd.xlane.f32.xlu0 %v3682
  %v3684 = vpop.xlane.xlu0 %3683
  %v3685 = vsel %vm3633, %v3586, 0.0
  %3686 = vadd.xlane.f32.xlu0 %v3685
  %v3687 = vpop.xlane.xlu0 %3686
  %v3688 = vsel %vm3633, %v3587, 0.0
  %3689 = vadd.xlane.f32.xlu0 %v3688
  %v3690 = vpop.xlane.xlu0 %3689
  %v3691 = vsel %vm3633, %v3588, 0.0
  %3692 = vadd.xlane.f32.xlu0 %v3691
  %v3693 = vpop.xlane.xlu0 %3692
  %v3694 = vsel %vm3633, %v3589, 0.0
  %3695 = vadd.xlane.f32.xlu0 %v3694
  %v3696 = vpop.xlane.xlu0 %3695
  %v3697 = vsel %vm3633, %v3590, 0.0
  %3698 = vadd.xlane.f32.xlu0 %v3697
  %v3699 = vpop.xlane.xlu0 %3698
  %v3700 = vsel %vm3633, %v3591, 0.0
  %3701 = vadd.xlane.f32.xlu0 %v3700
  %v3702 = vpop.xlane.xlu0 %3701
  %v3703 = vsel %vm3633, %v3592, 0.0
  %3704 = vadd.xlane.f32.xlu0 %v3703
  %v3705 = vpop.xlane.xlu0 %3704
  %v3706 = vsel %vm3633, %v3593, 0.0
  %3707 = vadd.xlane.f32.xlu0 %v3706
  %v3708 = vpop.xlane.xlu0 %3707
  %v3709 = vsel %vm3633, %v3594, 0.0
  %3710 = vadd.xlane.f32.xlu0 %v3709
  %v3711 = vpop.xlane.xlu0 %3710
  %v3712 = vsel %vm3633, %v3595, 0.0
  %3713 = vadd.xlane.f32.xlu0 %v3712
  %v3714 = vpop.xlane.xlu0 %3713
  %v3715 = vsel %vm3633, %v3596, 0.0
  %3716 = vadd.xlane.f32.xlu0 %v3715
  %v3717 = vpop.xlane.xlu0 %3716
  %v3718 = vsel %vm3633, %v3597, 0.0
  %3719 = vadd.xlane.f32.xlu0 %v3718
  %v3720 = vpop.xlane.xlu0 %3719
  %v3721 = vsel %vm3633, %v3598, 0.0
  %3722 = vadd.xlane.f32.xlu0 %v3721
  %v3723 = vpop.xlane.xlu0 %3722
  %v3724 = vsel %vm3633, %v3599, 0.0
  %3725 = vadd.xlane.f32.xlu0 %v3724
  %v3726 = vpop.xlane.xlu0 %3725
  %v3727 = vsel %vm3633, %v3600, 0.0
  %3728 = vadd.xlane.f32.xlu0 %v3727
  %v3729 = vpop.xlane.xlu0 %3728
  %v3730 = vsel %vm3633, %v3601, 0.0
  %3731 = vadd.xlane.f32.xlu0 %v3730
  %v3732 = vpop.xlane.xlu0 %3731
  %v3733 = vsel %vm3633, %v3602, 0.0
  %3734 = vadd.xlane.f32.xlu0 %v3733
  %v3735 = vpop.xlane.xlu0 %3734
  %v3736 = vsel %vm3633, %v3603, 0.0
  %3737 = vadd.xlane.f32.xlu0 %v3736
  %v3738 = vpop.xlane.xlu0 %3737
  %v3739 = vsel %vm3633, %v3604, 0.0
  %3740 = vadd.xlane.f32.xlu0 %v3739
  %v3741 = vpop.xlane.xlu0 %3740
  %v3742 = vsel %vm3633, %v3605, 0.0
  %3743 = vadd.xlane.f32.xlu0 %v3742
  %v3744 = vpop.xlane.xlu0 %3743
  %v3745 = vsel %vm3633, %v3606, 0.0
  %3746 = vadd.xlane.f32.xlu0 %v3745
  %v3747 = vpop.xlane.xlu0 %3746
  %v3748 = vsel %vm3633, %v3607, 0.0
  %3749 = vadd.xlane.f32.xlu0 %v3748
  %v3750 = vpop.xlane.xlu0 %3749
  %v3751 = vsel %vm3633, %v3608, 0.0
  %3752 = vadd.xlane.f32.xlu0 %v3751
  %v3753 = vpop.xlane.xlu0 %3752
  %v3754 = vsel %vm3633, %v3609, 0.0
  %3755 = vadd.xlane.f32.xlu0 %v3754
  %v3756 = vpop.xlane.xlu0 %3755
  %v3757 = vsel %vm3633, %v3610, 0.0
  %3758 = vadd.xlane.f32.xlu0 %v3757
  %v3759 = vpop.xlane.xlu0 %3758
  %v3760 = vsel %vm3633, %v3611, 0.0
  %3761 = vadd.xlane.f32.xlu0 %v3760
  %v3762 = vpop.xlane.xlu0 %3761
  %v3763 = vsel %vm3633, %v3612, 0.0
  %3764 = vadd.xlane.f32.xlu0 %v3763
  %v3765 = vpop.xlane.xlu0 %3764
  %v3766 = vsel %vm3633, %v3613, 0.0
  %3767 = vadd.xlane.f32.xlu0 %v3766
  %v3768 = vpop.xlane.xlu0 %3767
  %v3769 = vsel %vm3633, %v3614, 0.0
  %3770 = vadd.xlane.f32.xlu0 %v3769
  %v3771 = vpop.xlane.xlu0 %3770
  %v3772 = vsel %vm3633, %v3615, 0.0
  %3773 = vadd.xlane.f32.xlu0 %v3772
  %v3774 = vpop.xlane.xlu0 %3773
  %v3775 = vsel %vm3633, %v3616, 0.0
  %3776 = vadd.xlane.f32.xlu0 %v3775
  %v3777 = vpop.xlane.xlu0 %3776
  %v3778 = vsel %vm3633, %v3617, 0.0
  %3779 = vadd.xlane.f32.xlu0 %v3778
  %v3780 = vpop.xlane.xlu0 %3779
  %v3781 = vsel %vm3633, %v3618, 0.0
  %3782 = vadd.xlane.f32.xlu0 %v3781
  %v3783 = vpop.xlane.xlu0 %3782
  %v3784 = vsel %vm3633, %v3619, 0.0
  %3785 = vadd.xlane.f32.xlu0 %v3784
  %v3786 = vpop.xlane.xlu0 %3785
  %v3787 = vsel %vm3633, %v3620, 0.0
  %3788 = vadd.xlane.f32.xlu0 %v3787
  %v3789 = vpop.xlane.xlu0 %3788
  %v3790 = vsel %vm3633, %v3621, 0.0
  %3791 = vadd.xlane.f32.xlu0 %v3790
  %v3792 = vpop.xlane.xlu0 %3791
  %v3793 = vsel %vm3633, %v3622, 0.0
  %3794 = vadd.xlane.f32.xlu0 %v3793
  %v3795 = vpop.xlane.xlu0 %3794
  %v3796 = vsel %vm3633, %v3623, 0.0
  %3797 = vadd.xlane.f32.xlu0 %v3796
  %v3798 = vpop.xlane.xlu0 %3797
  %v3799 = vsel %vm3633, %v3624, 0.0
  %3800 = vadd.xlane.f32.xlu0 %v3799
  %v3801 = vpop.xlane.xlu0 %3800
  %v3802 = vsel %vm3633, %v3625, 0.0
  %3803 = vadd.xlane.f32.xlu0 %v3802
  %v3804 = vpop.xlane.xlu0 %3803
  %v3805 = vsel %vm3633, %v3626, 0.0
  %3806 = vadd.xlane.f32.xlu0 %v3805
  %v3807 = vpop.xlane.xlu0 %3806
  %v3808 = vsel %vm3633, %v3627, 0.0
  %3809 = vadd.xlane.f32.xlu0 %v3808
  %v3810 = vpop.xlane.xlu0 %3809
  %v3811 = vsel %vm3633, %v3628, 0.0
  %3812 = vadd.xlane.f32.xlu0 %v3811
  %v3813 = vpop.xlane.xlu0 %3812
  %v3814 = vsel %vm3633, %v3629, 0.0
  %3815 = vadd.xlane.f32.xlu0 %v3814
  %v3816 = vpop.xlane.xlu0 %3815
  %v3817 = vsel %vm3633, %v3630, 0.0
  %3818 = vadd.xlane.f32.xlu0 %v3817
  %v3819 = vpop.xlane.xlu0 %3818
  %v3820 = vsel %vm3633, %v3631, 0.0
  %3821 = vadd.xlane.f32.xlu0 %v3820
  %v3822 = vpop.xlane.xlu0 %3821
  %v3823 = vsel %vm3633, %v3632, 0.0
  %3824 = vadd.xlane.f32.xlu0 %v3823
  %v3825 = vpop.xlane.xlu0 %3824
  %v3827 = vperm.slane %v3568, 0
  %3829 = vmatpush.msra.mxu0 %v3681
  %3830 = vmatpush.msra.mxu0 %v3678
  %3831 = vmatpush.msra.mxu0 %v3675
  %3832 = vmatpush.msra.mxu0 %v3672
  %3833 = vmatpush.msra.mxu0 %v3669
  %3834 = vmatpush.msra.mxu0 %v3666
  %3835 = vmatpush.msra.mxu0 %v3663
  %3836 = vmatpush.msra.mxu0 %v3660
  %3837 = vmatpush.msra.mxu0 %v3657
  %3838 = vmatpush.msra.mxu0 %v3654
  %3839 = vmatpush.msra.mxu0 %v3651
  %3840 = vmatpush.msra.mxu0 %v3648
  %3841 = vmatpush.msra.mxu0 %v3645
  %3842 = vmatpush.msra.mxu0 %v3642
  %3843 = vmatpush.msra.mxu0 %v3639
  %3844 = vmatpush.msra.mxu0 %v3636
  %3845 = vmatmul.f32.gmra.mxu0 %v3552
  %v3846 = vpop.f32.mrf.mxu0
  %v3847 = vadd.f32 %v3827, %v3846
  %3848 = vmatmul.f32.gmra.mxu0 %v3556
  %v3849 = vpop.f32.mrf.mxu0
  %v3850 = vadd.f32 %v3827, %v3849
  %3851 = vmatmul.f32.gmra.mxu0 %v3560
  %v3852 = vpop.f32.mrf.mxu0
  %v3853 = vadd.f32 %v3827, %v3852
  %3854 = vmatmul.f32.gmra.mxu0 %v3564
  %v3855 = vpop.f32.mrf.mxu0
  %v3856 = vadd.f32 %v3827, %v3855
  %3857 = vdwg.mxu0
  %3858 = vmatpush.msra.mxu0 %v3729
  %3859 = vmatpush.msra.mxu0 %v3726
  %3860 = vmatpush.msra.mxu0 %v3723
  %3861 = vmatpush.msra.mxu0 %v3720
  %3862 = vmatpush.msra.mxu0 %v3717
  %3863 = vmatpush.msra.mxu0 %v3714
  %3864 = vmatpush.msra.mxu0 %v3711
  %3865 = vmatpush.msra.mxu0 %v3708
  %3866 = vmatpush.msra.mxu0 %v3705
  %3867 = vmatpush.msra.mxu0 %v3702
  %3868 = vmatpush.msra.mxu0 %v3699
  %3869 = vmatpush.msra.mxu0 %v3696
  %3870 = vmatpush.msra.mxu0 %v3693
  %3871 = vmatpush.msra.mxu0 %v3690
  %3872 = vmatpush.msra.mxu0 %v3687
  %3873 = vmatpush.msra.mxu0 %v3684
  %3874 = vmatmul.f32.gmra.mxu0 %v3553
  %v3875 = vpop.f32.mrf.mxu0
  %v3876 = vadd.f32 %v3847, %v3875
  %3877 = vmatmul.f32.gmra.mxu0 %v3557
  %v3878 = vpop.f32.mrf.mxu0
  %v3879 = vadd.f32 %v3850, %v3878
  %3880 = vmatmul.f32.gmra.mxu0 %v3561
  %v3881 = vpop.f32.mrf.mxu0
  %v3882 = vadd.f32 %v3853, %v3881
  %3883 = vmatmul.f32.gmra.mxu0 %v3565
  %v3884 = vpop.f32.mrf.mxu0
  %v3885 = vadd.f32 %v3856, %v3884
  %3886 = vdwg.mxu0
  %3887 = vmatpush.msra.mxu0 %v3777
  %3888 = vmatpush.msra.mxu0 %v3774
  %3889 = vmatpush.msra.mxu0 %v3771
  %3890 = vmatpush.msra.mxu0 %v3768
  %3891 = vmatpush.msra.mxu0 %v3765
  %3892 = vmatpush.msra.mxu0 %v3762
  %3893 = vmatpush.msra.mxu0 %v3759
  %3894 = vmatpush.msra.mxu0 %v3756
  %3895 = vmatpush.msra.mxu0 %v3753
  %3896 = vmatpush.msra.mxu0 %v3750
  %3897 = vmatpush.msra.mxu0 %v3747
  %3898 = vmatpush.msra.mxu0 %v3744
  %3899 = vmatpush.msra.mxu0 %v3741
  %3900 = vmatpush.msra.mxu0 %v3738
  %3901 = vmatpush.msra.mxu0 %v3735
  %3902 = vmatpush.msra.mxu0 %v3732
  %3903 = vmatmul.f32.gmra.mxu0 %v3554
  %v3904 = vpop.f32.mrf.mxu0
  %v3905 = vadd.f32 %v3876, %v3904
  %3906 = vmatmul.f32.gmra.mxu0 %v3558
  %v3907 = vpop.f32.mrf.mxu0
  %v3908 = vadd.f32 %v3879, %v3907
  %3909 = vmatmul.f32.gmra.mxu0 %v3562
  %v3910 = vpop.f32.mrf.mxu0
  %v3911 = vadd.f32 %v3882, %v3910
  %3912 = vmatmul.f32.gmra.mxu0 %v3566
  %v3913 = vpop.f32.mrf.mxu0
  %v3914 = vadd.f32 %v3885, %v3913
  %3915 = vdwg.mxu0
  %3916 = vmatpush.msra.mxu0 %v3825
  %3917 = vmatpush.msra.mxu0 %v3822
  %3918 = vmatpush.msra.mxu0 %v3819
  %3919 = vmatpush.msra.mxu0 %v3816
  %3920 = vmatpush.msra.mxu0 %v3813
  %3921 = vmatpush.msra.mxu0 %v3810
  %3922 = vmatpush.msra.mxu0 %v3807
  %3923 = vmatpush.msra.mxu0 %v3804
  %3924 = vmatpush.msra.mxu0 %v3801
  %3925 = vmatpush.msra.mxu0 %v3798
  %3926 = vmatpush.msra.mxu0 %v3795
  %3927 = vmatpush.msra.mxu0 %v3792
  %3928 = vmatpush.msra.mxu0 %v3789
  %3929 = vmatpush.msra.mxu0 %v3786
  %3930 = vmatpush.msra.mxu0 %v3783
  %3931 = vmatpush.msra.mxu0 %v3780
  %3932 = vmatmul.f32.gmra.mxu0 %v3555
  %v3933 = vpop.f32.mrf.mxu0
  %v3934 = vadd.f32 %v3905, %v3933
  %3935 = vmatmul.f32.gmra.mxu0 %v3559
  %v3936 = vpop.f32.mrf.mxu0
  %v3937 = vadd.f32 %v3908, %v3936
  %3938 = vmatmul.f32.gmra.mxu0 %v3563
  %v3939 = vpop.f32.mrf.mxu0
  %v3940 = vadd.f32 %v3911, %v3939
  %3941 = vmatmul.f32.gmra.mxu0 %v3567
  %v3942 = vpop.f32.mrf.mxu0
  %v3943 = vadd.f32 %v3914, %v3942
  %3944 = vdwg.mxu0
  %v3945 = vsub.f32 0.0, %v3934
  %v3946 = vsub.f32 0.0, %v3937
  %v3947 = vsub.f32 0.0, %v3940
  %v3948 = vsub.f32 0.0, %v3943
  %v3949 = vmul.f32 %v3945, 1.442695
  %v3950 = vpow.pop %v3949
  %v3951 = vmul.f32 %v3946, 1.442695
  %v3952 = vpow.pop %v3951
  %v3953 = vmul.f32 %v3947, 1.442695
  %v3954 = vpow.pop %v3953
  %v3955 = vmul.f32 %v3948, 1.442695
  %v3956 = vpow.pop %v3955
  %v3957 = vadd.f32 %v3950, 1.0
  %v3958 = vadd.f32 %v3952, 1.0
  %v3959 = vadd.f32 %v3954, 1.0
  %v3960 = vadd.f32 %v3956, 1.0
  %v3961 = vrcp.pop %v3957
  %v3962 = vmul.f32 %v3957, %v3961
  %v3963 = vsub.f32 1.0, %v3962
  %v3964 = vmul.f32 %v3961, %v3963
  %v3965 = vadd.f32 %v3961, %v3964
  %vm3966 = vweird.f32 %v3957
  %vm3967 = vweird.f32 %v3961
  %vm3968 = vmor %vm3966, %vm3967
  %v3969 = vsel %vm3968, %v3961, %v3965
  %v3970 = vand.u32 2147483647, %v3957
  %vm3971 = vcmp.eq.f32.partialorder %v3970, 8.507059e+37
  %v3972 = vand.u32 %v3957, 2147483648
  %v3973 = vor.u32 1.1754944e-38, %v3972
  %v3974 = vsel %vm3971, %v3973, %v3969
  %v3975 = vmul.f32 1.0, %v3974
  %v3976 = vrcp.pop %v3958
  %v3977 = vmul.f32 %v3958, %v3976
  %v3978 = vsub.f32 1.0, %v3977
  %v3979 = vmul.f32 %v3976, %v3978
  %v3980 = vadd.f32 %v3976, %v3979
  %vm3981 = vweird.f32 %v3958
  %vm3982 = vweird.f32 %v3976
  %vm3983 = vmor %vm3981, %vm3982
  %v3984 = vsel %vm3983, %v3976, %v3980
  %v3985 = vand.u32 2147483647, %v3958
  %vm3986 = vcmp.eq.f32.partialorder %v3985, 8.507059e+37
  %v3987 = vand.u32 %v3958, 2147483648
  %v3988 = vor.u32 1.1754944e-38, %v3987
  %v3989 = vsel %vm3986, %v3988, %v3984
  %v3990 = vmul.f32 1.0, %v3989
  %v3991 = vrcp.pop %v3959
  %v3992 = vmul.f32 %v3959, %v3991
  %v3993 = vsub.f32 1.0, %v3992
  %v3994 = vmul.f32 %v3991, %v3993
  %v3995 = vadd.f32 %v3991, %v3994
  %vm3996 = vweird.f32 %v3959
  %vm3997 = vweird.f32 %v3991
  %vm3998 = vmor %vm3996, %vm3997
  %v3999 = vsel %vm3998, %v3991, %v3995
  %v4000 = vand.u32 2147483647, %v3959
  %vm4001 = vcmp.eq.f32.partialorder %v4000, 8.507059e+37
  %v4002 = vand.u32 %v3959, 2147483648
  %v4003 = vor.u32 1.1754944e-38, %v4002
  %v4004 = vsel %vm4001, %v4003, %v3999
  %v4005 = vmul.f32 1.0, %v4004
  %v4006 = vrcp.pop %v3960
  %v4007 = vmul.f32 %v3960, %v4006
  %v4008 = vsub.f32 1.0, %v4007
  %v4009 = vmul.f32 %v4006, %v4008
  %v4010 = vadd.f32 %v4006, %v4009
  %vm4011 = vweird.f32 %v3960
  %vm4012 = vweird.f32 %v4006
  %vm4013 = vmor %vm4011, %vm4012
  %v4014 = vsel %vm4013, %v4006, %v4010
  %v4015 = vand.u32 2147483647, %v3960
  %vm4016 = vcmp.eq.f32.partialorder %v4015, 8.507059e+37
  %v4017 = vand.u32 %v3960, 2147483648
  %v4018 = vor.u32 1.1754944e-38, %v4017
  %v4019 = vsel %vm4016, %v4018, %v4014
  %v4020 = vmul.f32 1.0, %v4019
  %vm4021 = vcmask 7168
  %4022 = vst.msk [vmem:[%s6] sm:$0xff] %vm4021, %v3975
  %4023 = vst.msk [vmem:[%s6 + $0x8] sm:$0xff] %vm4021, %v3990
  %4024 = vst.msk [vmem:[%s6 + $0x10] sm:$0xff] %vm4021, %v4005
  %4025 = vst.msk [vmem:[%s6 + $0x18] sm:$0xff] %vm4021, %v4020
  // Predicated region
  $region26: #{tpu_custom_call.1} parent=0 // pred_check
    _
  $region27: #{tpu_custom_call.1} parent=0 // pred_check_branch
    %4027 = sbr.rel (0) target = $region29
  $region28: #{tpu_custom_call.1} parent=0 // pred_region
    _
  $region29: #{tpu_custom_call.1} parent=0 // pred_fallthru
    _
  // Predicated region
  $region30: #{tpu_custom_call.1} parent=0 // pred_check
    _
  $region31: #{tpu_custom_call.1} parent=0 // pred_check_branch
    %4029 = sbr.rel (0) target = $region33
  $region32: #{tpu_custom_call.1} parent=0 // pred_region
    _
  $region33: #{tpu_custom_call.1} parent=0 // pred_fallthru
    _

</llo_original>
